<compile_context>
chip_gen: v5e
topology: v5e:2x2
jax: 0.10.0
libtpu: 0.0.40
codegen_flags: <defaults>
</compile_context>

<pallas_src>
import functools

import jax
import jax.numpy as jnp
from jax.experimental import pallas as pl
from jax.experimental.pallas import tpu as pltpu

MAX_LENGTH = 128
SOS_TOKEN = 0

_NEG_INF = -1e30
_BATCH_SUBLANE = 8        # sublane alignment for the batch dimension
_MAX_BATCH_TILE = 256     # cap on the per-grid-step batch tile
_LANE = 128
_ENC_UNROLL_LIMIT = 64    # fully unroll the encoder loop below this many steps


def _gru_step(x_f32, h_f32, w_ref, b_ref, Hp):
    """One PyTorch-style GRU step with a single fused (2Hp, 4Hp) matmul.

    Fused weight column layout: [r(combined) | z(combined) | i_n | h_n].
    r/z columns already sum the input and hidden paths (and their biases)."""
    xh = jnp.concatenate(
        [x_f32.astype(jnp.bfloat16), h_f32.astype(jnp.bfloat16)], axis=1)
    g = jnp.dot(xh, w_ref[...], preferred_element_type=jnp.float32) + b_ref[...]
    r = jax.nn.sigmoid(g[:, 0 * Hp:1 * Hp])
    z = jax.nn.sigmoid(g[:, 1 * Hp:2 * Hp])
    n = jnp.tanh(g[:, 2 * Hp:3 * Hp] + r * g[:, 3 * Hp:4 * Hp])
    return (1.0 - z) * n + z * h_f32


def seq2seq_kernel(enc_tok_ref, enc_emb_ref, enc_w_ref, enc_b_ref,
                   dec_emb_ref, dec_w_ref, dec_b_ref,
                   w_out_ref, b_out_ref,
                   out_ref, hid_ref,
                   h_scr, tok_scr):
    step = pl.program_id(1)                 # decoder step (inner, "arbitrary")
    BT, Hp = h_scr.shape
    Vp_out = tok_scr.shape[1]
    Vp_in = enc_emb_ref.shape[0]
    S = enc_tok_ref.shape[0]

    # --------------- step 0: run the encoder, init decoder state ------------
    @pl.when(step == 0)
    def _encode():
        h_scr[...] = jnp.zeros_like(h_scr)
        iota_in = jax.lax.broadcasted_iota(jnp.int32, (BT, Vp_in), 1)

        def enc_body(t):
            tok = enc_tok_ref[t]                                  # (BT, 1) int32
            onehot = (iota_in == tok).astype(jnp.bfloat16)        # (BT, Vp_in)
            x = jnp.dot(onehot, enc_emb_ref[...],
                        preferred_element_type=jnp.float32)       # (BT, Hp)
            h_scr[...] = _gru_step(x, h_scr[...], enc_w_ref, enc_b_ref, Hp)

        if S <= _ENC_UNROLL_LIMIT:
            for t in range(S):        # full unroll: cross-step scheduling slack
                enc_body(t)
        else:
            @pl.loop(0, S)
            def _(t):
                enc_body(t)

        # decoder_input = SOS token one-hot for every row of this batch tile
        col = jax.lax.broadcasted_iota(jnp.int32, (BT, Vp_out), 1)
        tok_scr[...] = (col == SOS_TOKEN).astype(jnp.bfloat16)

    # --------------- one greedy decoder step per grid iteration -------------
    # TODO(synk): teacher-forcing path (target_tensor is not None) not
    # implemented; this kernel covers the inference (greedy topk(1)) branch.
    emb = jnp.maximum(
        jnp.dot(tok_scr[...], dec_emb_ref[...],
                preferred_element_type=jnp.float32), 0.0)          # ReLU(embed)
    h = _gru_step(emb, h_scr[...], dec_w_ref, dec_b_ref, Hp)
    h_scr[...] = h

    logits = jnp.dot(h.astype(jnp.bfloat16), w_out_ref[...],
                     preferred_element_type=jnp.float32) + b_out_ref[...]
    # log_softmax over the (padded) vocab dim; padded columns carry -1e30 bias.
    m = jnp.max(logits, axis=-1, keepdims=True)
    lse = jnp.log(jnp.sum(jnp.exp(logits - m), axis=-1, keepdims=True)) + m
    out_ref[0, :, :] = logits - lse                                # lane-dense slab

    # final hidden state only needs to land in the output block once
    @pl.when(step == pl.num_programs(1) - 1)
    def _finalize():
        hid_ref[...] = h

    # greedy next token = first argmax (reuses m) -> rebuild one-hot (bf16)
    iota_out = jax.lax.broadcasted_iota(jnp.int32, (BT, Vp_out), 1)
    masked = jnp.where(logits >= m, iota_out, Vp_out)
    first = jnp.min(masked, axis=-1, keepdims=True)
    tok_scr[...] = (iota_out == first).astype(jnp.bfloat16)


def _round_up(x, m):
    return (x + m - 1) // m * m


@functools.partial(jax.jit, static_argnames=("max_length",))
def seq2seq_forward(input_tokens, params, max_length=MAX_LENGTH):
    """input_tokens: (B, S) int32.

    Returns (log_probs (B, max_length, V_out), hidden (1, B, H), None),
    matching the PyTorch Seq2Seq inference forward."""
    B, S = input_tokens.shape
    V_in, H = params["enc_emb"].shape
    V_out = params["dec_emb"].shape[0]

    BT = min(_round_up(B, _BATCH_SUBLANE), _MAX_BATCH_TILE)
    B_pad = _round_up(B, BT)
    n_bt = B_pad // BT
    Hp = _round_up(H, _LANE)
    Vp_in = _round_up(V_in, _LANE)
    Vp_out = _round_up(V_out, _LANE)
    L = max_length
    f32, bf16 = jnp.float32, jnp.bfloat16

    # ------------- pad / pack parameters (gate-aligned, bf16 MXU) -----------
    def pad2(a, rows, cols):
        return jnp.zeros((rows, cols), f32).at[:a.shape[0], :a.shape[1]].set(a)

    def fuse_gru(w_ih, w_hh, b_ih, b_hh):
        # (H, 3H) x2 + (1, 3H) x2 -> (2Hp, 4Hp) bf16 W, (1, 4Hp) f32 bias.
        # Column layout: [r(combined) | z(combined) | i_n | h_n].
        W = jnp.zeros((2 * Hp, 4 * Hp), f32)
        W = W.at[:H,        0 * Hp:0 * Hp + H].set(w_ih[:, 0 * H:1 * H])  # r, x
        W = W.at[Hp:Hp + H, 0 * Hp:0 * Hp + H].set(w_hh[:, 0 * H:1 * H])  # r, h
        W = W.at[:H,        1 * Hp:1 * Hp + H].set(w_ih[:, 1 * H:2 * H])  # z, x
        W = W.at[Hp:Hp + H, 1 * Hp:1 * Hp + H].set(w_hh[:, 1 * H:2 * H])  # z, h
        W = W.at[:H,        2 * Hp:2 * Hp + H].set(w_ih[:, 2 * H:3 * H])  # i_n
        W = W.at[Hp:Hp + H, 3 * Hp:3 * Hp + H].set(w_hh[:, 2 * H:3 * H])  # h_n
        b = jnp.zeros((1, 4 * Hp), f32)
        b = b.at[:, 0 * Hp:0 * Hp + H].set(b_ih[:, 0 * H:1 * H] + b_hh[:, 0 * H:1 * H])
        b = b.at[:, 1 * Hp:1 * Hp + H].set(b_ih[:, 1 * H:2 * H] + b_hh[:, 1 * H:2 * H])
        b = b.at[:, 2 * Hp:2 * Hp + H].set(b_ih[:, 2 * H:3 * H])
        b = b.at[:, 3 * Hp:3 * Hp + H].set(b_hh[:, 2 * H:3 * H])
        return W.astype(bf16), b

    enc_w, enc_b = fuse_gru(params["enc_w_ih"], params["enc_w_hh"],
                            params["enc_b_ih"], params["enc_b_hh"])
    dec_w, dec_b = fuse_gru(params["dec_w_ih"], params["dec_w_hh"],
                            params["dec_b_ih"], params["dec_b_hh"])

    enc_emb = pad2(params["enc_emb"], Vp_in, Hp).astype(bf16)
    dec_emb = pad2(params["dec_emb"], Vp_out, Hp).astype(bf16)
    w_out = pad2(params["w_out"], Hp, Vp_out).astype(bf16)
    # padded vocab columns get a huge negative bias so they never win the
    # softmax / argmax over the padded lane dimension
    b_out = jnp.full((1, Vp_out), _NEG_INF, f32).at[:, :V_out].set(params["b_out"])

    # token ids: (B, S) -> step-major (S, B_pad, 1) int32 (tiny DMA, no one-hot)
    tok = jnp.zeros((B_pad, S), jnp.int32).at[:B, :].set(input_tokens)
    enc_tok = jnp.transpose(tok, (1, 0))[:, :, None]

    inputs = (enc_tok, enc_emb, enc_w, enc_b,
              dec_emb, dec_w, dec_b, w_out, b_out)

    # explicit, generation-aware VMEM budget: double-buffered resident inputs
    # + streamed output tiles + scratch, clamped to leave headroom on v7x.
    in_bytes = sum(a.size * a.dtype.itemsize for a in inputs)
    io_bytes = 2 * (BT * Vp_out * 4) + BT * Hp * 4
    scr_bytes = BT * Hp * 4 + BT * Vp_out * 2
    vmem_limit = int(min(max(2 * in_bytes + io_bytes + scr_bytes + (4 << 20),
                             16 << 20), 48 << 20))

    const2 = lambda b, i: (0, 0)

    out_padded, hid_padded = pl.pallas_call(
        seq2seq_kernel,
        out_shape=(
            jax.ShapeDtypeStruct((L, B_pad, Vp_out), jnp.float32),
            jax.ShapeDtypeStruct((B_pad, Hp), jnp.float32),
        ),
        grid=(n_bt, L),
        in_specs=[
            pl.BlockSpec((S, BT, 1), lambda b, i: (0, b, 0)),       # enc token ids
            pl.BlockSpec((Vp_in, Hp), const2),                      # enc embedding
            pl.BlockSpec((2 * Hp, 4 * Hp), const2),                 # enc fused GRU W
            pl.BlockSpec((1, 4 * Hp), const2),                      # enc fused GRU b
            pl.BlockSpec((Vp_out, Hp), const2),                     # dec embedding
            pl.BlockSpec((2 * Hp, 4 * Hp), const2),                 # dec fused GRU W
            pl.BlockSpec((1, 4 * Hp), const2),                      # dec fused GRU b
            pl.BlockSpec((Hp, Vp_out), const2),                     # output proj W
            pl.BlockSpec((1, Vp_out), const2),                      # output proj b
        ],
        out_specs=(
            pl.BlockSpec((1, BT, Vp_out), lambda b, i: (i, b, 0)),  # streamed step slab
            pl.BlockSpec((BT, Hp), lambda b, i: (b, 0)),            # final hidden
        ),
        scratch_shapes=[
            pltpu.VMEM((BT, Hp), jnp.float32),       # GRU hidden (carried over grid)
            pltpu.VMEM((BT, Vp_out), jnp.bfloat16),  # current decoder-token one-hot
        ],
        compiler_params=pltpu.CompilerParams(
            dimension_semantics=("parallel", "arbitrary"),
            vmem_limit_bytes=vmem_limit,
        ),
    )(*inputs)

    log_probs = jnp.transpose(out_padded, (1, 0, 2))[:B, :, :V_out]
    hidden = hid_padded[None, :B, :H]                # (1, B, H) like PyTorch GRU
    return log_probs, hidden, None


def init_params(key, vocab_in, vocab_out, hidden):
    ks = jax.random.split(key, 13)
    s = 0.1
    f = jnp.float32
    return {
        # encoder: Embedding(vocab_in, H) + GRU(H, H)
        "enc_emb": s * jax.random.normal(ks[0], (vocab_in, hidden), f),
        "enc_w_ih": s * jax.random.normal(ks[1], (hidden, 3 * hidden), f),
        "enc_w_hh": s * jax.random.normal(ks[2], (hidden, 3 * hidden), f),
        "enc_b_ih": s * jax.random.normal(ks[3], (1, 3 * hidden), f),
        "enc_b_hh": s * jax.random.normal(ks[4], (1, 3 * hidden), f),
        # decoder: Embedding(vocab_out, H) + ReLU + GRU(H, H) + Linear(H, vocab_out)
        "dec_emb": s * jax.random.normal(ks[5], (vocab_out, hidden), f),
        "dec_w_ih": s * jax.random.normal(ks[6], (hidden, 3 * hidden), f),
        "dec_w_hh": s * jax.random.normal(ks[7], (hidden, 3 * hidden), f),
        "dec_b_ih": s * jax.random.normal(ks[8], (1, 3 * hidden), f),
        "dec_b_hh": s * jax.random.normal(ks[9], (1, 3 * hidden), f),
        "w_out": s * jax.random.normal(ks[10], (hidden, vocab_out), f),
        "b_out": s * jax.random.normal(ks[11], (1, vocab_out), f),
    }


def _reference_forward(input_tokens, params, max_length):
    """Pure-JAX f32 reference of the same (inference) forward for validation."""
    B, S = input_tokens.shape
    H = params["enc_emb"].shape[1]

    def gru_cell(x, h, w_ih, w_hh, b_ih, b_hh):
        gi = x @ w_ih + b_ih
        gh = h @ w_hh + b_hh
        i_r, i_z, i_n = jnp.split(gi, 3, axis=-1)
        h_r, h_z, h_n = jnp.split(gh, 3, axis=-1)
        r = jax.nn.sigmoid(i_r + h_r)
        z = jax.nn.sigmoid(i_z + h_z)
        n = jnp.tanh(i_n + r * h_n)
        return (1.0 - z) * n + z * h

    h = jnp.zeros((B, H), jnp.float32)
    for t in range(S):
        x = params["enc_emb"][input_tokens[:, t]]
        h = gru_cell(x, h, params["enc_w_ih"], params["enc_w_hh"],
                     params["enc_b_ih"], params["enc_b_hh"])
    tok = jnp.full((B,), SOS_TOKEN, jnp.int32)
    outs = []
    for _ in range(max_length):
        x = jax.nn.relu(params["dec_emb"][tok])
        h = gru_cell(x, h, params["dec_w_ih"], params["dec_w_hh"],
                     params["dec_b_ih"], params["dec_b_hh"])
        logits = h @ params["w_out"] + params["b_out"]
        outs.append(logits)
        tok = jnp.argmax(logits, axis=-1).astype(jnp.int32)
    logits = jnp.stack(outs, axis=1)
    return jax.nn.log_softmax(logits, axis=-1), h[None]


if __name__ == "__main__":
    B, S, H, V_IN, V_OUT = 2, 8, 32, 16, 16

    key = jax.random.PRNGKey(0)
    kp, kx = jax.random.split(key)
    params = init_params(kp, V_IN, V_OUT, H)
    input_tokens = jax.random.randint(kx, (B, S), 0, V_IN, dtype=jnp.int32)

    log_probs, hidden, attn = seq2seq_forward(input_tokens, params)
    jax.block_until_ready((log_probs, hidden))

    assert log_probs.shape == (B, MAX_LENGTH, V_OUT)
    assert hidden.shape == (1, B, H)
    assert attn is None
    # log_softmax rows must (approximately) sum to 1 in prob space
    assert jnp.allclose(jnp.sum(jnp.exp(log_probs), axis=-1), 1.0, atol=1e-4)
    assert bool(jnp.all(jnp.isfinite(log_probs)))

    # first decode step vs pure-f32 JAX reference (loose tol: bf16 MXU operands)
    ref_lp, _ = _reference_forward(input_tokens, params, max_length=1)
    assert jnp.allclose(log_probs[:, 0, :], ref_lp[:, 0, :], atol=1e-1)

    print("KERNEL_OK")
</pallas_src>

<mosaic_0001>
module attributes {stable_mosaic.version = 11 : i64} {
  func.func @seq2seq_kernel(%arg0: i32, %arg1: i32, %arg2: memref<8x8x1xi32, #tpu.memory_space<vmem>>, %arg3: memref<128x128xbf16, #tpu.memory_space<vmem>>, %arg4: memref<256x512xbf16, #tpu.memory_space<vmem>>, %arg5: memref<1x512xf32, #tpu.memory_space<vmem>>, %arg6: memref<128x128xbf16, #tpu.memory_space<vmem>>, %arg7: memref<256x512xbf16, #tpu.memory_space<vmem>>, %arg8: memref<1x512xf32, #tpu.memory_space<vmem>>, %arg9: memref<128x128xbf16, #tpu.memory_space<vmem>>, %arg10: memref<1x128xf32, #tpu.memory_space<vmem>>, %arg11: memref<1x8x128xf32, #tpu.memory_space<vmem>>, %arg12: memref<8x128xf32, #tpu.memory_space<vmem>>, %arg13: memref<8x128xf32, #tpu.memory_space<vmem>>, %arg14: memref<8x128xbf16, #tpu.memory_space<vmem>>) attributes {dimension_semantics = [#tpu.dimension_semantics<parallel>, #tpu.dimension_semantics<arbitrary>], iteration_bounds = array<i64: 1, 128>, scalar_prefetch = 0 : i64, scratch_operands = 2 : i64, tpu.core_type = #tpu.core_type<tc>, window_params = [{transform_indices = @transform_0, window_bounds = array<i64: 8, 8, 1>}, {pipeline_mode = #tpu.pipeline_mode<synchronous>, transform_indices = @transform_1, window_bounds = array<i64: 128, 128>}, {pipeline_mode = #tpu.pipeline_mode<synchronous>, transform_indices = @transform_2, window_bounds = array<i64: 256, 512>}, {pipeline_mode = #tpu.pipeline_mode<synchronous>, transform_indices = @transform_3, window_bounds = array<i64: 1, 512>}, {pipeline_mode = #tpu.pipeline_mode<synchronous>, transform_indices = @transform_4, window_bounds = array<i64: 128, 128>}, {pipeline_mode = #tpu.pipeline_mode<synchronous>, transform_indices = @transform_5, window_bounds = array<i64: 256, 512>}, {pipeline_mode = #tpu.pipeline_mode<synchronous>, transform_indices = @transform_6, window_bounds = array<i64: 1, 512>}, {pipeline_mode = #tpu.pipeline_mode<synchronous>, transform_indices = @transform_7, window_bounds = array<i64: 128, 128>}, {pipeline_mode = #tpu.pipeline_mode<synchronous>, transform_indices = @transform_8, window_bounds = array<i64: 1, 128>}, {transform_indices = @transform_9, window_bounds = array<i64: 1, 8, 128>}, {transform_indices = @transform_10, window_bounds = array<i64: 8, 128>}]} {
    %c0_i32 = arith.constant 0 : i32
    %0 = arith.cmpi eq, %arg1, %c0_i32 : i32
    %1 = arith.extui %0 : i1 to i32
    %c0_i32_0 = arith.constant 0 : i32
    %2 = arith.cmpi ne, %1, %c0_i32_0 : i32
    scf.if %2 {
      %cst_31 = arith.constant 0.000000e+00 : f32
      %76 = vector.broadcast %cst_31 : f32 to vector<8x128xf32>
      %c0_32 = arith.constant 0 : index
      %c0_33 = arith.constant 0 : index
      %77 = vector.load %arg13[%c0_32, %c0_33] : memref<8x128xf32, #tpu.memory_space<vmem>>, vector<8x128xf32>
      tpu.vector_store %arg13[%c0_32, %c0_33], %76 {strides = array<i32>} : memref<8x128xf32, #tpu.memory_space<vmem>>, vector<8x128xf32>,
      %78 = tpu.iota {dimensions = array<i32: 1>} : vector<8x128xi32>
      %c0_34 = arith.constant 0 : index
      %c0_35 = arith.constant 0 : index
      %c0_36 = arith.constant 0 : index
      %79 = vector.load %arg2[%c0_34, %c0_35, %c0_36] : memref<8x8x1xi32, #tpu.memory_space<vmem>>, vector<1x8x1xi32>
      %80 = vector.shape_cast %79 : vector<1x8x1xi32> to vector<8x1xi32>
      %81 = vector.broadcast %80 : vector<8x1xi32> to vector<8x128xi32>
      %82 = arith.cmpi eq, %78, %81 : vector<8x128xi32>
      %83 = arith.extui %82 : vector<8x128xi1> to vector<8x128xi32>
      %84 = arith.sitofp %83 : vector<8x128xi32> to vector<8x128xf32>
      %85 = arith.truncf %84 : vector<8x128xf32> to vector<8x128xbf16>
      %c0_37 = arith.constant 0 : index
      %c0_38 = arith.constant 0 : index
      %86 = vector.load %arg3[%c0_37, %c0_38] : memref<128x128xbf16, #tpu.memory_space<vmem>>, vector<128x128xbf16>
      %cst_39 = arith.constant dense<0.000000e+00> : vector<8x128xf32>
      %87 = tpu.matmul %85, %86, %cst_39 {dimension_numbers = #tpu.dot_dimension_numbers<[1], [0], [0], [1], [0, 0, 1, 1], [], []>} : vector<8x128xbf16>, vector<128x128xbf16>, vector<8x128xf32> -> vector<8x128xf32>
      %c0_40 = arith.constant 0 : index
      %c0_41 = arith.constant 0 : index
      %88 = vector.load %arg13[%c0_40, %c0_41] : memref<8x128xf32, #tpu.memory_space<vmem>>, vector<8x128xf32>
      %89 = arith.truncf %87 : vector<8x128xf32> to vector<8x128xbf16>
      %90 = arith.truncf %88 : vector<8x128xf32> to vector<8x128xbf16>
      %91 = tpu.concatenate %89, %90 in 1 : vector<8x128xbf16>, vector<8x128xbf16> -> vector<8x256xbf16>
      %c0_42 = arith.constant 0 : index
      %c0_43 = arith.constant 0 : index
      %92 = vector.load %arg4[%c0_42, %c0_43] : memref<256x512xbf16, #tpu.memory_space<vmem>>, vector<256x512xbf16>
      %cst_44 = arith.constant dense<0.000000e+00> : vector<8x512xf32>
      %93 = tpu.matmul %91, %92, %cst_44 {dimension_numbers = #tpu.dot_dimension_numbers<[1], [0], [0], [1], [0, 0, 1, 1], [], []>} : vector<8x256xbf16>, vector<256x512xbf16>, vector<8x512xf32> -> vector<8x512xf32>
      %c0_45 = arith.constant 0 : index
      %c0_46 = arith.constant 0 : index
      %94 = vector.load %arg5[%c0_45, %c0_46] : memref<1x512xf32, #tpu.memory_space<vmem>>, vector<1x512xf32>
      %95 = vector.broadcast %94 : vector<1x512xf32> to vector<8x512xf32>
      %96 = arith.addf %93, %95 : vector<8x512xf32>
      %97 = vector.extract_strided_slice %96 {offsets = [0, 0], sizes = [8, 128], strides = [1, 1]} : vector<8x512xf32> to vector<8x128xf32>
      %98 = arith.negf %97 : vector<8x128xf32>
      %99 = math.exp %98 : vector<8x128xf32>
      %cst_47 = arith.constant 1.000000e+00 : f32
      %100 = vector.broadcast %cst_47 : f32 to vector<8x128xf32>
      %101 = arith.addf %100, %99 : vector<8x128xf32>
      %102 = arith.divf %100, %101 : vector<8x128xf32>
      %103 = vector.extract_strided_slice %96 {offsets = [0, 128], sizes = [8, 128], strides = [1, 1]} : vector<8x512xf32> to vector<8x128xf32>
      %104 = arith.negf %103 : vector<8x128xf32>
      %105 = math.exp %104 : vector<8x128xf32>
      %cst_48 = arith.constant 1.000000e+00 : f32
      %106 = vector.broadcast %cst_48 : f32 to vector<8x128xf32>
      %107 = arith.addf %106, %105 : vector<8x128xf32>
      %108 = arith.divf %106, %107 : vector<8x128xf32>
      %109 = vector.extract_strided_slice %96 {offsets = [0, 256], sizes = [8, 128], strides = [1, 1]} : vector<8x512xf32> to vector<8x128xf32>
      %110 = vector.extract_strided_slice %96 {offsets = [0, 384], sizes = [8, 128], strides = [1, 1]} : vector<8x512xf32> to vector<8x128xf32>
      %111 = arith.mulf %102, %110 : vector<8x128xf32>
      %112 = arith.addf %109, %111 : vector<8x128xf32>
      %113 = math.tanh %112 : vector<8x128xf32>
      %cst_49 = arith.constant 1.000000e+00 : f32
      %114 = vector.broadcast %cst_49 : f32 to vector<8x128xf32>
      %115 = arith.subf %114, %108 : vector<8x128xf32>
      %116 = arith.mulf %115, %113 : vector<8x128xf32>
      %117 = arith.mulf %108, %88 : vector<8x128xf32>
      %118 = arith.addf %116, %117 : vector<8x128xf32>
      %c0_50 = arith.constant 0 : index
      %c0_51 = arith.constant 0 : index
      %119 = vector.load %arg13[%c0_50, %c0_51] : memref<8x128xf32, #tpu.memory_space<vmem>>, vector<8x128xf32>
      tpu.vector_store %arg13[%c0_50, %c0_51], %118 {strides = array<i32>} : memref<8x128xf32, #tpu.memory_space<vmem>>, vector<8x128xf32>,
      %c1 = arith.constant 1 : index
      %c0_52 = arith.constant 0 : index
      %c0_53 = arith.constant 0 : index
      %120 = vector.load %arg2[%c1, %c0_52, %c0_53] : memref<8x8x1xi32, #tpu.memory_space<vmem>>, vector<1x8x1xi32>
      %121 = vector.shape_cast %120 : vector<1x8x1xi32> to vector<8x1xi32>
      %122 = vector.broadcast %121 : vector<8x1xi32> to vector<8x128xi32>
      %123 = arith.cmpi eq, %78, %122 : vector<8x128xi32>
      %124 = arith.extui %123 : vector<8x128xi1> to vector<8x128xi32>
      %125 = arith.sitofp %124 : vector<8x128xi32> to vector<8x128xf32>
      %126 = arith.truncf %125 : vector<8x128xf32> to vector<8x128xbf16>
      %c0_54 = arith.constant 0 : index
      %c0_55 = arith.constant 0 : index
      %127 = vector.load %arg3[%c0_54, %c0_55] : memref<128x128xbf16, #tpu.memory_space<vmem>>, vector<128x128xbf16>
      %cst_56 = arith.constant dense<0.000000e+00> : vector<8x128xf32>
      %128 = tpu.matmul %126, %127, %cst_56 {dimension_numbers = #tpu.dot_dimension_numbers<[1], [0], [0], [1], [0, 0, 1, 1], [], []>} : vector<8x128xbf16>, vector<128x128xbf16>, vector<8x128xf32> -> vector<8x128xf32>
      %c0_57 = arith.constant 0 : index
      %c0_58 = arith.constant 0 : index
      %129 = vector.load %arg13[%c0_57, %c0_58] : memref<8x128xf32, #tpu.memory_space<vmem>>, vector<8x128xf32>
      %130 = arith.truncf %128 : vector<8x128xf32> to vector<8x128xbf16>
      %131 = arith.truncf %129 : vector<8x128xf32> to vector<8x128xbf16>
      %132 = tpu.concatenate %130, %131 in 1 : vector<8x128xbf16>, vector<8x128xbf16> -> vector<8x256xbf16>
      %c0_59 = arith.constant 0 : index
      %c0_60 = arith.constant 0 : index
      %133 = vector.load %arg4[%c0_59, %c0_60] : memref<256x512xbf16, #tpu.memory_space<vmem>>, vector<256x512xbf16>
      %cst_61 = arith.constant dense<0.000000e+00> : vector<8x512xf32>
      %134 = tpu.matmul %132, %133, %cst_61 {dimension_numbers = #tpu.dot_dimension_numbers<[1], [0], [0], [1], [0, 0, 1, 1], [], []>} : vector<8x256xbf16>, vector<256x512xbf16>, vector<8x512xf32> -> vector<8x512xf32>
      %c0_62 = arith.constant 0 : index
      %c0_63 = arith.constant 0 : index
      %135 = vector.load %arg5[%c0_62, %c0_63] : memref<1x512xf32, #tpu.memory_space<vmem>>, vector<1x512xf32>
      %136 = vector.broadcast %135 : vector<1x512xf32> to vector<8x512xf32>
      %137 = arith.addf %134, %136 : vector<8x512xf32>
      %138 = vector.extract_strided_slice %137 {offsets = [0, 0], sizes = [8, 128], strides = [1, 1]} : vector<8x512xf32> to vector<8x128xf32>
      %139 = arith.negf %138 : vector<8x128xf32>
      %140 = math.exp %139 : vector<8x128xf32>
      %cst_64 = arith.constant 1.000000e+00 : f32
      %141 = vector.broadcast %cst_64 : f32 to vector<8x128xf32>
      %142 = arith.addf %141, %140 : vector<8x128xf32>
      %143 = arith.divf %141, %142 : vector<8x128xf32>
      %144 = vector.extract_strided_slice %137 {offsets = [0, 128], sizes = [8, 128], strides = [1, 1]} : vector<8x512xf32> to vector<8x128xf32>
      %145 = arith.negf %144 : vector<8x128xf32>
      %146 = math.exp %145 : vector<8x128xf32>
      %cst_65 = arith.constant 1.000000e+00 : f32
      %147 = vector.broadcast %cst_65 : f32 to vector<8x128xf32>
      %148 = arith.addf %147, %146 : vector<8x128xf32>
      %149 = arith.divf %147, %148 : vector<8x128xf32>
      %150 = vector.extract_strided_slice %137 {offsets = [0, 256], sizes = [8, 128], strides = [1, 1]} : vector<8x512xf32> to vector<8x128xf32>
      %151 = vector.extract_strided_slice %137 {offsets = [0, 384], sizes = [8, 128], strides = [1, 1]} : vector<8x512xf32> to vector<8x128xf32>
      %152 = arith.mulf %143, %151 : vector<8x128xf32>
      %153 = arith.addf %150, %152 : vector<8x128xf32>
      %154 = math.tanh %153 : vector<8x128xf32>
      %cst_66 = arith.constant 1.000000e+00 : f32
      %155 = vector.broadcast %cst_66 : f32 to vector<8x128xf32>
      %156 = arith.subf %155, %149 : vector<8x128xf32>
      %157 = arith.mulf %156, %154 : vector<8x128xf32>
      %158 = arith.mulf %149, %129 : vector<8x128xf32>
      %159 = arith.addf %157, %158 : vector<8x128xf32>
      %c0_67 = arith.constant 0 : index
      %c0_68 = arith.constant 0 : index
      %160 = vector.load %arg13[%c0_67, %c0_68] : memref<8x128xf32, #tpu.memory_space<vmem>>, vector<8x128xf32>
      tpu.vector_store %arg13[%c0_67, %c0_68], %159 {strides = array<i32>} : memref<8x128xf32, #tpu.memory_space<vmem>>, vector<8x128xf32>,
      %c2 = arith.constant 2 : index
      %c0_69 = arith.constant 0 : index
      %c0_70 = arith.constant 0 : index
      %161 = vector.load %arg2[%c2, %c0_69, %c0_70] : memref<8x8x1xi32, #tpu.memory_space<vmem>>, vector<1x8x1xi32>
      %162 = vector.shape_cast %161 : vector<1x8x1xi32> to vector<8x1xi32>
      %163 = vector.broadcast %162 : vector<8x1xi32> to vector<8x128xi32>
      %164 = arith.cmpi eq, %78, %163 : vector<8x128xi32>
      %165 = arith.extui %164 : vector<8x128xi1> to vector<8x128xi32>
      %166 = arith.sitofp %165 : vector<8x128xi32> to vector<8x128xf32>
      %167 = arith.truncf %166 : vector<8x128xf32> to vector<8x128xbf16>
      %c0_71 = arith.constant 0 : index
      %c0_72 = arith.constant 0 : index
      %168 = vector.load %arg3[%c0_71, %c0_72] : memref<128x128xbf16, #tpu.memory_space<vmem>>, vector<128x128xbf16>
      %cst_73 = arith.constant dense<0.000000e+00> : vector<8x128xf32>
      %169 = tpu.matmul %167, %168, %cst_73 {dimension_numbers = #tpu.dot_dimension_numbers<[1], [0], [0], [1], [0, 0, 1, 1], [], []>} : vector<8x128xbf16>, vector<128x128xbf16>, vector<8x128xf32> -> vector<8x128xf32>
      %c0_74 = arith.constant 0 : index
      %c0_75 = arith.constant 0 : index
      %170 = vector.load %arg13[%c0_74, %c0_75] : memref<8x128xf32, #tpu.memory_space<vmem>>, vector<8x128xf32>
      %171 = arith.truncf %169 : vector<8x128xf32> to vector<8x128xbf16>
      %172 = arith.truncf %170 : vector<8x128xf32> to vector<8x128xbf16>
      %173 = tpu.concatenate %171, %172 in 1 : vector<8x128xbf16>, vector<8x128xbf16> -> vector<8x256xbf16>
      %c0_76 = arith.constant 0 : index
      %c0_77 = arith.constant 0 : index
      %174 = vector.load %arg4[%c0_76, %c0_77] : memref<256x512xbf16, #tpu.memory_space<vmem>>, vector<256x512xbf16>
      %cst_78 = arith.constant dense<0.000000e+00> : vector<8x512xf32>
      %175 = tpu.matmul %173, %174, %cst_78 {dimension_numbers = #tpu.dot_dimension_numbers<[1], [0], [0], [1], [0, 0, 1, 1], [], []>} : vector<8x256xbf16>, vector<256x512xbf16>, vector<8x512xf32> -> vector<8x512xf32>
      %c0_79 = arith.constant 0 : index
      %c0_80 = arith.constant 0 : index
      %176 = vector.load %arg5[%c0_79, %c0_80] : memref<1x512xf32, #tpu.memory_space<vmem>>, vector<1x512xf32>
      %177 = vector.broadcast %176 : vector<1x512xf32> to vector<8x512xf32>
      %178 = arith.addf %175, %177 : vector<8x512xf32>
      %179 = vector.extract_strided_slice %178 {offsets = [0, 0], sizes = [8, 128], strides = [1, 1]} : vector<8x512xf32> to vector<8x128xf32>
      %180 = arith.negf %179 : vector<8x128xf32>
      %181 = math.exp %180 : vector<8x128xf32>
      %cst_81 = arith.constant 1.000000e+00 : f32
      %182 = vector.broadcast %cst_81 : f32 to vector<8x128xf32>
      %183 = arith.addf %182, %181 : vector<8x128xf32>
      %184 = arith.divf %182, %183 : vector<8x128xf32>
      %185 = vector.extract_strided_slice %178 {offsets = [0, 128], sizes = [8, 128], strides = [1, 1]} : vector<8x512xf32> to vector<8x128xf32>
      %186 = arith.negf %185 : vector<8x128xf32>
      %187 = math.exp %186 : vector<8x128xf32>
      %cst_82 = arith.constant 1.000000e+00 : f32
      %188 = vector.broadcast %cst_82 : f32 to vector<8x128xf32>
      %189 = arith.addf %188, %187 : vector<8x128xf32>
      %190 = arith.divf %188, %189 : vector<8x128xf32>
      %191 = vector.extract_strided_slice %178 {offsets = [0, 256], sizes = [8, 128], strides = [1, 1]} : vector<8x512xf32> to vector<8x128xf32>
      %192 = vector.extract_strided_slice %178 {offsets = [0, 384], sizes = [8, 128], strides = [1, 1]} : vector<8x512xf32> to vector<8x128xf32>
      %193 = arith.mulf %184, %192 : vector<8x128xf32>
      %194 = arith.addf %191, %193 : vector<8x128xf32>
      %195 = math.tanh %194 : vector<8x128xf32>
      %cst_83 = arith.constant 1.000000e+00 : f32
      %196 = vector.broadcast %cst_83 : f32 to vector<8x128xf32>
      %197 = arith.subf %196, %190 : vector<8x128xf32>
      %198 = arith.mulf %197, %195 : vector<8x128xf32>
      %199 = arith.mulf %190, %170 : vector<8x128xf32>
      %200 = arith.addf %198, %199 : vector<8x128xf32>
      %c0_84 = arith.constant 0 : index
      %c0_85 = arith.constant 0 : index
      %201 = vector.load %arg13[%c0_84, %c0_85] : memref<8x128xf32, #tpu.memory_space<vmem>>, vector<8x128xf32>
      tpu.vector_store %arg13[%c0_84, %c0_85], %200 {strides = array<i32>} : memref<8x128xf32, #tpu.memory_space<vmem>>, vector<8x128xf32>,
      %c3 = arith.constant 3 : index
      %c0_86 = arith.constant 0 : index
      %c0_87 = arith.constant 0 : index
      %202 = vector.load %arg2[%c3, %c0_86, %c0_87] : memref<8x8x1xi32, #tpu.memory_space<vmem>>, vector<1x8x1xi32>
      %203 = vector.shape_cast %202 : vector<1x8x1xi32> to vector<8x1xi32>
      %204 = vector.broadcast %203 : vector<8x1xi32> to vector<8x128xi32>
      %205 = arith.cmpi eq, %78, %204 : vector<8x128xi32>
      %206 = arith.extui %205 : vector<8x128xi1> to vector<8x128xi32>
      %207 = arith.sitofp %206 : vector<8x128xi32> to vector<8x128xf32>
      %208 = arith.truncf %207 : vector<8x128xf32> to vector<8x128xbf16>
      %c0_88 = arith.constant 0 : index
      %c0_89 = arith.constant 0 : index
      %209 = vector.load %arg3[%c0_88, %c0_89] : memref<128x128xbf16, #tpu.memory_space<vmem>>, vector<128x128xbf16>
      %cst_90 = arith.constant dense<0.000000e+00> : vector<8x128xf32>
      %210 = tpu.matmul %208, %209, %cst_90 {dimension_numbers = #tpu.dot_dimension_numbers<[1], [0], [0], [1], [0, 0, 1, 1], [], []>} : vector<8x128xbf16>, vector<128x128xbf16>, vector<8x128xf32> -> vector<8x128xf32>
      %c0_91 = arith.constant 0 : index
      %c0_92 = arith.constant 0 : index
      %211 = vector.load %arg13[%c0_91, %c0_92] : memref<8x128xf32, #tpu.memory_space<vmem>>, vector<8x128xf32>
      %212 = arith.truncf %210 : vector<8x128xf32> to vector<8x128xbf16>
      %213 = arith.truncf %211 : vector<8x128xf32> to vector<8x128xbf16>
      %214 = tpu.concatenate %212, %213 in 1 : vector<8x128xbf16>, vector<8x128xbf16> -> vector<8x256xbf16>
      %c0_93 = arith.constant 0 : index
      %c0_94 = arith.constant 0 : index
      %215 = vector.load %arg4[%c0_93, %c0_94] : memref<256x512xbf16, #tpu.memory_space<vmem>>, vector<256x512xbf16>
      %cst_95 = arith.constant dense<0.000000e+00> : vector<8x512xf32>
      %216 = tpu.matmul %214, %215, %cst_95 {dimension_numbers = #tpu.dot_dimension_numbers<[1], [0], [0], [1], [0, 0, 1, 1], [], []>} : vector<8x256xbf16>, vector<256x512xbf16>, vector<8x512xf32> -> vector<8x512xf32>
      %c0_96 = arith.constant 0 : index
      %c0_97 = arith.constant 0 : index
      %217 = vector.load %arg5[%c0_96, %c0_97] : memref<1x512xf32, #tpu.memory_space<vmem>>, vector<1x512xf32>
      %218 = vector.broadcast %217 : vector<1x512xf32> to vector<8x512xf32>
      %219 = arith.addf %216, %218 : vector<8x512xf32>
      %220 = vector.extract_strided_slice %219 {offsets = [0, 0], sizes = [8, 128], strides = [1, 1]} : vector<8x512xf32> to vector<8x128xf32>
      %221 = arith.negf %220 : vector<8x128xf32>
      %222 = math.exp %221 : vector<8x128xf32>
      %cst_98 = arith.constant 1.000000e+00 : f32
      %223 = vector.broadcast %cst_98 : f32 to vector<8x128xf32>
      %224 = arith.addf %223, %222 : vector<8x128xf32>
      %225 = arith.divf %223, %224 : vector<8x128xf32>
      %226 = vector.extract_strided_slice %219 {offsets = [0, 128], sizes = [8, 128], strides = [1, 1]} : vector<8x512xf32> to vector<8x128xf32>
      %227 = arith.negf %226 : vector<8x128xf32>
      %228 = math.exp %227 : vector<8x128xf32>
      %cst_99 = arith.constant 1.000000e+00 : f32
      %229 = vector.broadcast %cst_99 : f32 to vector<8x128xf32>
      %230 = arith.addf %229, %228 : vector<8x128xf32>
      %231 = arith.divf %229, %230 : vector<8x128xf32>
      %232 = vector.extract_strided_slice %219 {offsets = [0, 256], sizes = [8, 128], strides = [1, 1]} : vector<8x512xf32> to vector<8x128xf32>
      %233 = vector.extract_strided_slice %219 {offsets = [0, 384], sizes = [8, 128], strides = [1, 1]} : vector<8x512xf32> to vector<8x128xf32>
      %234 = arith.mulf %225, %233 : vector<8x128xf32>
      %235 = arith.addf %232, %234 : vector<8x128xf32>
      %236 = math.tanh %235 : vector<8x128xf32>
      %cst_100 = arith.constant 1.000000e+00 : f32
      %237 = vector.broadcast %cst_100 : f32 to vector<8x128xf32>
      %238 = arith.subf %237, %231 : vector<8x128xf32>
      %239 = arith.mulf %238, %236 : vector<8x128xf32>
      %240 = arith.mulf %231, %211 : vector<8x128xf32>
      %241 = arith.addf %239, %240 : vector<8x128xf32>
      %c0_101 = arith.constant 0 : index
      %c0_102 = arith.constant 0 : index
      %242 = vector.load %arg13[%c0_101, %c0_102] : memref<8x128xf32, #tpu.memory_space<vmem>>, vector<8x128xf32>
      tpu.vector_store %arg13[%c0_101, %c0_102], %241 {strides = array<i32>} : memref<8x128xf32, #tpu.memory_space<vmem>>, vector<8x128xf32>,
      %c4 = arith.constant 4 : index
      %c0_103 = arith.constant 0 : index
      %c0_104 = arith.constant 0 : index
      %243 = vector.load %arg2[%c4, %c0_103, %c0_104] : memref<8x8x1xi32, #tpu.memory_space<vmem>>, vector<1x8x1xi32>
      %244 = vector.shape_cast %243 : vector<1x8x1xi32> to vector<8x1xi32>
      %245 = vector.broadcast %244 : vector<8x1xi32> to vector<8x128xi32>
      %246 = arith.cmpi eq, %78, %245 : vector<8x128xi32>
      %247 = arith.extui %246 : vector<8x128xi1> to vector<8x128xi32>
      %248 = arith.sitofp %247 : vector<8x128xi32> to vector<8x128xf32>
      %249 = arith.truncf %248 : vector<8x128xf32> to vector<8x128xbf16>
      %c0_105 = arith.constant 0 : index
      %c0_106 = arith.constant 0 : index
      %250 = vector.load %arg3[%c0_105, %c0_106] : memref<128x128xbf16, #tpu.memory_space<vmem>>, vector<128x128xbf16>
      %cst_107 = arith.constant dense<0.000000e+00> : vector<8x128xf32>
      %251 = tpu.matmul %249, %250, %cst_107 {dimension_numbers = #tpu.dot_dimension_numbers<[1], [0], [0], [1], [0, 0, 1, 1], [], []>} : vector<8x128xbf16>, vector<128x128xbf16>, vector<8x128xf32> -> vector<8x128xf32>
      %c0_108 = arith.constant 0 : index
      %c0_109 = arith.constant 0 : index
      %252 = vector.load %arg13[%c0_108, %c0_109] : memref<8x128xf32, #tpu.memory_space<vmem>>, vector<8x128xf32>
      %253 = arith.truncf %251 : vector<8x128xf32> to vector<8x128xbf16>
      %254 = arith.truncf %252 : vector<8x128xf32> to vector<8x128xbf16>
      %255 = tpu.concatenate %253, %254 in 1 : vector<8x128xbf16>, vector<8x128xbf16> -> vector<8x256xbf16>
      %c0_110 = arith.constant 0 : index
      %c0_111 = arith.constant 0 : index
      %256 = vector.load %arg4[%c0_110, %c0_111] : memref<256x512xbf16, #tpu.memory_space<vmem>>, vector<256x512xbf16>
      %cst_112 = arith.constant dense<0.000000e+00> : vector<8x512xf32>
      %257 = tpu.matmul %255, %256, %cst_112 {dimension_numbers = #tpu.dot_dimension_numbers<[1], [0], [0], [1], [0, 0, 1, 1], [], []>} : vector<8x256xbf16>, vector<256x512xbf16>, vector<8x512xf32> -> vector<8x512xf32>
      %c0_113 = arith.constant 0 : index
      %c0_114 = arith.constant 0 : index
      %258 = vector.load %arg5[%c0_113, %c0_114] : memref<1x512xf32, #tpu.memory_space<vmem>>, vector<1x512xf32>
      %259 = vector.broadcast %258 : vector<1x512xf32> to vector<8x512xf32>
      %260 = arith.addf %257, %259 : vector<8x512xf32>
      %261 = vector.extract_strided_slice %260 {offsets = [0, 0], sizes = [8, 128], strides = [1, 1]} : vector<8x512xf32> to vector<8x128xf32>
      %262 = arith.negf %261 : vector<8x128xf32>
      %263 = math.exp %262 : vector<8x128xf32>
      %cst_115 = arith.constant 1.000000e+00 : f32
      %264 = vector.broadcast %cst_115 : f32 to vector<8x128xf32>
      %265 = arith.addf %264, %263 : vector<8x128xf32>
      %266 = arith.divf %264, %265 : vector<8x128xf32>
      %267 = vector.extract_strided_slice %260 {offsets = [0, 128], sizes = [8, 128], strides = [1, 1]} : vector<8x512xf32> to vector<8x128xf32>
      %268 = arith.negf %267 : vector<8x128xf32>
      %269 = math.exp %268 : vector<8x128xf32>
      %cst_116 = arith.constant 1.000000e+00 : f32
      %270 = vector.broadcast %cst_116 : f32 to vector<8x128xf32>
      %271 = arith.addf %270, %269 : vector<8x128xf32>
      %272 = arith.divf %270, %271 : vector<8x128xf32>
      %273 = vector.extract_strided_slice %260 {offsets = [0, 256], sizes = [8, 128], strides = [1, 1]} : vector<8x512xf32> to vector<8x128xf32>
      %274 = vector.extract_strided_slice %260 {offsets = [0, 384], sizes = [8, 128], strides = [1, 1]} : vector<8x512xf32> to vector<8x128xf32>
      %275 = arith.mulf %266, %274 : vector<8x128xf32>
      %276 = arith.addf %273, %275 : vector<8x128xf32>
      %277 = math.tanh %276 : vector<8x128xf32>
      %cst_117 = arith.constant 1.000000e+00 : f32
      %278 = vector.broadcast %cst_117 : f32 to vector<8x128xf32>
      %279 = arith.subf %278, %272 : vector<8x128xf32>
      %280 = arith.mulf %279, %277 : vector<8x128xf32>
      %281 = arith.mulf %272, %252 : vector<8x128xf32>
      %282 = arith.addf %280, %281 : vector<8x128xf32>
      %c0_118 = arith.constant 0 : index
      %c0_119 = arith.constant 0 : index
      %283 = vector.load %arg13[%c0_118, %c0_119] : memref<8x128xf32, #tpu.memory_space<vmem>>, vector<8x128xf32>
      tpu.vector_store %arg13[%c0_118, %c0_119], %282 {strides = array<i32>} : memref<8x128xf32, #tpu.memory_space<vmem>>, vector<8x128xf32>,
      %c5 = arith.constant 5 : index
      %c0_120 = arith.constant 0 : index
      %c0_121 = arith.constant 0 : index
      %284 = vector.load %arg2[%c5, %c0_120, %c0_121] : memref<8x8x1xi32, #tpu.memory_space<vmem>>, vector<1x8x1xi32>
      %285 = vector.shape_cast %284 : vector<1x8x1xi32> to vector<8x1xi32>
      %286 = vector.broadcast %285 : vector<8x1xi32> to vector<8x128xi32>
      %287 = arith.cmpi eq, %78, %286 : vector<8x128xi32>
      %288 = arith.extui %287 : vector<8x128xi1> to vector<8x128xi32>
      %289 = arith.sitofp %288 : vector<8x128xi32> to vector<8x128xf32>
      %290 = arith.truncf %289 : vector<8x128xf32> to vector<8x128xbf16>
      %c0_122 = arith.constant 0 : index
      %c0_123 = arith.constant 0 : index
      %291 = vector.load %arg3[%c0_122, %c0_123] : memref<128x128xbf16, #tpu.memory_space<vmem>>, vector<128x128xbf16>
      %cst_124 = arith.constant dense<0.000000e+00> : vector<8x128xf32>
      %292 = tpu.matmul %290, %291, %cst_124 {dimension_numbers = #tpu.dot_dimension_numbers<[1], [0], [0], [1], [0, 0, 1, 1], [], []>} : vector<8x128xbf16>, vector<128x128xbf16>, vector<8x128xf32> -> vector<8x128xf32>
      %c0_125 = arith.constant 0 : index
      %c0_126 = arith.constant 0 : index
      %293 = vector.load %arg13[%c0_125, %c0_126] : memref<8x128xf32, #tpu.memory_space<vmem>>, vector<8x128xf32>
      %294 = arith.truncf %292 : vector<8x128xf32> to vector<8x128xbf16>
      %295 = arith.truncf %293 : vector<8x128xf32> to vector<8x128xbf16>
      %296 = tpu.concatenate %294, %295 in 1 : vector<8x128xbf16>, vector<8x128xbf16> -> vector<8x256xbf16>
      %c0_127 = arith.constant 0 : index
      %c0_128 = arith.constant 0 : index
      %297 = vector.load %arg4[%c0_127, %c0_128] : memref<256x512xbf16, #tpu.memory_space<vmem>>, vector<256x512xbf16>
      %cst_129 = arith.constant dense<0.000000e+00> : vector<8x512xf32>
      %298 = tpu.matmul %296, %297, %cst_129 {dimension_numbers = #tpu.dot_dimension_numbers<[1], [0], [0], [1], [0, 0, 1, 1], [], []>} : vector<8x256xbf16>, vector<256x512xbf16>, vector<8x512xf32> -> vector<8x512xf32>
      %c0_130 = arith.constant 0 : index
      %c0_131 = arith.constant 0 : index
      %299 = vector.load %arg5[%c0_130, %c0_131] : memref<1x512xf32, #tpu.memory_space<vmem>>, vector<1x512xf32>
      %300 = vector.broadcast %299 : vector<1x512xf32> to vector<8x512xf32>
      %301 = arith.addf %298, %300 : vector<8x512xf32>
      %302 = vector.extract_strided_slice %301 {offsets = [0, 0], sizes = [8, 128], strides = [1, 1]} : vector<8x512xf32> to vector<8x128xf32>
      %303 = arith.negf %302 : vector<8x128xf32>
      %304 = math.exp %303 : vector<8x128xf32>
      %cst_132 = arith.constant 1.000000e+00 : f32
      %305 = vector.broadcast %cst_132 : f32 to vector<8x128xf32>
      %306 = arith.addf %305, %304 : vector<8x128xf32>
      %307 = arith.divf %305, %306 : vector<8x128xf32>
      %308 = vector.extract_strided_slice %301 {offsets = [0, 128], sizes = [8, 128], strides = [1, 1]} : vector<8x512xf32> to vector<8x128xf32>
      %309 = arith.negf %308 : vector<8x128xf32>
      %310 = math.exp %309 : vector<8x128xf32>
      %cst_133 = arith.constant 1.000000e+00 : f32
      %311 = vector.broadcast %cst_133 : f32 to vector<8x128xf32>
      %312 = arith.addf %311, %310 : vector<8x128xf32>
      %313 = arith.divf %311, %312 : vector<8x128xf32>
      %314 = vector.extract_strided_slice %301 {offsets = [0, 256], sizes = [8, 128], strides = [1, 1]} : vector<8x512xf32> to vector<8x128xf32>
      %315 = vector.extract_strided_slice %301 {offsets = [0, 384], sizes = [8, 128], strides = [1, 1]} : vector<8x512xf32> to vector<8x128xf32>
      %316 = arith.mulf %307, %315 : vector<8x128xf32>
      %317 = arith.addf %314, %316 : vector<8x128xf32>
      %318 = math.tanh %317 : vector<8x128xf32>
      %cst_134 = arith.constant 1.000000e+00 : f32
      %319 = vector.broadcast %cst_134 : f32 to vector<8x128xf32>
      %320 = arith.subf %319, %313 : vector<8x128xf32>
      %321 = arith.mulf %320, %318 : vector<8x128xf32>
      %322 = arith.mulf %313, %293 : vector<8x128xf32>
      %323 = arith.addf %321, %322 : vector<8x128xf32>
      %c0_135 = arith.constant 0 : index
      %c0_136 = arith.constant 0 : index
      %324 = vector.load %arg13[%c0_135, %c0_136] : memref<8x128xf32, #tpu.memory_space<vmem>>, vector<8x128xf32>
      tpu.vector_store %arg13[%c0_135, %c0_136], %323 {strides = array<i32>} : memref<8x128xf32, #tpu.memory_space<vmem>>, vector<8x128xf32>,
      %c6 = arith.constant 6 : index
      %c0_137 = arith.constant 0 : index
      %c0_138 = arith.constant 0 : index
      %325 = vector.load %arg2[%c6, %c0_137, %c0_138] : memref<8x8x1xi32, #tpu.memory_space<vmem>>, vector<1x8x1xi32>
      %326 = vector.shape_cast %325 : vector<1x8x1xi32> to vector<8x1xi32>
      %327 = vector.broadcast %326 : vector<8x1xi32> to vector<8x128xi32>
      %328 = arith.cmpi eq, %78, %327 : vector<8x128xi32>
      %329 = arith.extui %328 : vector<8x128xi1> to vector<8x128xi32>
      %330 = arith.sitofp %329 : vector<8x128xi32> to vector<8x128xf32>
      %331 = arith.truncf %330 : vector<8x128xf32> to vector<8x128xbf16>
      %c0_139 = arith.constant 0 : index
      %c0_140 = arith.constant 0 : index
      %332 = vector.load %arg3[%c0_139, %c0_140] : memref<128x128xbf16, #tpu.memory_space<vmem>>, vector<128x128xbf16>
      %cst_141 = arith.constant dense<0.000000e+00> : vector<8x128xf32>
      %333 = tpu.matmul %331, %332, %cst_141 {dimension_numbers = #tpu.dot_dimension_numbers<[1], [0], [0], [1], [0, 0, 1, 1], [], []>} : vector<8x128xbf16>, vector<128x128xbf16>, vector<8x128xf32> -> vector<8x128xf32>
      %c0_142 = arith.constant 0 : index
      %c0_143 = arith.constant 0 : index
      %334 = vector.load %arg13[%c0_142, %c0_143] : memref<8x128xf32, #tpu.memory_space<vmem>>, vector<8x128xf32>
      %335 = arith.truncf %333 : vector<8x128xf32> to vector<8x128xbf16>
      %336 = arith.truncf %334 : vector<8x128xf32> to vector<8x128xbf16>
      %337 = tpu.concatenate %335, %336 in 1 : vector<8x128xbf16>, vector<8x128xbf16> -> vector<8x256xbf16>
      %c0_144 = arith.constant 0 : index
      %c0_145 = arith.constant 0 : index
      %338 = vector.load %arg4[%c0_144, %c0_145] : memref<256x512xbf16, #tpu.memory_space<vmem>>, vector<256x512xbf16>
      %cst_146 = arith.constant dense<0.000000e+00> : vector<8x512xf32>
      %339 = tpu.matmul %337, %338, %cst_146 {dimension_numbers = #tpu.dot_dimension_numbers<[1], [0], [0], [1], [0, 0, 1, 1], [], []>} : vector<8x256xbf16>, vector<256x512xbf16>, vector<8x512xf32> -> vector<8x512xf32>
      %c0_147 = arith.constant 0 : index
      %c0_148 = arith.constant 0 : index
      %340 = vector.load %arg5[%c0_147, %c0_148] : memref<1x512xf32, #tpu.memory_space<vmem>>, vector<1x512xf32>
      %341 = vector.broadcast %340 : vector<1x512xf32> to vector<8x512xf32>
      %342 = arith.addf %339, %341 : vector<8x512xf32>
      %343 = vector.extract_strided_slice %342 {offsets = [0, 0], sizes = [8, 128], strides = [1, 1]} : vector<8x512xf32> to vector<8x128xf32>
      %344 = arith.negf %343 : vector<8x128xf32>
      %345 = math.exp %344 : vector<8x128xf32>
      %cst_149 = arith.constant 1.000000e+00 : f32
      %346 = vector.broadcast %cst_149 : f32 to vector<8x128xf32>
      %347 = arith.addf %346, %345 : vector<8x128xf32>
      %348 = arith.divf %346, %347 : vector<8x128xf32>
      %349 = vector.extract_strided_slice %342 {offsets = [0, 128], sizes = [8, 128], strides = [1, 1]} : vector<8x512xf32> to vector<8x128xf32>
      %350 = arith.negf %349 : vector<8x128xf32>
      %351 = math.exp %350 : vector<8x128xf32>
      %cst_150 = arith.constant 1.000000e+00 : f32
      %352 = vector.broadcast %cst_150 : f32 to vector<8x128xf32>
      %353 = arith.addf %352, %351 : vector<8x128xf32>
      %354 = arith.divf %352, %353 : vector<8x128xf32>
      %355 = vector.extract_strided_slice %342 {offsets = [0, 256], sizes = [8, 128], strides = [1, 1]} : vector<8x512xf32> to vector<8x128xf32>
      %356 = vector.extract_strided_slice %342 {offsets = [0, 384], sizes = [8, 128], strides = [1, 1]} : vector<8x512xf32> to vector<8x128xf32>
      %357 = arith.mulf %348, %356 : vector<8x128xf32>
      %358 = arith.addf %355, %357 : vector<8x128xf32>
      %359 = math.tanh %358 : vector<8x128xf32>
      %cst_151 = arith.constant 1.000000e+00 : f32
      %360 = vector.broadcast %cst_151 : f32 to vector<8x128xf32>
      %361 = arith.subf %360, %354 : vector<8x128xf32>
      %362 = arith.mulf %361, %359 : vector<8x128xf32>
      %363 = arith.mulf %354, %334 : vector<8x128xf32>
      %364 = arith.addf %362, %363 : vector<8x128xf32>
      %c0_152 = arith.constant 0 : index
      %c0_153 = arith.constant 0 : index
      %365 = vector.load %arg13[%c0_152, %c0_153] : memref<8x128xf32, #tpu.memory_space<vmem>>, vector<8x128xf32>
      tpu.vector_store %arg13[%c0_152, %c0_153], %364 {strides = array<i32>} : memref<8x128xf32, #tpu.memory_space<vmem>>, vector<8x128xf32>,
      %c7 = arith.constant 7 : index
      %c0_154 = arith.constant 0 : index
      %c0_155 = arith.constant 0 : index
      %366 = vector.load %arg2[%c7, %c0_154, %c0_155] : memref<8x8x1xi32, #tpu.memory_space<vmem>>, vector<1x8x1xi32>
      %367 = vector.shape_cast %366 : vector<1x8x1xi32> to vector<8x1xi32>
      %368 = vector.broadcast %367 : vector<8x1xi32> to vector<8x128xi32>
      %369 = arith.cmpi eq, %78, %368 : vector<8x128xi32>
      %370 = arith.extui %369 : vector<8x128xi1> to vector<8x128xi32>
      %371 = arith.sitofp %370 : vector<8x128xi32> to vector<8x128xf32>
      %372 = arith.truncf %371 : vector<8x128xf32> to vector<8x128xbf16>
      %c0_156 = arith.constant 0 : index
      %c0_157 = arith.constant 0 : index
      %373 = vector.load %arg3[%c0_156, %c0_157] : memref<128x128xbf16, #tpu.memory_space<vmem>>, vector<128x128xbf16>
      %cst_158 = arith.constant dense<0.000000e+00> : vector<8x128xf32>
      %374 = tpu.matmul %372, %373, %cst_158 {dimension_numbers = #tpu.dot_dimension_numbers<[1], [0], [0], [1], [0, 0, 1, 1], [], []>} : vector<8x128xbf16>, vector<128x128xbf16>, vector<8x128xf32> -> vector<8x128xf32>
      %c0_159 = arith.constant 0 : index
      %c0_160 = arith.constant 0 : index
      %375 = vector.load %arg13[%c0_159, %c0_160] : memref<8x128xf32, #tpu.memory_space<vmem>>, vector<8x128xf32>
      %376 = arith.truncf %374 : vector<8x128xf32> to vector<8x128xbf16>
      %377 = arith.truncf %375 : vector<8x128xf32> to vector<8x128xbf16>
      %378 = tpu.concatenate %376, %377 in 1 : vector<8x128xbf16>, vector<8x128xbf16> -> vector<8x256xbf16>
      %c0_161 = arith.constant 0 : index
      %c0_162 = arith.constant 0 : index
      %379 = vector.load %arg4[%c0_161, %c0_162] : memref<256x512xbf16, #tpu.memory_space<vmem>>, vector<256x512xbf16>
      %cst_163 = arith.constant dense<0.000000e+00> : vector<8x512xf32>
      %380 = tpu.matmul %378, %379, %cst_163 {dimension_numbers = #tpu.dot_dimension_numbers<[1], [0], [0], [1], [0, 0, 1, 1], [], []>} : vector<8x256xbf16>, vector<256x512xbf16>, vector<8x512xf32> -> vector<8x512xf32>
      %c0_164 = arith.constant 0 : index
      %c0_165 = arith.constant 0 : index
      %381 = vector.load %arg5[%c0_164, %c0_165] : memref<1x512xf32, #tpu.memory_space<vmem>>, vector<1x512xf32>
      %382 = vector.broadcast %381 : vector<1x512xf32> to vector<8x512xf32>
      %383 = arith.addf %380, %382 : vector<8x512xf32>
      %384 = vector.extract_strided_slice %383 {offsets = [0, 0], sizes = [8, 128], strides = [1, 1]} : vector<8x512xf32> to vector<8x128xf32>
      %385 = arith.negf %384 : vector<8x128xf32>
      %386 = math.exp %385 : vector<8x128xf32>
      %cst_166 = arith.constant 1.000000e+00 : f32
      %387 = vector.broadcast %cst_166 : f32 to vector<8x128xf32>
      %388 = arith.addf %387, %386 : vector<8x128xf32>
      %389 = arith.divf %387, %388 : vector<8x128xf32>
      %390 = vector.extract_strided_slice %383 {offsets = [0, 128], sizes = [8, 128], strides = [1, 1]} : vector<8x512xf32> to vector<8x128xf32>
      %391 = arith.negf %390 : vector<8x128xf32>
      %392 = math.exp %391 : vector<8x128xf32>
      %cst_167 = arith.constant 1.000000e+00 : f32
      %393 = vector.broadcast %cst_167 : f32 to vector<8x128xf32>
      %394 = arith.addf %393, %392 : vector<8x128xf32>
      %395 = arith.divf %393, %394 : vector<8x128xf32>
      %396 = vector.extract_strided_slice %383 {offsets = [0, 256], sizes = [8, 128], strides = [1, 1]} : vector<8x512xf32> to vector<8x128xf32>
      %397 = vector.extract_strided_slice %383 {offsets = [0, 384], sizes = [8, 128], strides = [1, 1]} : vector<8x512xf32> to vector<8x128xf32>
      %398 = arith.mulf %389, %397 : vector<8x128xf32>
      %399 = arith.addf %396, %398 : vector<8x128xf32>
      %400 = math.tanh %399 : vector<8x128xf32>
      %cst_168 = arith.constant 1.000000e+00 : f32
      %401 = vector.broadcast %cst_168 : f32 to vector<8x128xf32>
      %402 = arith.subf %401, %395 : vector<8x128xf32>
      %403 = arith.mulf %402, %400 : vector<8x128xf32>
      %404 = arith.mulf %395, %375 : vector<8x128xf32>
      %405 = arith.addf %403, %404 : vector<8x128xf32>
      %c0_169 = arith.constant 0 : index
      %c0_170 = arith.constant 0 : index
      %406 = vector.load %arg13[%c0_169, %c0_170] : memref<8x128xf32, #tpu.memory_space<vmem>>, vector<8x128xf32>
      tpu.vector_store %arg13[%c0_169, %c0_170], %405 {strides = array<i32>} : memref<8x128xf32, #tpu.memory_space<vmem>>, vector<8x128xf32>,
      %407 = tpu.iota {dimensions = array<i32: 1>} : vector<8x128xi32>
      %c0_i32_171 = arith.constant 0 : i32
      %408 = vector.broadcast %c0_i32_171 : i32 to vector<8x128xi32>
      %409 = arith.cmpi eq, %407, %408 : vector<8x128xi32>
      %410 = arith.extui %409 : vector<8x128xi1> to vector<8x128xi32>
      %411 = arith.sitofp %410 : vector<8x128xi32> to vector<8x128xf32>
      %412 = arith.truncf %411 : vector<8x128xf32> to vector<8x128xbf16>
      %c0_172 = arith.constant 0 : index
      %c0_173 = arith.constant 0 : index
      %413 = vector.load %arg14[%c0_172, %c0_173] : memref<8x128xbf16, #tpu.memory_space<vmem>>, vector<8x128xbf16>
      tpu.vector_store %arg14[%c0_172, %c0_173], %412 {strides = array<i32>} : memref<8x128xbf16, #tpu.memory_space<vmem>>, vector<8x128xbf16>,
    } else {
    }
    %c0 = arith.constant 0 : index
    %c0_1 = arith.constant 0 : index
    %3 = vector.load %arg14[%c0, %c0_1] : memref<8x128xbf16, #tpu.memory_space<vmem>>, vector<8x128xbf16>
    %c0_2 = arith.constant 0 : index
    %c0_3 = arith.constant 0 : index
    %4 = vector.load %arg6[%c0_2, %c0_3] : memref<128x128xbf16, #tpu.memory_space<vmem>>, vector<128x128xbf16>
    %cst = arith.constant dense<0.000000e+00> : vector<8x128xf32>
    %5 = tpu.matmul %3, %4, %cst {dimension_numbers = #tpu.dot_dimension_numbers<[1], [0], [0], [1], [0, 0, 1, 1], [], []>} : vector<8x128xbf16>, vector<128x128xbf16>, vector<8x128xf32> -> vector<8x128xf32>
    %cst_4 = arith.constant 0.000000e+00 : f32
    %6 = vector.broadcast %cst_4 : f32 to vector<8x128xf32>
    %7 = arith.maximumf %5, %6 : vector<8x128xf32>
    %c0_5 = arith.constant 0 : index
    %c0_6 = arith.constant 0 : index
    %8 = vector.load %arg13[%c0_5, %c0_6] : memref<8x128xf32, #tpu.memory_space<vmem>>, vector<8x128xf32>
    %9 = arith.truncf %7 : vector<8x128xf32> to vector<8x128xbf16>
    %10 = arith.truncf %8 : vector<8x128xf32> to vector<8x128xbf16>
    %11 = tpu.concatenate %9, %10 in 1 : vector<8x128xbf16>, vector<8x128xbf16> -> vector<8x256xbf16>
    %c0_7 = arith.constant 0 : index
    %c0_8 = arith.constant 0 : index
    %12 = vector.load %arg7[%c0_7, %c0_8] : memref<256x512xbf16, #tpu.memory_space<vmem>>, vector<256x512xbf16>
    %cst_9 = arith.constant dense<0.000000e+00> : vector<8x512xf32>
    %13 = tpu.matmul %11, %12, %cst_9 {dimension_numbers = #tpu.dot_dimension_numbers<[1], [0], [0], [1], [0, 0, 1, 1], [], []>} : vector<8x256xbf16>, vector<256x512xbf16>, vector<8x512xf32> -> vector<8x512xf32>
    %c0_10 = arith.constant 0 : index
    %c0_11 = arith.constant 0 : index
    %14 = vector.load %arg8[%c0_10, %c0_11] : memref<1x512xf32, #tpu.memory_space<vmem>>, vector<1x512xf32>
    %15 = vector.broadcast %14 : vector<1x512xf32> to vector<8x512xf32>
    %16 = arith.addf %13, %15 : vector<8x512xf32>
    %17 = vector.extract_strided_slice %16 {offsets = [0, 0], sizes = [8, 128], strides = [1, 1]} : vector<8x512xf32> to vector<8x128xf32>
    %18 = arith.negf %17 : vector<8x128xf32>
    %19 = math.exp %18 : vector<8x128xf32>
    %cst_12 = arith.constant 1.000000e+00 : f32
    %20 = vector.broadcast %cst_12 : f32 to vector<8x128xf32>
    %21 = arith.addf %20, %19 : vector<8x128xf32>
    %22 = arith.divf %20, %21 : vector<8x128xf32>
    %23 = vector.extract_strided_slice %16 {offsets = [0, 128], sizes = [8, 128], strides = [1, 1]} : vector<8x512xf32> to vector<8x128xf32>
    %24 = arith.negf %23 : vector<8x128xf32>
    %25 = math.exp %24 : vector<8x128xf32>
    %cst_13 = arith.constant 1.000000e+00 : f32
    %26 = vector.broadcast %cst_13 : f32 to vector<8x128xf32>
    %27 = arith.addf %26, %25 : vector<8x128xf32>
    %28 = arith.divf %26, %27 : vector<8x128xf32>
    %29 = vector.extract_strided_slice %16 {offsets = [0, 256], sizes = [8, 128], strides = [1, 1]} : vector<8x512xf32> to vector<8x128xf32>
    %30 = vector.extract_strided_slice %16 {offsets = [0, 384], sizes = [8, 128], strides = [1, 1]} : vector<8x512xf32> to vector<8x128xf32>
    %31 = arith.mulf %22, %30 : vector<8x128xf32>
    %32 = arith.addf %29, %31 : vector<8x128xf32>
    %33 = math.tanh %32 : vector<8x128xf32>
    %cst_14 = arith.constant 1.000000e+00 : f32
    %34 = vector.broadcast %cst_14 : f32 to vector<8x128xf32>
    %35 = arith.subf %34, %28 : vector<8x128xf32>
    %36 = arith.mulf %35, %33 : vector<8x128xf32>
    %37 = arith.mulf %28, %8 : vector<8x128xf32>
    %38 = arith.addf %36, %37 : vector<8x128xf32>
    %c0_15 = arith.constant 0 : index
    %c0_16 = arith.constant 0 : index
    %39 = vector.load %arg13[%c0_15, %c0_16] : memref<8x128xf32, #tpu.memory_space<vmem>>, vector<8x128xf32>
    tpu.vector_store %arg13[%c0_15, %c0_16], %38 {strides = array<i32>} : memref<8x128xf32, #tpu.memory_space<vmem>>, vector<8x128xf32>,
    %40 = arith.truncf %38 : vector<8x128xf32> to vector<8x128xbf16>
    %c0_17 = arith.constant 0 : index
    %c0_18 = arith.constant 0 : index
    %41 = vector.load %arg9[%c0_17, %c0_18] : memref<128x128xbf16, #tpu.memory_space<vmem>>, vector<128x128xbf16>
    %cst_19 = arith.constant dense<0.000000e+00> : vector<8x128xf32>
    %42 = tpu.matmul %40, %41, %cst_19 {dimension_numbers = #tpu.dot_dimension_numbers<[1], [0], [0], [1], [0, 0, 1, 1], [], []>} : vector<8x128xbf16>, vector<128x128xbf16>, vector<8x128xf32> -> vector<8x128xf32>
    %c0_20 = arith.constant 0 : index
    %c0_21 = arith.constant 0 : index
    %43 = vector.load %arg10[%c0_20, %c0_21] : memref<1x128xf32, #tpu.memory_space<vmem>>, vector<1x128xf32>
    %44 = vector.broadcast %43 : vector<1x128xf32> to vector<8x128xf32>
    %45 = arith.addf %42, %44 : vector<8x128xf32>
    %cst_22 = arith.constant dense<0xFF800000> : vector<8xf32>
    %46 = vector.multi_reduction <maximumf>, %45, %cst_22 [1] : vector<8x128xf32> to vector<8xf32>
    %47 = vector.shape_cast %46 : vector<8xf32> to vector<8x1xf32>
    %48 = vector.broadcast %47 : vector<8x1xf32> to vector<8x128xf32>
    %49 = arith.subf %45, %48 : vector<8x128xf32>
    %50 = math.exp %49 : vector<8x128xf32>
    %cst_23 = arith.constant dense<0.000000e+00> : vector<8xf32>
    %51 = vector.multi_reduction <add>, %50, %cst_23 [1] : vector<8x128xf32> to vector<8xf32>
    %52 = vector.shape_cast %51 : vector<8xf32> to vector<8x1xf32>
    %53 = math.log %52 : vector<8x1xf32>
    %54 = arith.addf %53, %47 : vector<8x1xf32>
    %55 = vector.broadcast %54 : vector<8x1xf32> to vector<8x128xf32>
    %56 = arith.subf %45, %55 : vector<8x128xf32>
    %c0_24 = arith.constant 0 : index
    %c0_25 = arith.constant 0 : index
    %c0_26 = arith.constant 0 : index
    %57 = vector.load %arg11[%c0_24, %c0_25, %c0_26] : memref<1x8x128xf32, #tpu.memory_space<vmem>>, vector<1x8x128xf32>
    %58 = vector.shape_cast %57 : vector<1x8x128xf32> to vector<8x128xf32>
    %59 = vector.shape_cast %56 : vector<8x128xf32> to vector<1x8x128xf32>
    tpu.vector_store %arg11[%c0_24, %c0_25, %c0_26], %59 {strides = array<i32>} : memref<1x8x128xf32, #tpu.memory_space<vmem>>, vector<1x8x128xf32>,
    %c127_i32 = arith.constant 127 : i32
    %60 = arith.cmpi eq, %arg1, %c127_i32 : i32
    %61 = arith.extui %60 : i1 to i32
    %c0_i32_27 = arith.constant 0 : i32
    %62 = arith.cmpi ne, %61, %c0_i32_27 : i32
    scf.if %62 {
      %c0_31 = arith.constant 0 : index
      %c0_32 = arith.constant 0 : index
      %76 = vector.load %arg12[%c0_31, %c0_32] : memref<8x128xf32, #tpu.memory_space<vmem>>, vector<8x128xf32>
      tpu.vector_store %arg12[%c0_31, %c0_32], %38 {strides = array<i32>} : memref<8x128xf32, #tpu.memory_space<vmem>>, vector<8x128xf32>,
    } else {
    }
    %63 = tpu.iota {dimensions = array<i32: 1>} : vector<8x128xi32>
    %64 = vector.broadcast %47 : vector<8x1xf32> to vector<8x128xf32>
    %65 = arith.cmpf oge, %45, %64 : vector<8x128xf32>
    %c128_i32 = arith.constant 128 : i32
    %66 = vector.broadcast %c128_i32 : i32 to vector<8x128xi32>
    %67 = arith.select %65, %63, %66 : vector<8x128xi1>, vector<8x128xi32>
    %cst_28 = arith.constant dense<2147483647> : vector<8xi32>
    %68 = vector.multi_reduction <minsi>, %67, %cst_28 [1] : vector<8x128xi32> to vector<8xi32>
    %69 = vector.shape_cast %68 : vector<8xi32> to vector<8x1xi32>
    %70 = vector.broadcast %69 : vector<8x1xi32> to vector<8x128xi32>
    %71 = arith.cmpi eq, %63, %70 : vector<8x128xi32>
    %72 = arith.extui %71 : vector<8x128xi1> to vector<8x128xi32>
    %73 = arith.sitofp %72 : vector<8x128xi32> to vector<8x128xf32>
    %74 = arith.truncf %73 : vector<8x128xf32> to vector<8x128xbf16>
    %c0_29 = arith.constant 0 : index
    %c0_30 = arith.constant 0 : index
    %75 = vector.load %arg14[%c0_29, %c0_30] : memref<8x128xbf16, #tpu.memory_space<vmem>>, vector<8x128xbf16>
    tpu.vector_store %arg14[%c0_29, %c0_30], %74 {strides = array<i32>} : memref<8x128xbf16, #tpu.memory_space<vmem>>, vector<8x128xbf16>,
    return
  }
  func.func @transform_0(%arg0: i32, %arg1: i32) -> (i32, i32, i32) {
    %c0_i32 = arith.constant 0 : i32
    %c0_i32_0 = arith.constant 0 : i32
    %c0_i32_1 = arith.constant 0 : i32
    return %c0_i32, %arg0, %c0_i32_0 : i32, i32, i32
  }
  func.func @transform_1(%arg0: i32, %arg1: i32) -> (i32, i32) {
    %c0_i32 = arith.constant 0 : i32
    %c0_i32_0 = arith.constant 0 : i32
    %c0_i32_1 = arith.constant 0 : i32
    return %c0_i32, %c0_i32_0 : i32, i32
  }
  func.func @transform_2(%arg0: i32, %arg1: i32) -> (i32, i32) {
    %c0_i32 = arith.constant 0 : i32
    %c0_i32_0 = arith.constant 0 : i32
    %c0_i32_1 = arith.constant 0 : i32
    return %c0_i32, %c0_i32_0 : i32, i32
  }
  func.func @transform_3(%arg0: i32, %arg1: i32) -> (i32, i32) {
    %c0_i32 = arith.constant 0 : i32
    %c0_i32_0 = arith.constant 0 : i32
    %c0_i32_1 = arith.constant 0 : i32
    return %c0_i32, %c0_i32_0 : i32, i32
  }
  func.func @transform_4(%arg0: i32, %arg1: i32) -> (i32, i32) {
    %c0_i32 = arith.constant 0 : i32
    %c0_i32_0 = arith.constant 0 : i32
    %c0_i32_1 = arith.constant 0 : i32
    return %c0_i32, %c0_i32_0 : i32, i32
  }
  func.func @transform_5(%arg0: i32, %arg1: i32) -> (i32, i32) {
    %c0_i32 = arith.constant 0 : i32
    %c0_i32_0 = arith.constant 0 : i32
    %c0_i32_1 = arith.constant 0 : i32
    return %c0_i32, %c0_i32_0 : i32, i32
  }
  func.func @transform_6(%arg0: i32, %arg1: i32) -> (i32, i32) {
    %c0_i32 = arith.constant 0 : i32
    %c0_i32_0 = arith.constant 0 : i32
    %c0_i32_1 = arith.constant 0 : i32
    return %c0_i32, %c0_i32_0 : i32, i32
  }
  func.func @transform_7(%arg0: i32, %arg1: i32) -> (i32, i32) {
    %c0_i32 = arith.constant 0 : i32
    %c0_i32_0 = arith.constant 0 : i32
    %c0_i32_1 = arith.constant 0 : i32
    return %c0_i32, %c0_i32_0 : i32, i32
  }
  func.func @transform_8(%arg0: i32, %arg1: i32) -> (i32, i32) {
    %c0_i32 = arith.constant 0 : i32
    %c0_i32_0 = arith.constant 0 : i32
    %c0_i32_1 = arith.constant 0 : i32
    return %c0_i32, %c0_i32_0 : i32, i32
  }
  func.func @transform_9(%arg0: i32, %arg1: i32) -> (i32, i32, i32) {
    %c0_i32 = arith.constant 0 : i32
    %c0_i32_0 = arith.constant 0 : i32
    return %arg1, %arg0, %c0_i32 : i32, i32, i32
  }
  func.func @transform_10(%arg0: i32, %arg1: i32) -> (i32, i32) {
    %c0_i32 = arith.constant 0 : i32
    %c0_i32_0 = arith.constant 0 : i32
    return %arg0, %c0_i32 : i32, i32
  }
}

</mosaic_0001>

<llo_original>
// kernel: seq2seq_forward.1
$region0: #{seq2seq_forward.1}
  #allocation0 [shape = 'u32[]', space=smem, size = 0x4, offset = 0x4, fixed_abs, tag = 'smem constant byte address 0x4 - core index']
  #allocation1 [shape = 'u32[72,128]{1,0:T(1,128)}', space=vmem, size = 0x9000, scoped, tag = 'internal scratch']
  #allocation2 [shape = 'f32[8,128]{1,0:T(8,128)}', space=vmem, size = 0x1000, scoped, tag = 'scratch operand']
  #allocation3 [shape = 'bf16[8,128]{1,0:T(8,128)(2,1)}', space=vmem, size = 0x800, scoped, tag = 'scratch operand']
  %s0 = inlined_call_operand.vmem [shape: s32[8,8,1], index: 0, kind: input, shape index: {}]
  %s1 = inlined_call_operand.vmem [shape: bf16[128,128], index: 1, kind: input, shape index: {}]
  %s2 = inlined_call_operand.vmem [shape: bf16[256,512], index: 2, kind: input, shape index: {}]
  %s3 = inlined_call_operand.vmem [shape: f32[1,512], index: 3, kind: input, shape index: {}]
  %s4 = inlined_call_operand.vmem [shape: bf16[128,128], index: 4, kind: input, shape index: {}]
  %s5 = inlined_call_operand.vmem [shape: bf16[256,512], index: 5, kind: input, shape index: {}]
  %s6 = inlined_call_operand.vmem [shape: f32[1,512], index: 6, kind: input, shape index: {}]
  %s7 = inlined_call_operand.vmem [shape: bf16[128,128], index: 7, kind: input, shape index: {}]
  %s8 = inlined_call_operand.vmem [shape: f32[1,128], index: 8, kind: input, shape index: {}]
  %s9 = inlined_call_operand.vmem [shape: f32[128,8,128], index: 9, kind: output, shape index: {0}]
  %s10 = inlined_call_operand.vmem [shape: f32[8,128], index: 10, kind: output, shape index: {1}]
  %11 = xla_tuple %s9, %s10
  %s12 = sld [smem:[#allocation0]]
  $region85: #{seq2seq_forward.1} parent=0
    _
  %s14 = ssub.s32 1, %s12
  %s15 = scalar_select 0, %s14, %s12
  loop: start=0, step=1, limit=130
  $region2: #{seq2seq_forward.1} parent=0 // loop_pre_header
    _
  $region3: #{seq2seq_forward.1} parent=0 // loop_header
    %s17 = sphi 0, %s21
    %p18 = scmp.ge.s32.totalorder %s17, 130
    %s24 = sphi 0, %s36
    %s25 = sphi 0, %s32
    %s26 = sphi 0, %s24
    %s27 = sphi 0, %s25
    %s28 = sphi 0, %s26
    %s29 = sphi 0, %s27
    %s39 = sphi 0, %s41
    %s42 = sphi 0, %s39
    %s43 = sphi 0, %s42
    %s59 = sphi 0, %s43
    %s63 = sphi 0, %s63
    %s65 = sphi 0, %s63
    %s66 = sphi 0, %s65
    %s80 = sphi 0, %s66
    %s84 = sphi 0, %s84
    %s86 = sphi 0, %s84
    %s87 = sphi 0, %s86
    %s101 = sphi 0, %s87
    %s105 = sphi 0, %s105
    %s107 = sphi 0, %s105
    %s108 = sphi 0, %s107
    %s122 = sphi 0, %s108
    %s126 = sphi 0, %s126
    %s128 = sphi 0, %s126
    %s129 = sphi 0, %s128
    %s143 = sphi 0, %s129
    %s147 = sphi 0, %s147
    %s149 = sphi 0, %s147
    %s150 = sphi 0, %s149
    %s164 = sphi 0, %s150
    %s168 = sphi 0, %s168
    %s170 = sphi 0, %s168
    %s171 = sphi 0, %s170
    %s185 = sphi 0, %s171
    %s189 = sphi 0, %s189
    %s191 = sphi 0, %s189
    %s192 = sphi 0, %s191
    %s206 = sphi 0, %s192
    %s210 = sphi 0, %s210
    %s212 = sphi 0, %s210
    %s213 = sphi 0, %s212
    %s227 = sphi 0, %s213
    %s235 = sphi 0, %s237
    %s238 = sphi 0, %s235
    %s239 = sphi 0, %s238
    %s255 = sphi 0, %s239
    %s261 = sphi 0, %s263
    %s264 = sphi 0, %s261
    %s265 = sphi 0, %s264
    %s281 = sphi 0, %s265
  $region4: #{seq2seq_forward.1} parent=0 // loop_header_branch
    %20 = sbr.rel (%p18) target = $region8
  $region5: #{seq2seq_forward.1} parent=0 // loop_body
    %s22 = ssub.s32 %s17, 1
    %s23 = ssub.s32 %s17, 2
    %s30 = sadd.s32 1, %s25
    %p31 = scmp.ge.s32.totalorder %s30, 128
    %s32 = scalar_select %p31, 0, %s30
    %s33 = sadd.s32 1, %s24
    %s34 = scalar_select %p31, %s33, %s24
    %p35 = scmp.ge.s32.totalorder %s34, 1
    %s36 = scalar_select %p35, 0, %s34
    %s37 = ssub.s32 %s24, %s36
    %p38 = scmp.eq.s32.totalorder %s37, 0
    %s40 = sadd.s32 %s39, 1
    %s41 = scalar_select %p38, %s39, %s40
    %p44 = pneg %p38
    %p45 = scmp.eq.s32.totalorder %s17, 127
    %p46 = por %p44, %p45
    %p47 = scmp.ne.s32.totalorder %s39, %s42
    %p48 = scmp.eq.s32.totalorder %s17, 0
    %p49 = por %p47, %p48
    %p50 = scmp.ne.s32.totalorder %s39, %s42
    %p51 = scmp.eq.s32.totalorder %s22, 127
    %p52 = por %p50, %p51
    %p53 = scmp.ne.s32.totalorder %s42, %s43
    %p54 = scmp.eq.s32.totalorder %s22, 0
    %p55 = por %p53, %p54
    %p56 = scmp.ne.s32.totalorder %s42, %s43
    %p57 = scmp.eq.s32.totalorder %s23, 127
    %p58 = por %p56, %p57
    %p60 = scmp.ne.s32.totalorder %s43, %s59
    %p61 = scmp.eq.s32.totalorder %s23, 0
    %p62 = por %p60, %p61
    %s64 = sadd.s32 %s63, 1
    %p67 = scmp.eq.s32.totalorder %s17, 127
    %p68 = scmp.ne.s32.totalorder %s63, %s65
    %p69 = scmp.eq.s32.totalorder %s17, 0
    %p70 = por %p68, %p69
    %p71 = scmp.ne.s32.totalorder %s63, %s65
    %p72 = scmp.eq.s32.totalorder %s22, 127
    %p73 = por %p71, %p72
    %p74 = scmp.ne.s32.totalorder %s65, %s66
    %p75 = scmp.eq.s32.totalorder %s22, 0
    %p76 = por %p74, %p75
    %p77 = scmp.ne.s32.totalorder %s65, %s66
    %p78 = scmp.eq.s32.totalorder %s23, 127
    %p79 = por %p77, %p78
    %p81 = scmp.ne.s32.totalorder %s66, %s80
    %p82 = scmp.eq.s32.totalorder %s23, 0
    %p83 = por %p81, %p82
    %s85 = sadd.s32 %s84, 1
    %p88 = scmp.eq.s32.totalorder %s17, 127
    %p89 = scmp.ne.s32.totalorder %s84, %s86
    %p90 = scmp.eq.s32.totalorder %s17, 0
    %p91 = por %p89, %p90
    %p92 = scmp.ne.s32.totalorder %s84, %s86
    %p93 = scmp.eq.s32.totalorder %s22, 127
    %p94 = por %p92, %p93
    %p95 = scmp.ne.s32.totalorder %s86, %s87
    %p96 = scmp.eq.s32.totalorder %s22, 0
    %p97 = por %p95, %p96
    %p98 = scmp.ne.s32.totalorder %s86, %s87
    %p99 = scmp.eq.s32.totalorder %s23, 127
    %p100 = por %p98, %p99
    %p102 = scmp.ne.s32.totalorder %s87, %s101
    %p103 = scmp.eq.s32.totalorder %s23, 0
    %p104 = por %p102, %p103
    %s106 = sadd.s32 %s105, 1
    %p109 = scmp.eq.s32.totalorder %s17, 127
    %p110 = scmp.ne.s32.totalorder %s105, %s107
    %p111 = scmp.eq.s32.totalorder %s17, 0
    %p112 = por %p110, %p111
    %p113 = scmp.ne.s32.totalorder %s105, %s107
    %p114 = scmp.eq.s32.totalorder %s22, 127
    %p115 = por %p113, %p114
    %p116 = scmp.ne.s32.totalorder %s107, %s108
    %p117 = scmp.eq.s32.totalorder %s22, 0
    %p118 = por %p116, %p117
    %p119 = scmp.ne.s32.totalorder %s107, %s108
    %p120 = scmp.eq.s32.totalorder %s23, 127
    %p121 = por %p119, %p120
    %p123 = scmp.ne.s32.totalorder %s108, %s122
    %p124 = scmp.eq.s32.totalorder %s23, 0
    %p125 = por %p123, %p124
    %s127 = sadd.s32 %s126, 1
    %p130 = scmp.eq.s32.totalorder %s17, 127
    %p131 = scmp.ne.s32.totalorder %s126, %s128
    %p132 = scmp.eq.s32.totalorder %s17, 0
    %p133 = por %p131, %p132
    %p134 = scmp.ne.s32.totalorder %s126, %s128
    %p135 = scmp.eq.s32.totalorder %s22, 127
    %p136 = por %p134, %p135
    %p137 = scmp.ne.s32.totalorder %s128, %s129
    %p138 = scmp.eq.s32.totalorder %s22, 0
    %p139 = por %p137, %p138
    %p140 = scmp.ne.s32.totalorder %s128, %s129
    %p141 = scmp.eq.s32.totalorder %s23, 127
    %p142 = por %p140, %p141
    %p144 = scmp.ne.s32.totalorder %s129, %s143
    %p145 = scmp.eq.s32.totalorder %s23, 0
    %p146 = por %p144, %p145
    %s148 = sadd.s32 %s147, 1
    %p151 = scmp.eq.s32.totalorder %s17, 127
    %p152 = scmp.ne.s32.totalorder %s147, %s149
    %p153 = scmp.eq.s32.totalorder %s17, 0
    %p154 = por %p152, %p153
    %p155 = scmp.ne.s32.totalorder %s147, %s149
    %p156 = scmp.eq.s32.totalorder %s22, 127
    %p157 = por %p155, %p156
    %p158 = scmp.ne.s32.totalorder %s149, %s150
    %p159 = scmp.eq.s32.totalorder %s22, 0
    %p160 = por %p158, %p159
    %p161 = scmp.ne.s32.totalorder %s149, %s150
    %p162 = scmp.eq.s32.totalorder %s23, 127
    %p163 = por %p161, %p162
    %p165 = scmp.ne.s32.totalorder %s150, %s164
    %p166 = scmp.eq.s32.totalorder %s23, 0
    %p167 = por %p165, %p166
    %s169 = sadd.s32 %s168, 1
    %p172 = scmp.eq.s32.totalorder %s17, 127
    %p173 = scmp.ne.s32.totalorder %s168, %s170
    %p174 = scmp.eq.s32.totalorder %s17, 0
    %p175 = por %p173, %p174
    %p176 = scmp.ne.s32.totalorder %s168, %s170
    %p177 = scmp.eq.s32.totalorder %s22, 127
    %p178 = por %p176, %p177
    %p179 = scmp.ne.s32.totalorder %s170, %s171
    %p180 = scmp.eq.s32.totalorder %s22, 0
    %p181 = por %p179, %p180
    %p182 = scmp.ne.s32.totalorder %s170, %s171
    %p183 = scmp.eq.s32.totalorder %s23, 127
    %p184 = por %p182, %p183
    %p186 = scmp.ne.s32.totalorder %s171, %s185
    %p187 = scmp.eq.s32.totalorder %s23, 0
    %p188 = por %p186, %p187
    %s190 = sadd.s32 %s189, 1
    %p193 = scmp.eq.s32.totalorder %s17, 127
    %p194 = scmp.ne.s32.totalorder %s189, %s191
    %p195 = scmp.eq.s32.totalorder %s17, 0
    %p196 = por %p194, %p195
    %p197 = scmp.ne.s32.totalorder %s189, %s191
    %p198 = scmp.eq.s32.totalorder %s22, 127
    %p199 = por %p197, %p198
    %p200 = scmp.ne.s32.totalorder %s191, %s192
    %p201 = scmp.eq.s32.totalorder %s22, 0
    %p202 = por %p200, %p201
    %p203 = scmp.ne.s32.totalorder %s191, %s192
    %p204 = scmp.eq.s32.totalorder %s23, 127
    %p205 = por %p203, %p204
    %p207 = scmp.ne.s32.totalorder %s192, %s206
    %p208 = scmp.eq.s32.totalorder %s23, 0
    %p209 = por %p207, %p208
    %s211 = sadd.s32 %s210, 1
    %p214 = scmp.eq.s32.totalorder %s17, 127
    %p215 = scmp.ne.s32.totalorder %s210, %s212
    %p216 = scmp.eq.s32.totalorder %s17, 0
    %p217 = por %p215, %p216
    %p218 = scmp.ne.s32.totalorder %s210, %s212
    %p219 = scmp.eq.s32.totalorder %s22, 127
    %p220 = por %p218, %p219
    %p221 = scmp.ne.s32.totalorder %s212, %s213
    %p222 = scmp.eq.s32.totalorder %s22, 0
    %p223 = por %p221, %p222
    %p224 = scmp.ne.s32.totalorder %s212, %s213
    %p225 = scmp.eq.s32.totalorder %s23, 127
    %p226 = por %p224, %p225
    %p228 = scmp.ne.s32.totalorder %s213, %s227
    %p229 = scmp.eq.s32.totalorder %s23, 0
    %p230 = por %p228, %p229
    %s231 = ssub.s32 %s25, %s32
    %s232 = ssub.s32 %s24, %s36
    %s233 = sor.u32 %s231, %s232
    %p234 = scmp.eq.s32.totalorder %s233, 0
    %s236 = sadd.s32 %s235, 1
    %s237 = scalar_select %p234, %s235, %s236
    %p240 = pneg %p234
    %p241 = scmp.eq.s32.totalorder %s17, 127
    %p242 = por %p240, %p241
    %p243 = scmp.ne.s32.totalorder %s235, %s238
    %p244 = scmp.eq.s32.totalorder %s17, 0
    %p245 = por %p243, %p244
    %p246 = scmp.ne.s32.totalorder %s235, %s238
    %p247 = scmp.eq.s32.totalorder %s22, 127
    %p248 = por %p246, %p247
    %p249 = scmp.ne.s32.totalorder %s238, %s239
    %p250 = scmp.eq.s32.totalorder %s22, 0
    %p251 = por %p249, %p250
    %p252 = scmp.ne.s32.totalorder %s238, %s239
    %p253 = scmp.eq.s32.totalorder %s23, 127
    %p254 = por %p252, %p253
    %p256 = scmp.ne.s32.totalorder %s239, %s255
    %p257 = scmp.eq.s32.totalorder %s23, 0
    %p258 = por %p256, %p257
    %s259 = ssub.s32 %s24, %s36
    %p260 = scmp.eq.s32.totalorder %s259, 0
    %s262 = sadd.s32 %s261, 1
    %s263 = scalar_select %p260, %s261, %s262
    %p266 = pneg %p260
    %p267 = scmp.eq.s32.totalorder %s17, 127
    %p268 = por %p266, %p267
    %p269 = scmp.ne.s32.totalorder %s261, %s264
    %p270 = scmp.eq.s32.totalorder %s17, 0
    %p271 = por %p269, %p270
    %p272 = scmp.ne.s32.totalorder %s261, %s264
    %p273 = scmp.eq.s32.totalorder %s22, 127
    %p274 = por %p272, %p273
    %p275 = scmp.ne.s32.totalorder %s264, %s265
    %p276 = scmp.eq.s32.totalorder %s22, 0
    %p277 = por %p275, %p276
    %p278 = scmp.ne.s32.totalorder %s264, %s265
    %p279 = scmp.eq.s32.totalorder %s23, 127
    %p280 = por %p278, %p279
    %p282 = scmp.ne.s32.totalorder %s265, %s281
    %p283 = scmp.eq.s32.totalorder %s23, 0
    %p284 = por %p282, %p283
    %p285 = scmp.le.s32.totalorder 1, %s17
    %p286 = scmp.lt.s32.totalorder %s17, 129
    %p287 = pnand %p285, %p286
    %p288 = pneg %p287
    // Predicated region
    $region9: #{seq2seq_forward.1} parent=5 // pred_check
      _
    $region10: #{seq2seq_forward.1} parent=5 // pred_check_branch
      %290 = sbr.rel (%p287) target = $region12
    $region11: #{seq2seq_forward.1} parent=5 // pred_region
      %s291 = ssub.s32 %s17, 1
      // Predicated region
      $region13: #{seq2seq_forward.1} parent=11 // pred_check
        %p292 = pneg %p55
      $region14: #{seq2seq_forward.1} parent=11 // pred_check_branch
        %294 = sbr.rel (%p292) target = $region16
      $region15: #{seq2seq_forward.1} parent=11 // pred_region
        %p295 = scmp.lt.s32.totalorder %s26, 0
        %s296 = scalar_select %p295, %s26, 0
        %s297 = smul.addr %s296, 8
        %s298 = scalar_lea.vmem %s0, %s297
      $region16: #{seq2seq_forward.1} parent=11 // pred_fallthru
        _
      // Predicated region
      $region17: #{seq2seq_forward.1} parent=11 // pred_check
        %p299 = pneg %p76
      $region18: #{seq2seq_forward.1} parent=11 // pred_check_branch
        %301 = sbr.rel (%p299) target = $region20
      $region19: #{seq2seq_forward.1} parent=11 // pred_region
        _
      $region20: #{seq2seq_forward.1} parent=11 // pred_fallthru
        _
      // Predicated region
      $region21: #{seq2seq_forward.1} parent=11 // pred_check
        %p302 = pneg %p97
      $region22: #{seq2seq_forward.1} parent=11 // pred_check_branch
        %304 = sbr.rel (%p302) target = $region24
      $region23: #{seq2seq_forward.1} parent=11 // pred_region
        _
      $region24: #{seq2seq_forward.1} parent=11 // pred_fallthru
        _
      // Predicated region
      $region25: #{seq2seq_forward.1} parent=11 // pred_check
        %p305 = pneg %p118
      $region26: #{seq2seq_forward.1} parent=11 // pred_check_branch
        %307 = sbr.rel (%p305) target = $region28
      $region27: #{seq2seq_forward.1} parent=11 // pred_region
        _
      $region28: #{seq2seq_forward.1} parent=11 // pred_fallthru
        _
      // Predicated region
      $region29: #{seq2seq_forward.1} parent=11 // pred_check
        %p308 = pneg %p139
      $region30: #{seq2seq_forward.1} parent=11 // pred_check_branch
        %310 = sbr.rel (%p308) target = $region32
      $region31: #{seq2seq_forward.1} parent=11 // pred_region
        _
      $region32: #{seq2seq_forward.1} parent=11 // pred_fallthru
        _
      // Predicated region
      $region33: #{seq2seq_forward.1} parent=11 // pred_check
        %p311 = pneg %p160
      $region34: #{seq2seq_forward.1} parent=11 // pred_check_branch
        %313 = sbr.rel (%p311) target = $region36
      $region35: #{seq2seq_forward.1} parent=11 // pred_region
        _
      $region36: #{seq2seq_forward.1} parent=11 // pred_fallthru
        _
      // Predicated region
      $region37: #{seq2seq_forward.1} parent=11 // pred_check
        %p314 = pneg %p181
      $region38: #{seq2seq_forward.1} parent=11 // pred_check_branch
        %316 = sbr.rel (%p314) target = $region40
      $region39: #{seq2seq_forward.1} parent=11 // pred_region
        _
      $region40: #{seq2seq_forward.1} parent=11 // pred_fallthru
        _
      // Predicated region
      $region41: #{seq2seq_forward.1} parent=11 // pred_check
        %p317 = pneg %p202
      $region42: #{seq2seq_forward.1} parent=11 // pred_check_branch
        %319 = sbr.rel (%p317) target = $region44
      $region43: #{seq2seq_forward.1} parent=11 // pred_region
        _
      $region44: #{seq2seq_forward.1} parent=11 // pred_fallthru
        _
      // Predicated region
      $region45: #{seq2seq_forward.1} parent=11 // pred_check
        %p320 = pneg %p223
      $region46: #{seq2seq_forward.1} parent=11 // pred_check_branch
        %322 = sbr.rel (%p320) target = $region48
      $region47: #{seq2seq_forward.1} parent=11 // pred_region
        _
      $region48: #{seq2seq_forward.1} parent=11 // pred_fallthru
        _
    $region12: #{seq2seq_forward.1} parent=5 // pred_fallthru
      _
    %p323 = scmp.lt.s32.totalorder %s17, 128
    // Predicated region
    $region49: #{seq2seq_forward.1} parent=5 // pred_check
      %p324 = pneg %p323
    $region50: #{seq2seq_forward.1} parent=5 // pred_check_branch
      %326 = sbr.rel (%p324) target = $region52
    $region51: #{seq2seq_forward.1} parent=5 // pred_region
      _
    $region52: #{seq2seq_forward.1} parent=5 // pred_fallthru
      _
    %p327 = scmp.le.s32.totalorder 1, %s17
    %p328 = scmp.lt.s32.totalorder %s17, 129
    %p329 = pnand %p327, %p328
    %p330 = pneg %p329
    // Predicated region
    $region53: #{seq2seq_forward.1} parent=5 // pred_check
      _
    $region54: #{seq2seq_forward.1} parent=5 // pred_check_branch
      %332 = sbr.rel (%p329) target = $region56
    $region55: #{seq2seq_forward.1} parent=5 // pred_region
      %s333 = ssub.s32 %s17, 1
      %p334 = scmp.lt.s32.totalorder %s26, 0
      %s335 = scalar_select %p334, %s26, 0
      %s336 = smul.addr %s335, 8
      %s337 = scalar_lea.vmem %s0, %s336
      %p338 = pneg %p55
      %p339 = pneg %p52
      %p340 = pneg %p76
      %p341 = pneg %p73
      %p342 = pneg %p97
      %p343 = pneg %p94
      %p344 = pneg %p118
      %p345 = pneg %p115
      %p346 = pneg %p139
      %p347 = pneg %p136
      %p348 = pneg %p160
      %p349 = pneg %p157
      %p350 = pneg %p181
      %p351 = pneg %p178
      %p352 = pneg %p202
      %p353 = pneg %p199
      %p354 = pneg %p223
      %p355 = pneg %p220
      %p356 = pneg %p251
      %p357 = pneg %p248
      %p358 = scmp.lt.s32.totalorder %s27, 127
      %s359 = scalar_select %p358, %s27, 127
      %p360 = scmp.lt.s32.totalorder %s26, 0
      %s361 = scalar_select %p360, %s26, 0
      %s362 = sadd.s32 %s361, %s359
      %s363 = smul.addr %s362, 8
      %s364 = scalar_lea.vmem %s9, %s363
      %p365 = pneg %p277
      %p366 = pneg %p274
      %p367 = scmp.lt.s32.totalorder %s26, 0
      %s368 = scalar_select %p367, %s26, 0
      %s369 = smul.addr %s368, 8
      %s370 = scalar_lea.vmem %s10, %s369
      %p371 = scmp.lt.s32.totalorder %s26, 0
      %s372 = scalar_select %p371, %s26, 0
      %s373 = smul.addr %s372, 8
      %s374 = scalar_lea.vmem %s0, %s373
      %p375 = scmp.lt.s32.totalorder %s27, 127
      %s376 = scalar_select %p375, %s27, 127
      %p377 = scmp.lt.s32.totalorder %s26, 0
      %s378 = scalar_select %p377, %s26, 0
      %s379 = sadd.s32 %s378, %s376
      %s380 = smul.addr %s379, 8
      %s381 = scalar_lea.vmem %s9, %s380
      %p382 = scmp.lt.s32.totalorder %s26, 0
      %s383 = scalar_select %p382, %s26, 0
      %s384 = smul.addr %s383, 8
      %s385 = scalar_lea.vmem %s10, %s384
      %p386 = scmp.eq.s32.totalorder %s27, 0
      // Predicated region
      $region57: #{seq2seq_forward.1} parent=55 // pred_check
        %p387 = pneg %p386
      $region58: #{seq2seq_forward.1} parent=55 // pred_check_branch
        %389 = sbr.rel (%p387) target = $region60
      $region59: #{seq2seq_forward.1} parent=55 // pred_region
        %390 = vst [vmem:[#allocation2] sm:$0xff] 0.0
        %v391 = vlaneseq
        %v392 = vand.u32 %v391, 127
        %v393 = vld [vmem:[%s374] sm:$0xff]
        %394 = vset.pattern.permute.xlu0 0
        %395 = vperm.xlu0 %394, %v393
        %v396 = vpop.permute.xlu0 %395
        %vm397 = vcmp.eq.s32.totalorder %v392, %v396
        %v398 = vsel %vm397, 1, 0
        %v399 = vcvt.s32.f32 %v398
        %v400 = vpack.c.bf16 %v399, %v399
        %v401 = vld [vmem:[%s1] sm:$0xf]
        %v402 = vld [vmem:[%s1 + $0x4] sm:$0xf]
        %v403 = vld [vmem:[%s1 + $0x8] sm:$0xf]
        %v404 = vld [vmem:[%s1 + $0xc] sm:$0xf]
        %v405 = vld [vmem:[%s1 + $0x10] sm:$0xf]
        %v406 = vld [vmem:[%s1 + $0x14] sm:$0xf]
        %v407 = vld [vmem:[%s1 + $0x18] sm:$0xf]
        %v408 = vld [vmem:[%s1 + $0x1c] sm:$0xf]
        %v409 = vld [vmem:[%s1 + $0x20] sm:$0xf]
        %v410 = vld [vmem:[%s1 + $0x24] sm:$0xf]
        %v411 = vld [vmem:[%s1 + $0x28] sm:$0xf]
        %v412 = vld [vmem:[%s1 + $0x2c] sm:$0xf]
        %v413 = vld [vmem:[%s1 + $0x30] sm:$0xf]
        %v414 = vld [vmem:[%s1 + $0x34] sm:$0xf]
        %v415 = vld [vmem:[%s1 + $0x38] sm:$0xf]
        %v416 = vld [vmem:[%s1 + $0x3c] sm:$0xf]
        %v433 = vunpack.c.l.b16 %v401
        %v434 = vunpack.c.l.b16 %v402
        %v435 = vunpack.c.l.b16 %v403
        %v436 = vunpack.c.l.b16 %v404
        %v437 = vunpack.c.l.b16 %v405
        %v438 = vunpack.c.l.b16 %v406
        %v439 = vunpack.c.l.b16 %v407
        %v440 = vunpack.c.l.b16 %v408
        %v441 = vunpack.c.l.b16 %v409
        %v442 = vunpack.c.l.b16 %v410
        %v443 = vunpack.c.l.b16 %v411
        %v444 = vunpack.c.l.b16 %v412
        %v445 = vunpack.c.l.b16 %v413
        %v446 = vunpack.c.l.b16 %v414
        %v447 = vunpack.c.l.b16 %v415
        %v448 = vunpack.c.l.b16 %v416
        %v449 = vpack.c.b16 %v434, %v433
        %v450 = vpack.c.b16 %v436, %v435
        %v451 = vpack.c.b16 %v438, %v437
        %v452 = vpack.c.b16 %v440, %v439
        %v453 = vpack.c.b16 %v442, %v441
        %v454 = vpack.c.b16 %v444, %v443
        %v455 = vpack.c.b16 %v446, %v445
        %v456 = vpack.c.b16 %v448, %v447
        %465 = vmatpush.bf16.msra.mxu0 %v456
        %466 = vmatpush.bf16.msra.mxu0 %v455
        %467 = vmatpush.bf16.msra.mxu0 %v454
        %468 = vmatpush.bf16.msra.mxu0 %v453
        %469 = vmatpush.bf16.msra.mxu0 %v452
        %470 = vmatpush.bf16.msra.mxu0 %v451
        %471 = vmatpush.bf16.msra.mxu0 %v450
        %472 = vmatpush.bf16.msra.mxu0 %v449
        %473 = vmatmul.bf16.gmra.mxu0 %v400
        %v474 = vpop.f32.mrf.mxu0
        %v475 = vadd.f32 0.0, %v474
        %v476 = vpop.f32.mrf.mxu0
        %477 = vdwg.mxu0
        %v478 = vld [vmem:[#allocation2] sm:$0xff]
        %v479 = vpack.c.bf16 %v475, %v475
        %v480 = vpack.c.bf16 %v478, %v478
        %v481 = vld [vmem:[%s2] sm:$0xff]
        %v482 = vld [vmem:[%s2 + $0x8] sm:$0xff]
        %v483 = vld [vmem:[%s2 + $0x10] sm:$0xff]
        %v484 = vld [vmem:[%s2 + $0x18] sm:$0xff]
        %v485 = vld [vmem:[%s2 + $0x20] sm:$0xff]
        %v486 = vld [vmem:[%s2 + $0x28] sm:$0xff]
        %v487 = vld [vmem:[%s2 + $0x30] sm:$0xff]
        %v488 = vld [vmem:[%s2 + $0x38] sm:$0xff]
        %v489 = vld [vmem:[%s2 + $0x40] sm:$0xff]
        %v490 = vld [vmem:[%s2 + $0x48] sm:$0xff]
        %v491 = vld [vmem:[%s2 + $0x50] sm:$0xff]
        %v492 = vld [vmem:[%s2 + $0x58] sm:$0xff]
        %v493 = vld [vmem:[%s2 + $0x60] sm:$0xff]
        %v494 = vld [vmem:[%s2 + $0x68] sm:$0xff]
        %v495 = vld [vmem:[%s2 + $0x70] sm:$0xff]
        %v496 = vld [vmem:[%s2 + $0x78] sm:$0xff]
        %v497 = vld [vmem:[%s2 + $0x80] sm:$0xff]
        %v498 = vld [vmem:[%s2 + $0x88] sm:$0xff]
        %v499 = vld [vmem:[%s2 + $0x90] sm:$0xff]
        %v500 = vld [vmem:[%s2 + $0x98] sm:$0xff]
        %v501 = vld [vmem:[%s2 + $0xa0] sm:$0xff]
        %v502 = vld [vmem:[%s2 + $0xa8] sm:$0xff]
        %v503 = vld [vmem:[%s2 + $0xb0] sm:$0xff]
        %v504 = vld [vmem:[%s2 + $0xb8] sm:$0xff]
        %v505 = vld [vmem:[%s2 + $0xc0] sm:$0xff]
        %v506 = vld [vmem:[%s2 + $0xc8] sm:$0xff]
        %v507 = vld [vmem:[%s2 + $0xd0] sm:$0xff]
        %v508 = vld [vmem:[%s2 + $0xd8] sm:$0xff]
        %v509 = vld [vmem:[%s2 + $0xe0] sm:$0xff]
        %v510 = vld [vmem:[%s2 + $0xe8] sm:$0xff]
        %v511 = vld [vmem:[%s2 + $0xf0] sm:$0xff]
        %v512 = vld [vmem:[%s2 + $0xf8] sm:$0xff]
        %v513 = vld [vmem:[%s2 + $0x100] sm:$0xff]
        %v514 = vld [vmem:[%s2 + $0x108] sm:$0xff]
        %v515 = vld [vmem:[%s2 + $0x110] sm:$0xff]
        %v516 = vld [vmem:[%s2 + $0x118] sm:$0xff]
        %v517 = vld [vmem:[%s2 + $0x120] sm:$0xff]
        %v518 = vld [vmem:[%s2 + $0x128] sm:$0xff]
        %v519 = vld [vmem:[%s2 + $0x130] sm:$0xff]
        %v520 = vld [vmem:[%s2 + $0x138] sm:$0xff]
        %v521 = vld [vmem:[%s2 + $0x140] sm:$0xff]
        %v522 = vld [vmem:[%s2 + $0x148] sm:$0xff]
        %v523 = vld [vmem:[%s2 + $0x150] sm:$0xff]
        %v524 = vld [vmem:[%s2 + $0x158] sm:$0xff]
        %v525 = vld [vmem:[%s2 + $0x160] sm:$0xff]
        %v526 = vld [vmem:[%s2 + $0x168] sm:$0xff]
        %v527 = vld [vmem:[%s2 + $0x170] sm:$0xff]
        %v528 = vld [vmem:[%s2 + $0x178] sm:$0xff]
        %v529 = vld [vmem:[%s2 + $0x180] sm:$0xff]
        %v530 = vld [vmem:[%s2 + $0x188] sm:$0xff]
        %v531 = vld [vmem:[%s2 + $0x190] sm:$0xff]
        %v532 = vld [vmem:[%s2 + $0x198] sm:$0xff]
        %v533 = vld [vmem:[%s2 + $0x1a0] sm:$0xff]
        %v534 = vld [vmem:[%s2 + $0x1a8] sm:$0xff]
        %v535 = vld [vmem:[%s2 + $0x1b0] sm:$0xff]
        %v536 = vld [vmem:[%s2 + $0x1b8] sm:$0xff]
        %v537 = vld [vmem:[%s2 + $0x1c0] sm:$0xff]
        %v538 = vld [vmem:[%s2 + $0x1c8] sm:$0xff]
        %v539 = vld [vmem:[%s2 + $0x1d0] sm:$0xff]
        %v540 = vld [vmem:[%s2 + $0x1d8] sm:$0xff]
        %v541 = vld [vmem:[%s2 + $0x1e0] sm:$0xff]
        %v542 = vld [vmem:[%s2 + $0x1e8] sm:$0xff]
        %v543 = vld [vmem:[%s2 + $0x1f0] sm:$0xff]
        %v544 = vld [vmem:[%s2 + $0x1f8] sm:$0xff]
        %v545 = vld [vmem:[%s3] sm:$0xf]
        %v547 = vperm.slane %v545, 0
        %v548 = vperm.slane %v545, 1
        %v549 = vperm.slane %v545, 2
        %v550 = vperm.slane %v545, 3
        %v619 = vunpack.c.l.b16 %v481
        %v620 = vunpack.c.h.b16 %v481
        %v621 = vunpack.c.l.b16 %v482
        %v622 = vunpack.c.h.b16 %v482
        %v623 = vunpack.c.l.b16 %v483
        %v624 = vunpack.c.h.b16 %v483
        %v625 = vunpack.c.l.b16 %v484
        %v626 = vunpack.c.h.b16 %v484
        %v627 = vunpack.c.l.b16 %v485
        %v628 = vunpack.c.h.b16 %v485
        %v629 = vunpack.c.l.b16 %v486
        %v630 = vunpack.c.h.b16 %v486
        %v631 = vunpack.c.l.b16 %v487
        %v632 = vunpack.c.h.b16 %v487
        %v633 = vunpack.c.l.b16 %v488
        %v634 = vunpack.c.h.b16 %v488
        %v635 = vunpack.c.l.b16 %v489
        %v636 = vunpack.c.h.b16 %v489
        %v637 = vunpack.c.l.b16 %v490
        %v638 = vunpack.c.h.b16 %v490
        %v639 = vunpack.c.l.b16 %v491
        %v640 = vunpack.c.h.b16 %v491
        %v641 = vunpack.c.l.b16 %v492
        %v642 = vunpack.c.h.b16 %v492
        %v643 = vunpack.c.l.b16 %v493
        %v644 = vunpack.c.h.b16 %v493
        %v645 = vunpack.c.l.b16 %v494
        %v646 = vunpack.c.h.b16 %v494
        %v647 = vunpack.c.l.b16 %v495
        %v648 = vunpack.c.h.b16 %v495
        %v649 = vunpack.c.l.b16 %v496
        %v650 = vunpack.c.h.b16 %v496
        %v651 = vunpack.c.l.b16 %v497
        %v652 = vunpack.c.h.b16 %v497
        %v653 = vunpack.c.l.b16 %v498
        %v654 = vunpack.c.h.b16 %v498
        %v655 = vunpack.c.l.b16 %v499
        %v656 = vunpack.c.h.b16 %v499
        %v657 = vunpack.c.l.b16 %v500
        %v658 = vunpack.c.h.b16 %v500
        %v659 = vunpack.c.l.b16 %v501
        %v660 = vunpack.c.h.b16 %v501
        %v661 = vunpack.c.l.b16 %v502
        %v662 = vunpack.c.h.b16 %v502
        %v663 = vunpack.c.l.b16 %v503
        %v664 = vunpack.c.h.b16 %v503
        %v665 = vunpack.c.l.b16 %v504
        %v666 = vunpack.c.h.b16 %v504
        %v667 = vunpack.c.l.b16 %v505
        %v668 = vunpack.c.h.b16 %v505
        %v669 = vunpack.c.l.b16 %v506
        %v670 = vunpack.c.h.b16 %v506
        %v671 = vunpack.c.l.b16 %v507
        %v672 = vunpack.c.h.b16 %v507
        %v673 = vunpack.c.l.b16 %v508
        %v674 = vunpack.c.h.b16 %v508
        %v675 = vunpack.c.l.b16 %v509
        %v676 = vunpack.c.h.b16 %v509
        %v677 = vunpack.c.l.b16 %v510
        %v678 = vunpack.c.h.b16 %v510
        %v679 = vunpack.c.l.b16 %v511
        %v680 = vunpack.c.h.b16 %v511
        %v681 = vunpack.c.l.b16 %v512
        %v682 = vunpack.c.h.b16 %v512
        %v683 = vunpack.c.l.b16 %v513
        %v684 = vunpack.c.h.b16 %v513
        %v685 = vunpack.c.l.b16 %v514
        %v686 = vunpack.c.h.b16 %v514
        %v687 = vunpack.c.l.b16 %v515
        %v688 = vunpack.c.h.b16 %v515
        %v689 = vunpack.c.l.b16 %v516
        %v690 = vunpack.c.h.b16 %v516
        %v691 = vunpack.c.l.b16 %v517
        %v692 = vunpack.c.h.b16 %v517
        %v693 = vunpack.c.l.b16 %v518
        %v694 = vunpack.c.h.b16 %v518
        %v695 = vunpack.c.l.b16 %v519
        %v696 = vunpack.c.h.b16 %v519
        %v697 = vunpack.c.l.b16 %v520
        %v698 = vunpack.c.h.b16 %v520
        %v699 = vunpack.c.l.b16 %v521
        %v700 = vunpack.c.h.b16 %v521
        %v701 = vunpack.c.l.b16 %v522
        %v702 = vunpack.c.h.b16 %v522
        %v703 = vunpack.c.l.b16 %v523
        %v704 = vunpack.c.h.b16 %v523
        %v705 = vunpack.c.l.b16 %v524
        %v706 = vunpack.c.h.b16 %v524
        %v707 = vunpack.c.l.b16 %v525
        %v708 = vunpack.c.h.b16 %v525
        %v709 = vunpack.c.l.b16 %v526
        %v710 = vunpack.c.h.b16 %v526
        %v711 = vunpack.c.l.b16 %v527
        %v712 = vunpack.c.h.b16 %v527
        %v713 = vunpack.c.l.b16 %v528
        %v714 = vunpack.c.h.b16 %v528
        %v715 = vunpack.c.l.b16 %v529
        %v716 = vunpack.c.h.b16 %v529
        %v717 = vunpack.c.l.b16 %v530
        %v718 = vunpack.c.h.b16 %v530
        %v719 = vunpack.c.l.b16 %v531
        %v720 = vunpack.c.h.b16 %v531
        %v721 = vunpack.c.l.b16 %v532
        %v722 = vunpack.c.h.b16 %v532
        %v723 = vunpack.c.l.b16 %v533
        %v724 = vunpack.c.h.b16 %v533
        %v725 = vunpack.c.l.b16 %v534
        %v726 = vunpack.c.h.b16 %v534
        %v727 = vunpack.c.l.b16 %v535
        %v728 = vunpack.c.h.b16 %v535
        %v729 = vunpack.c.l.b16 %v536
        %v730 = vunpack.c.h.b16 %v536
        %v731 = vunpack.c.l.b16 %v537
        %v732 = vunpack.c.h.b16 %v537
        %v733 = vunpack.c.l.b16 %v538
        %v734 = vunpack.c.h.b16 %v538
        %v735 = vunpack.c.l.b16 %v539
        %v736 = vunpack.c.h.b16 %v539
        %v737 = vunpack.c.l.b16 %v540
        %v738 = vunpack.c.h.b16 %v540
        %v739 = vunpack.c.l.b16 %v541
        %v740 = vunpack.c.h.b16 %v541
        %v741 = vunpack.c.l.b16 %v542
        %v742 = vunpack.c.h.b16 %v542
        %v743 = vunpack.c.l.b16 %v543
        %v744 = vunpack.c.h.b16 %v543
        %v745 = vunpack.c.l.b16 %v544
        %v746 = vunpack.c.h.b16 %v544
        %v747 = vpack.c.b16 %v623, %v619
        %v748 = vpack.c.b16 %v624, %v620
        %v749 = vpack.c.b16 %v625, %v621
        %v750 = vpack.c.b16 %v626, %v622
        %v751 = vpack.c.b16 %v631, %v627
        %v752 = vpack.c.b16 %v632, %v628
        %v753 = vpack.c.b16 %v633, %v629
        %v754 = vpack.c.b16 %v634, %v630
        %v755 = vpack.c.b16 %v639, %v635
        %v756 = vpack.c.b16 %v640, %v636
        %v757 = vpack.c.b16 %v641, %v637
        %v758 = vpack.c.b16 %v642, %v638
        %v759 = vpack.c.b16 %v647, %v643
        %v760 = vpack.c.b16 %v648, %v644
        %v761 = vpack.c.b16 %v649, %v645
        %v762 = vpack.c.b16 %v650, %v646
        %v763 = vpack.c.b16 %v655, %v651
        %v764 = vpack.c.b16 %v656, %v652
        %v765 = vpack.c.b16 %v657, %v653
        %v766 = vpack.c.b16 %v658, %v654
        %v767 = vpack.c.b16 %v663, %v659
        %v768 = vpack.c.b16 %v664, %v660
        %v769 = vpack.c.b16 %v665, %v661
        %v770 = vpack.c.b16 %v666, %v662
        %v771 = vpack.c.b16 %v671, %v667
        %v772 = vpack.c.b16 %v672, %v668
        %v773 = vpack.c.b16 %v673, %v669
        %v774 = vpack.c.b16 %v674, %v670
        %v775 = vpack.c.b16 %v679, %v675
        %v776 = vpack.c.b16 %v680, %v676
        %v777 = vpack.c.b16 %v681, %v677
        %v778 = vpack.c.b16 %v682, %v678
        %v779 = vpack.c.b16 %v687, %v683
        %v780 = vpack.c.b16 %v688, %v684
        %v781 = vpack.c.b16 %v689, %v685
        %v782 = vpack.c.b16 %v690, %v686
        %v783 = vpack.c.b16 %v695, %v691
        %v784 = vpack.c.b16 %v696, %v692
        %v785 = vpack.c.b16 %v697, %v693
        %v786 = vpack.c.b16 %v698, %v694
        %v787 = vpack.c.b16 %v703, %v699
        %v788 = vpack.c.b16 %v704, %v700
        %v789 = vpack.c.b16 %v705, %v701
        %v790 = vpack.c.b16 %v706, %v702
        %v791 = vpack.c.b16 %v711, %v707
        %v792 = vpack.c.b16 %v712, %v708
        %v793 = vpack.c.b16 %v713, %v709
        %v794 = vpack.c.b16 %v714, %v710
        %v795 = vpack.c.b16 %v719, %v715
        %v796 = vpack.c.b16 %v720, %v716
        %v797 = vpack.c.b16 %v721, %v717
        %v798 = vpack.c.b16 %v722, %v718
        %v799 = vpack.c.b16 %v727, %v723
        %v800 = vpack.c.b16 %v728, %v724
        %v801 = vpack.c.b16 %v729, %v725
        %v802 = vpack.c.b16 %v730, %v726
        %v803 = vpack.c.b16 %v735, %v731
        %v804 = vpack.c.b16 %v736, %v732
        %v805 = vpack.c.b16 %v737, %v733
        %v806 = vpack.c.b16 %v738, %v734
        %v807 = vpack.c.b16 %v743, %v739
        %v808 = vpack.c.b16 %v744, %v740
        %v809 = vpack.c.b16 %v745, %v741
        %v810 = vpack.c.b16 %v746, %v742
        %875 = vmatpush.bf16.msra.mxu0 %v775
        %876 = vmatpush.bf16.msra.mxu0 %v771
        %877 = vmatpush.bf16.msra.mxu0 %v767
        %878 = vmatpush.bf16.msra.mxu0 %v763
        %879 = vmatpush.bf16.msra.mxu0 %v759
        %880 = vmatpush.bf16.msra.mxu0 %v755
        %881 = vmatpush.bf16.msra.mxu0 %v751
        %882 = vmatpush.bf16.msra.mxu0 %v747
        %883 = vmatmul.bf16.gmra.mxu0 %v479
        %v884 = vpop.f32.mrf.mxu0
        %v885 = vadd.f32 %v547, %v884
        %v886 = vpop.f32.mrf.mxu0
        %887 = vdwg.mxu0
        %888 = vmatpush.bf16.msra.mxu0 %v807
        %889 = vmatpush.bf16.msra.mxu0 %v803
        %890 = vmatpush.bf16.msra.mxu0 %v799
        %891 = vmatpush.bf16.msra.mxu0 %v795
        %892 = vmatpush.bf16.msra.mxu0 %v791
        %893 = vmatpush.bf16.msra.mxu0 %v787
        %894 = vmatpush.bf16.msra.mxu0 %v783
        %895 = vmatpush.bf16.msra.mxu0 %v779
        %896 = vmatmul.bf16.gmra.mxu0 %v480
        %v897 = vpop.f32.mrf.mxu0
        %v898 = vadd.f32 %v885, %v897
        %v899 = vpop.f32.mrf.mxu0
        %900 = vdwg.mxu0
        %901 = vmatpush.bf16.msra.mxu0 %v776
        %902 = vmatpush.bf16.msra.mxu0 %v772
        %903 = vmatpush.bf16.msra.mxu0 %v768
        %904 = vmatpush.bf16.msra.mxu0 %v764
        %905 = vmatpush.bf16.msra.mxu0 %v760
        %906 = vmatpush.bf16.msra.mxu0 %v756
        %907 = vmatpush.bf16.msra.mxu0 %v752
        %908 = vmatpush.bf16.msra.mxu0 %v748
        %909 = vmatmul.bf16.gmra.mxu0 %v479
        %v910 = vpop.f32.mrf.mxu0
        %v911 = vadd.f32 %v548, %v910
        %v912 = vpop.f32.mrf.mxu0
        %913 = vdwg.mxu0
        %914 = vmatpush.bf16.msra.mxu0 %v808
        %915 = vmatpush.bf16.msra.mxu0 %v804
        %916 = vmatpush.bf16.msra.mxu0 %v800
        %917 = vmatpush.bf16.msra.mxu0 %v796
        %918 = vmatpush.bf16.msra.mxu0 %v792
        %919 = vmatpush.bf16.msra.mxu0 %v788
        %920 = vmatpush.bf16.msra.mxu0 %v784
        %921 = vmatpush.bf16.msra.mxu0 %v780
        %922 = vmatmul.bf16.gmra.mxu0 %v480
        %v923 = vpop.f32.mrf.mxu0
        %v924 = vadd.f32 %v911, %v923
        %v925 = vpop.f32.mrf.mxu0
        %926 = vdwg.mxu0
        %927 = vmatpush.bf16.msra.mxu0 %v777
        %928 = vmatpush.bf16.msra.mxu0 %v773
        %929 = vmatpush.bf16.msra.mxu0 %v769
        %930 = vmatpush.bf16.msra.mxu0 %v765
        %931 = vmatpush.bf16.msra.mxu0 %v761
        %932 = vmatpush.bf16.msra.mxu0 %v757
        %933 = vmatpush.bf16.msra.mxu0 %v753
        %934 = vmatpush.bf16.msra.mxu0 %v749
        %935 = vmatmul.bf16.gmra.mxu0 %v479
        %v936 = vpop.f32.mrf.mxu0
        %v937 = vadd.f32 %v549, %v936
        %v938 = vpop.f32.mrf.mxu0
        %939 = vdwg.mxu0
        %940 = vmatpush.bf16.msra.mxu0 %v809
        %941 = vmatpush.bf16.msra.mxu0 %v805
        %942 = vmatpush.bf16.msra.mxu0 %v801
        %943 = vmatpush.bf16.msra.mxu0 %v797
        %944 = vmatpush.bf16.msra.mxu0 %v793
        %945 = vmatpush.bf16.msra.mxu0 %v789
        %946 = vmatpush.bf16.msra.mxu0 %v785
        %947 = vmatpush.bf16.msra.mxu0 %v781
        %948 = vmatmul.bf16.gmra.mxu0 %v480
        %v949 = vpop.f32.mrf.mxu0
        %v950 = vadd.f32 %v937, %v949
        %v951 = vpop.f32.mrf.mxu0
        %952 = vdwg.mxu0
        %953 = vmatpush.bf16.msra.mxu0 %v778
        %954 = vmatpush.bf16.msra.mxu0 %v774
        %955 = vmatpush.bf16.msra.mxu0 %v770
        %956 = vmatpush.bf16.msra.mxu0 %v766
        %957 = vmatpush.bf16.msra.mxu0 %v762
        %958 = vmatpush.bf16.msra.mxu0 %v758
        %959 = vmatpush.bf16.msra.mxu0 %v754
        %960 = vmatpush.bf16.msra.mxu0 %v750
        %961 = vmatmul.bf16.gmra.mxu0 %v479
        %v962 = vpop.f32.mrf.mxu0
        %v963 = vadd.f32 %v550, %v962
        %v964 = vpop.f32.mrf.mxu0
        %965 = vdwg.mxu0
        %966 = vmatpush.bf16.msra.mxu0 %v810
        %967 = vmatpush.bf16.msra.mxu0 %v806
        %968 = vmatpush.bf16.msra.mxu0 %v802
        %969 = vmatpush.bf16.msra.mxu0 %v798
        %970 = vmatpush.bf16.msra.mxu0 %v794
        %971 = vmatpush.bf16.msra.mxu0 %v790
        %972 = vmatpush.bf16.msra.mxu0 %v786
        %973 = vmatpush.bf16.msra.mxu0 %v782
        %974 = vmatmul.bf16.gmra.mxu0 %v480
        %v975 = vpop.f32.mrf.mxu0
        %v976 = vadd.f32 %v963, %v975
        %v977 = vpop.f32.mrf.mxu0
        %978 = vdwg.mxu0
        %v979 = vxor.u32 %v898, 2147483648
        %v980 = vmul.f32 %v979, 1.442695
        %v981 = vpow.pop %v980
        %v982 = vadd.f32 %v981, 1.0
        %v983 = vrcp.pop %v982
        %v984 = vmul.f32 %v982, %v983
        %v985 = vsub.f32 1.0, %v984
        %v986 = vmul.f32 %v983, %v985
        %v987 = vadd.f32 %v983, %v986
        %vm988 = vweird.f32 %v982
        %vm989 = vweird.f32 %v983
        %vm990 = vmor %vm988, %vm989
        %v991 = vsel %vm990, %v983, %v987
        %v992 = vand.u32 2147483647, %v982
        %vm993 = vcmp.eq.f32.partialorder %v992, 8.507059e+37
        %v994 = vand.u32 %v982, 2147483648
        %v995 = vor.u32 1.1754944e-38, %v994
        %v996 = vsel %vm993, %v995, %v991
        %v997 = vmul.f32 1.0, %v996
        %v998 = vxor.u32 %v924, 2147483648
        %v999 = vmul.f32 %v998, 1.442695
        %v1000 = vpow.pop %v999
        %v1001 = vadd.f32 %v1000, 1.0
        %v1002 = vrcp.pop %v1001
        %v1003 = vmul.f32 %v1001, %v1002
        %v1004 = vsub.f32 1.0, %v1003
        %v1005 = vmul.f32 %v1002, %v1004
        %v1006 = vadd.f32 %v1002, %v1005
        %vm1007 = vweird.f32 %v1001
        %vm1008 = vweird.f32 %v1002
        %vm1009 = vmor %vm1007, %vm1008
        %v1010 = vsel %vm1009, %v1002, %v1006
        %v1011 = vand.u32 2147483647, %v1001
        %vm1012 = vcmp.eq.f32.partialorder %v1011, 8.507059e+37
        %v1013 = vand.u32 %v1001, 2147483648
        %v1014 = vor.u32 1.1754944e-38, %v1013
        %v1015 = vsel %vm1012, %v1014, %v1010
        %v1016 = vmul.f32 1.0, %v1015
        %v1017 = vmul.f32 %v997, %v976
        %v1018 = vadd.f32 %v950, %v1017
        %v1019 = vtanh.pop %v1018
        %v1020 = vsub.f32 1.0, %v1016
        %v1021 = vmul.f32 %v1020, %v1019
        %v1022 = vmul.f32 %v1016, %v478
        %v1023 = vadd.f32 %v1021, %v1022
        %1024 = vst [vmem:[#allocation2] sm:$0xff] %v1023
        %s1025 = scalar_lea.vmem %s374, 8
        %v1026 = vld [vmem:[%s1025] sm:$0xff]
        %1027 = vset.pattern.permute.xlu0 0
        %1028 = vperm.xlu0 %1027, %v1026
        %v1029 = vpop.permute.xlu0 %1028
        %vm1030 = vcmp.eq.s32.totalorder %v392, %v1029
        %v1031 = vsel %vm1030, 1, 0
        %v1032 = vcvt.s32.f32 %v1031
        %v1033 = vpack.c.bf16 %v1032, %v1032
        %v1034 = vld [vmem:[%s1] sm:$0xf]
        %v1035 = vld [vmem:[%s1 + $0x4] sm:$0xf]
        %v1036 = vld [vmem:[%s1 + $0x8] sm:$0xf]
        %v1037 = vld [vmem:[%s1 + $0xc] sm:$0xf]
        %v1038 = vld [vmem:[%s1 + $0x10] sm:$0xf]
        %v1039 = vld [vmem:[%s1 + $0x14] sm:$0xf]
        %v1040 = vld [vmem:[%s1 + $0x18] sm:$0xf]
        %v1041 = vld [vmem:[%s1 + $0x1c] sm:$0xf]
        %v1042 = vld [vmem:[%s1 + $0x20] sm:$0xf]
        %v1043 = vld [vmem:[%s1 + $0x24] sm:$0xf]
        %v1044 = vld [vmem:[%s1 + $0x28] sm:$0xf]
        %v1045 = vld [vmem:[%s1 + $0x2c] sm:$0xf]
        %v1046 = vld [vmem:[%s1 + $0x30] sm:$0xf]
        %v1047 = vld [vmem:[%s1 + $0x34] sm:$0xf]
        %v1048 = vld [vmem:[%s1 + $0x38] sm:$0xf]
        %v1049 = vld [vmem:[%s1 + $0x3c] sm:$0xf]
        %v1066 = vunpack.c.l.b16 %v1034
        %v1067 = vunpack.c.l.b16 %v1035
        %v1068 = vunpack.c.l.b16 %v1036
        %v1069 = vunpack.c.l.b16 %v1037
        %v1070 = vunpack.c.l.b16 %v1038
        %v1071 = vunpack.c.l.b16 %v1039
        %v1072 = vunpack.c.l.b16 %v1040
        %v1073 = vunpack.c.l.b16 %v1041
        %v1074 = vunpack.c.l.b16 %v1042
        %v1075 = vunpack.c.l.b16 %v1043
        %v1076 = vunpack.c.l.b16 %v1044
        %v1077 = vunpack.c.l.b16 %v1045
        %v1078 = vunpack.c.l.b16 %v1046
        %v1079 = vunpack.c.l.b16 %v1047
        %v1080 = vunpack.c.l.b16 %v1048
        %v1081 = vunpack.c.l.b16 %v1049
        %v1082 = vpack.c.b16 %v1067, %v1066
        %v1083 = vpack.c.b16 %v1069, %v1068
        %v1084 = vpack.c.b16 %v1071, %v1070
        %v1085 = vpack.c.b16 %v1073, %v1072
        %v1086 = vpack.c.b16 %v1075, %v1074
        %v1087 = vpack.c.b16 %v1077, %v1076
        %v1088 = vpack.c.b16 %v1079, %v1078
        %v1089 = vpack.c.b16 %v1081, %v1080
        %1098 = vmatpush.bf16.msra.mxu0 %v1089
        %1099 = vmatpush.bf16.msra.mxu0 %v1088
        %1100 = vmatpush.bf16.msra.mxu0 %v1087
        %1101 = vmatpush.bf16.msra.mxu0 %v1086
        %1102 = vmatpush.bf16.msra.mxu0 %v1085
        %1103 = vmatpush.bf16.msra.mxu0 %v1084
        %1104 = vmatpush.bf16.msra.mxu0 %v1083
        %1105 = vmatpush.bf16.msra.mxu0 %v1082
        %1106 = vmatmul.bf16.gmra.mxu0 %v1033
        %v1107 = vpop.f32.mrf.mxu0
        %v1108 = vadd.f32 0.0, %v1107
        %v1109 = vpop.f32.mrf.mxu0
        %1110 = vdwg.mxu0
        %v1111 = vld [vmem:[#allocation2] sm:$0xff]
        %v1112 = vpack.c.bf16 %v1108, %v1108
        %v1113 = vpack.c.bf16 %v1111, %v1111
        %v1114 = vld [vmem:[%s2] sm:$0xff]
        %v1115 = vld [vmem:[%s2 + $0x8] sm:$0xff]
        %v1116 = vld [vmem:[%s2 + $0x10] sm:$0xff]
        %v1117 = vld [vmem:[%s2 + $0x18] sm:$0xff]
        %v1118 = vld [vmem:[%s2 + $0x20] sm:$0xff]
        %v1119 = vld [vmem:[%s2 + $0x28] sm:$0xff]
        %v1120 = vld [vmem:[%s2 + $0x30] sm:$0xff]
        %v1121 = vld [vmem:[%s2 + $0x38] sm:$0xff]
        %v1122 = vld [vmem:[%s2 + $0x40] sm:$0xff]
        %v1123 = vld [vmem:[%s2 + $0x48] sm:$0xff]
        %v1124 = vld [vmem:[%s2 + $0x50] sm:$0xff]
        %v1125 = vld [vmem:[%s2 + $0x58] sm:$0xff]
        %v1126 = vld [vmem:[%s2 + $0x60] sm:$0xff]
        %v1127 = vld [vmem:[%s2 + $0x68] sm:$0xff]
        %v1128 = vld [vmem:[%s2 + $0x70] sm:$0xff]
        %v1129 = vld [vmem:[%s2 + $0x78] sm:$0xff]
        %v1130 = vld [vmem:[%s2 + $0x80] sm:$0xff]
        %v1131 = vld [vmem:[%s2 + $0x88] sm:$0xff]
        %v1132 = vld [vmem:[%s2 + $0x90] sm:$0xff]
        %v1133 = vld [vmem:[%s2 + $0x98] sm:$0xff]
        %v1134 = vld [vmem:[%s2 + $0xa0] sm:$0xff]
        %v1135 = vld [vmem:[%s2 + $0xa8] sm:$0xff]
        %v1136 = vld [vmem:[%s2 + $0xb0] sm:$0xff]
        %v1137 = vld [vmem:[%s2 + $0xb8] sm:$0xff]
        %v1138 = vld [vmem:[%s2 + $0xc0] sm:$0xff]
        %v1139 = vld [vmem:[%s2 + $0xc8] sm:$0xff]
        %v1140 = vld [vmem:[%s2 + $0xd0] sm:$0xff]
        %v1141 = vld [vmem:[%s2 + $0xd8] sm:$0xff]
        %v1142 = vld [vmem:[%s2 + $0xe0] sm:$0xff]
        %v1143 = vld [vmem:[%s2 + $0xe8] sm:$0xff]
        %v1144 = vld [vmem:[%s2 + $0xf0] sm:$0xff]
        %v1145 = vld [vmem:[%s2 + $0xf8] sm:$0xff]
        %v1146 = vld [vmem:[%s2 + $0x100] sm:$0xff]
        %v1147 = vld [vmem:[%s2 + $0x108] sm:$0xff]
        %v1148 = vld [vmem:[%s2 + $0x110] sm:$0xff]
        %v1149 = vld [vmem:[%s2 + $0x118] sm:$0xff]
        %v1150 = vld [vmem:[%s2 + $0x120] sm:$0xff]
        %v1151 = vld [vmem:[%s2 + $0x128] sm:$0xff]
        %v1152 = vld [vmem:[%s2 + $0x130] sm:$0xff]
        %v1153 = vld [vmem:[%s2 + $0x138] sm:$0xff]
        %v1154 = vld [vmem:[%s2 + $0x140] sm:$0xff]
        %v1155 = vld [vmem:[%s2 + $0x148] sm:$0xff]
        %v1156 = vld [vmem:[%s2 + $0x150] sm:$0xff]
        %v1157 = vld [vmem:[%s2 + $0x158] sm:$0xff]
        %v1158 = vld [vmem:[%s2 + $0x160] sm:$0xff]
        %v1159 = vld [vmem:[%s2 + $0x168] sm:$0xff]
        %v1160 = vld [vmem:[%s2 + $0x170] sm:$0xff]
        %v1161 = vld [vmem:[%s2 + $0x178] sm:$0xff]
        %v1162 = vld [vmem:[%s2 + $0x180] sm:$0xff]
        %v1163 = vld [vmem:[%s2 + $0x188] sm:$0xff]
        %v1164 = vld [vmem:[%s2 + $0x190] sm:$0xff]
        %v1165 = vld [vmem:[%s2 + $0x198] sm:$0xff]
        %v1166 = vld [vmem:[%s2 + $0x1a0] sm:$0xff]
        %v1167 = vld [vmem:[%s2 + $0x1a8] sm:$0xff]
        %v1168 = vld [vmem:[%s2 + $0x1b0] sm:$0xff]
        %v1169 = vld [vmem:[%s2 + $0x1b8] sm:$0xff]
        %v1170 = vld [vmem:[%s2 + $0x1c0] sm:$0xff]
        %v1171 = vld [vmem:[%s2 + $0x1c8] sm:$0xff]
        %v1172 = vld [vmem:[%s2 + $0x1d0] sm:$0xff]
        %v1173 = vld [vmem:[%s2 + $0x1d8] sm:$0xff]
        %v1174 = vld [vmem:[%s2 + $0x1e0] sm:$0xff]
        %v1175 = vld [vmem:[%s2 + $0x1e8] sm:$0xff]
        %v1176 = vld [vmem:[%s2 + $0x1f0] sm:$0xff]
        %v1177 = vld [vmem:[%s2 + $0x1f8] sm:$0xff]
        %v1178 = vld [vmem:[%s3] sm:$0xf]
        %v1180 = vperm.slane %v1178, 0
        %v1181 = vperm.slane %v1178, 1
        %v1182 = vperm.slane %v1178, 2
        %v1183 = vperm.slane %v1178, 3
        %v1252 = vunpack.c.l.b16 %v1114
        %v1253 = vunpack.c.h.b16 %v1114
        %v1254 = vunpack.c.l.b16 %v1115
        %v1255 = vunpack.c.h.b16 %v1115
        %v1256 = vunpack.c.l.b16 %v1116
        %v1257 = vunpack.c.h.b16 %v1116
        %v1258 = vunpack.c.l.b16 %v1117
        %v1259 = vunpack.c.h.b16 %v1117
        %v1260 = vunpack.c.l.b16 %v1118
        %v1261 = vunpack.c.h.b16 %v1118
        %v1262 = vunpack.c.l.b16 %v1119
        %v1263 = vunpack.c.h.b16 %v1119
        %v1264 = vunpack.c.l.b16 %v1120
        %v1265 = vunpack.c.h.b16 %v1120
        %v1266 = vunpack.c.l.b16 %v1121
        %v1267 = vunpack.c.h.b16 %v1121
        %v1268 = vunpack.c.l.b16 %v1122
        %v1269 = vunpack.c.h.b16 %v1122
        %v1270 = vunpack.c.l.b16 %v1123
        %v1271 = vunpack.c.h.b16 %v1123
        %v1272 = vunpack.c.l.b16 %v1124
        %v1273 = vunpack.c.h.b16 %v1124
        %v1274 = vunpack.c.l.b16 %v1125
        %v1275 = vunpack.c.h.b16 %v1125
        %v1276 = vunpack.c.l.b16 %v1126
        %v1277 = vunpack.c.h.b16 %v1126
        %v1278 = vunpack.c.l.b16 %v1127
        %v1279 = vunpack.c.h.b16 %v1127
        %v1280 = vunpack.c.l.b16 %v1128
        %v1281 = vunpack.c.h.b16 %v1128
        %v1282 = vunpack.c.l.b16 %v1129
        %v1283 = vunpack.c.h.b16 %v1129
        %v1284 = vunpack.c.l.b16 %v1130
        %v1285 = vunpack.c.h.b16 %v1130
        %v1286 = vunpack.c.l.b16 %v1131
        %v1287 = vunpack.c.h.b16 %v1131
        %v1288 = vunpack.c.l.b16 %v1132
        %v1289 = vunpack.c.h.b16 %v1132
        %v1290 = vunpack.c.l.b16 %v1133
        %v1291 = vunpack.c.h.b16 %v1133
        %v1292 = vunpack.c.l.b16 %v1134
        %v1293 = vunpack.c.h.b16 %v1134
        %v1294 = vunpack.c.l.b16 %v1135
        %v1295 = vunpack.c.h.b16 %v1135
        %v1296 = vunpack.c.l.b16 %v1136
        %v1297 = vunpack.c.h.b16 %v1136
        %v1298 = vunpack.c.l.b16 %v1137
        %v1299 = vunpack.c.h.b16 %v1137
        %v1300 = vunpack.c.l.b16 %v1138
        %v1301 = vunpack.c.h.b16 %v1138
        %v1302 = vunpack.c.l.b16 %v1139
        %v1303 = vunpack.c.h.b16 %v1139
        %v1304 = vunpack.c.l.b16 %v1140
        %v1305 = vunpack.c.h.b16 %v1140
        %v1306 = vunpack.c.l.b16 %v1141
        %v1307 = vunpack.c.h.b16 %v1141
        %v1308 = vunpack.c.l.b16 %v1142
        %v1309 = vunpack.c.h.b16 %v1142
        %v1310 = vunpack.c.l.b16 %v1143
        %v1311 = vunpack.c.h.b16 %v1143
        %v1312 = vunpack.c.l.b16 %v1144
        %v1313 = vunpack.c.h.b16 %v1144
        %v1314 = vunpack.c.l.b16 %v1145
        %v1315 = vunpack.c.h.b16 %v1145
        %v1316 = vunpack.c.l.b16 %v1146
        %v1317 = vunpack.c.h.b16 %v1146
        %v1318 = vunpack.c.l.b16 %v1147
        %v1319 = vunpack.c.h.b16 %v1147
        %v1320 = vunpack.c.l.b16 %v1148
        %v1321 = vunpack.c.h.b16 %v1148
        %v1322 = vunpack.c.l.b16 %v1149
        %v1323 = vunpack.c.h.b16 %v1149
        %v1324 = vunpack.c.l.b16 %v1150
        %v1325 = vunpack.c.h.b16 %v1150
        %v1326 = vunpack.c.l.b16 %v1151
        %v1327 = vunpack.c.h.b16 %v1151
        %v1328 = vunpack.c.l.b16 %v1152
        %v1329 = vunpack.c.h.b16 %v1152
        %v1330 = vunpack.c.l.b16 %v1153
        %v1331 = vunpack.c.h.b16 %v1153
        %v1332 = vunpack.c.l.b16 %v1154
        %v1333 = vunpack.c.h.b16 %v1154
        %v1334 = vunpack.c.l.b16 %v1155
        %v1335 = vunpack.c.h.b16 %v1155
        %v1336 = vunpack.c.l.b16 %v1156
        %v1337 = vunpack.c.h.b16 %v1156
        %v1338 = vunpack.c.l.b16 %v1157
        %v1339 = vunpack.c.h.b16 %v1157
        %v1340 = vunpack.c.l.b16 %v1158
        %v1341 = vunpack.c.h.b16 %v1158
        %v1342 = vunpack.c.l.b16 %v1159
        %v1343 = vunpack.c.h.b16 %v1159
        %v1344 = vunpack.c.l.b16 %v1160
        %v1345 = vunpack.c.h.b16 %v1160
        %v1346 = vunpack.c.l.b16 %v1161
        %v1347 = vunpack.c.h.b16 %v1161
        %v1348 = vunpack.c.l.b16 %v1162
        %v1349 = vunpack.c.h.b16 %v1162
        %v1350 = vunpack.c.l.b16 %v1163
        %v1351 = vunpack.c.h.b16 %v1163
        %v1352 = vunpack.c.l.b16 %v1164
        %v1353 = vunpack.c.h.b16 %v1164
        %v1354 = vunpack.c.l.b16 %v1165
        %v1355 = vunpack.c.h.b16 %v1165
        %v1356 = vunpack.c.l.b16 %v1166
        %v1357 = vunpack.c.h.b16 %v1166
        %v1358 = vunpack.c.l.b16 %v1167
        %v1359 = vunpack.c.h.b16 %v1167
        %v1360 = vunpack.c.l.b16 %v1168
        %v1361 = vunpack.c.h.b16 %v1168
        %v1362 = vunpack.c.l.b16 %v1169
        %v1363 = vunpack.c.h.b16 %v1169
        %v1364 = vunpack.c.l.b16 %v1170
        %v1365 = vunpack.c.h.b16 %v1170
        %v1366 = vunpack.c.l.b16 %v1171
        %v1367 = vunpack.c.h.b16 %v1171
        %v1368 = vunpack.c.l.b16 %v1172
        %v1369 = vunpack.c.h.b16 %v1172
        %v1370 = vunpack.c.l.b16 %v1173
        %v1371 = vunpack.c.h.b16 %v1173
        %v1372 = vunpack.c.l.b16 %v1174
        %v1373 = vunpack.c.h.b16 %v1174
        %v1374 = vunpack.c.l.b16 %v1175
        %v1375 = vunpack.c.h.b16 %v1175
        %v1376 = vunpack.c.l.b16 %v1176
        %v1377 = vunpack.c.h.b16 %v1176
        %v1378 = vunpack.c.l.b16 %v1177
        %v1379 = vunpack.c.h.b16 %v1177
        %v1380 = vpack.c.b16 %v1256, %v1252
        %v1381 = vpack.c.b16 %v1257, %v1253
        %v1382 = vpack.c.b16 %v1258, %v1254
        %v1383 = vpack.c.b16 %v1259, %v1255
        %v1384 = vpack.c.b16 %v1264, %v1260
        %v1385 = vpack.c.b16 %v1265, %v1261
        %v1386 = vpack.c.b16 %v1266, %v1262
        %v1387 = vpack.c.b16 %v1267, %v1263
        %v1388 = vpack.c.b16 %v1272, %v1268
        %v1389 = vpack.c.b16 %v1273, %v1269
        %v1390 = vpack.c.b16 %v1274, %v1270
        %v1391 = vpack.c.b16 %v1275, %v1271
        %v1392 = vpack.c.b16 %v1280, %v1276
        %v1393 = vpack.c.b16 %v1281, %v1277
        %v1394 = vpack.c.b16 %v1282, %v1278
        %v1395 = vpack.c.b16 %v1283, %v1279
        %v1396 = vpack.c.b16 %v1288, %v1284
        %v1397 = vpack.c.b16 %v1289, %v1285
        %v1398 = vpack.c.b16 %v1290, %v1286
        %v1399 = vpack.c.b16 %v1291, %v1287
        %v1400 = vpack.c.b16 %v1296, %v1292
        %v1401 = vpack.c.b16 %v1297, %v1293
        %v1402 = vpack.c.b16 %v1298, %v1294
        %v1403 = vpack.c.b16 %v1299, %v1295
        %v1404 = vpack.c.b16 %v1304, %v1300
        %v1405 = vpack.c.b16 %v1305, %v1301
        %v1406 = vpack.c.b16 %v1306, %v1302
        %v1407 = vpack.c.b16 %v1307, %v1303
        %v1408 = vpack.c.b16 %v1312, %v1308
        %v1409 = vpack.c.b16 %v1313, %v1309
        %v1410 = vpack.c.b16 %v1314, %v1310
        %v1411 = vpack.c.b16 %v1315, %v1311
        %v1412 = vpack.c.b16 %v1320, %v1316
        %v1413 = vpack.c.b16 %v1321, %v1317
        %v1414 = vpack.c.b16 %v1322, %v1318
        %v1415 = vpack.c.b16 %v1323, %v1319
        %v1416 = vpack.c.b16 %v1328, %v1324
        %v1417 = vpack.c.b16 %v1329, %v1325
        %v1418 = vpack.c.b16 %v1330, %v1326
        %v1419 = vpack.c.b16 %v1331, %v1327
        %v1420 = vpack.c.b16 %v1336, %v1332
        %v1421 = vpack.c.b16 %v1337, %v1333
        %v1422 = vpack.c.b16 %v1338, %v1334
        %v1423 = vpack.c.b16 %v1339, %v1335
        %v1424 = vpack.c.b16 %v1344, %v1340
        %v1425 = vpack.c.b16 %v1345, %v1341
        %v1426 = vpack.c.b16 %v1346, %v1342
        %v1427 = vpack.c.b16 %v1347, %v1343
        %v1428 = vpack.c.b16 %v1352, %v1348
        %v1429 = vpack.c.b16 %v1353, %v1349
        %v1430 = vpack.c.b16 %v1354, %v1350
        %v1431 = vpack.c.b16 %v1355, %v1351
        %v1432 = vpack.c.b16 %v1360, %v1356
        %v1433 = vpack.c.b16 %v1361, %v1357
        %v1434 = vpack.c.b16 %v1362, %v1358
        %v1435 = vpack.c.b16 %v1363, %v1359
        %v1436 = vpack.c.b16 %v1368, %v1364
        %v1437 = vpack.c.b16 %v1369, %v1365
        %v1438 = vpack.c.b16 %v1370, %v1366
        %v1439 = vpack.c.b16 %v1371, %v1367
        %v1440 = vpack.c.b16 %v1376, %v1372
        %v1441 = vpack.c.b16 %v1377, %v1373
        %v1442 = vpack.c.b16 %v1378, %v1374
        %v1443 = vpack.c.b16 %v1379, %v1375
        %1508 = vmatpush.bf16.msra.mxu0 %v1408
        %1509 = vmatpush.bf16.msra.mxu0 %v1404
        %1510 = vmatpush.bf16.msra.mxu0 %v1400
        %1511 = vmatpush.bf16.msra.mxu0 %v1396
        %1512 = vmatpush.bf16.msra.mxu0 %v1392
        %1513 = vmatpush.bf16.msra.mxu0 %v1388
        %1514 = vmatpush.bf16.msra.mxu0 %v1384
        %1515 = vmatpush.bf16.msra.mxu0 %v1380
        %1516 = vmatmul.bf16.gmra.mxu0 %v1112
        %v1517 = vpop.f32.mrf.mxu0
        %v1518 = vadd.f32 %v1180, %v1517
        %v1519 = vpop.f32.mrf.mxu0
        %1520 = vdwg.mxu0
        %1521 = vmatpush.bf16.msra.mxu0 %v1440
        %1522 = vmatpush.bf16.msra.mxu0 %v1436
        %1523 = vmatpush.bf16.msra.mxu0 %v1432
        %1524 = vmatpush.bf16.msra.mxu0 %v1428
        %1525 = vmatpush.bf16.msra.mxu0 %v1424
        %1526 = vmatpush.bf16.msra.mxu0 %v1420
        %1527 = vmatpush.bf16.msra.mxu0 %v1416
        %1528 = vmatpush.bf16.msra.mxu0 %v1412
        %1529 = vmatmul.bf16.gmra.mxu0 %v1113
        %v1530 = vpop.f32.mrf.mxu0
        %v1531 = vadd.f32 %v1518, %v1530
        %v1532 = vpop.f32.mrf.mxu0
        %1533 = vdwg.mxu0
        %1534 = vmatpush.bf16.msra.mxu0 %v1409
        %1535 = vmatpush.bf16.msra.mxu0 %v1405
        %1536 = vmatpush.bf16.msra.mxu0 %v1401
        %1537 = vmatpush.bf16.msra.mxu0 %v1397
        %1538 = vmatpush.bf16.msra.mxu0 %v1393
        %1539 = vmatpush.bf16.msra.mxu0 %v1389
        %1540 = vmatpush.bf16.msra.mxu0 %v1385
        %1541 = vmatpush.bf16.msra.mxu0 %v1381
        %1542 = vmatmul.bf16.gmra.mxu0 %v1112
        %v1543 = vpop.f32.mrf.mxu0
        %v1544 = vadd.f32 %v1181, %v1543
        %v1545 = vpop.f32.mrf.mxu0
        %1546 = vdwg.mxu0
        %1547 = vmatpush.bf16.msra.mxu0 %v1441
        %1548 = vmatpush.bf16.msra.mxu0 %v1437
        %1549 = vmatpush.bf16.msra.mxu0 %v1433
        %1550 = vmatpush.bf16.msra.mxu0 %v1429
        %1551 = vmatpush.bf16.msra.mxu0 %v1425
        %1552 = vmatpush.bf16.msra.mxu0 %v1421
        %1553 = vmatpush.bf16.msra.mxu0 %v1417
        %1554 = vmatpush.bf16.msra.mxu0 %v1413
        %1555 = vmatmul.bf16.gmra.mxu0 %v1113
        %v1556 = vpop.f32.mrf.mxu0
        %v1557 = vadd.f32 %v1544, %v1556
        %v1558 = vpop.f32.mrf.mxu0
        %1559 = vdwg.mxu0
        %1560 = vmatpush.bf16.msra.mxu0 %v1410
        %1561 = vmatpush.bf16.msra.mxu0 %v1406
        %1562 = vmatpush.bf16.msra.mxu0 %v1402
        %1563 = vmatpush.bf16.msra.mxu0 %v1398
        %1564 = vmatpush.bf16.msra.mxu0 %v1394
        %1565 = vmatpush.bf16.msra.mxu0 %v1390
        %1566 = vmatpush.bf16.msra.mxu0 %v1386
        %1567 = vmatpush.bf16.msra.mxu0 %v1382
        %1568 = vmatmul.bf16.gmra.mxu0 %v1112
        %v1569 = vpop.f32.mrf.mxu0
        %v1570 = vadd.f32 %v1182, %v1569
        %v1571 = vpop.f32.mrf.mxu0
        %1572 = vdwg.mxu0
        %1573 = vmatpush.bf16.msra.mxu0 %v1442
        %1574 = vmatpush.bf16.msra.mxu0 %v1438
        %1575 = vmatpush.bf16.msra.mxu0 %v1434
        %1576 = vmatpush.bf16.msra.mxu0 %v1430
        %1577 = vmatpush.bf16.msra.mxu0 %v1426
        %1578 = vmatpush.bf16.msra.mxu0 %v1422
        %1579 = vmatpush.bf16.msra.mxu0 %v1418
        %1580 = vmatpush.bf16.msra.mxu0 %v1414
        %1581 = vmatmul.bf16.gmra.mxu0 %v1113
        %v1582 = vpop.f32.mrf.mxu0
        %v1583 = vadd.f32 %v1570, %v1582
        %v1584 = vpop.f32.mrf.mxu0
        %1585 = vdwg.mxu0
        %1586 = vmatpush.bf16.msra.mxu0 %v1411
        %1587 = vmatpush.bf16.msra.mxu0 %v1407
        %1588 = vmatpush.bf16.msra.mxu0 %v1403
        %1589 = vmatpush.bf16.msra.mxu0 %v1399
        %1590 = vmatpush.bf16.msra.mxu0 %v1395
        %1591 = vmatpush.bf16.msra.mxu0 %v1391
        %1592 = vmatpush.bf16.msra.mxu0 %v1387
        %1593 = vmatpush.bf16.msra.mxu0 %v1383
        %1594 = vmatmul.bf16.gmra.mxu0 %v1112
        %v1595 = vpop.f32.mrf.mxu0
        %v1596 = vadd.f32 %v1183, %v1595
        %v1597 = vpop.f32.mrf.mxu0
        %1598 = vdwg.mxu0
        %1599 = vmatpush.bf16.msra.mxu0 %v1443
        %1600 = vmatpush.bf16.msra.mxu0 %v1439
        %1601 = vmatpush.bf16.msra.mxu0 %v1435
        %1602 = vmatpush.bf16.msra.mxu0 %v1431
        %1603 = vmatpush.bf16.msra.mxu0 %v1427
        %1604 = vmatpush.bf16.msra.mxu0 %v1423
        %1605 = vmatpush.bf16.msra.mxu0 %v1419
        %1606 = vmatpush.bf16.msra.mxu0 %v1415
        %1607 = vmatmul.bf16.gmra.mxu0 %v1113
        %v1608 = vpop.f32.mrf.mxu0
        %v1609 = vadd.f32 %v1596, %v1608
        %v1610 = vpop.f32.mrf.mxu0
        %1611 = vdwg.mxu0
        %v1612 = vxor.u32 %v1531, 2147483648
        %v1613 = vmul.f32 %v1612, 1.442695
        %v1614 = vpow.pop %v1613
        %v1615 = vadd.f32 %v1614, 1.0
        %v1616 = vrcp.pop %v1615
        %v1617 = vmul.f32 %v1615, %v1616
        %v1618 = vsub.f32 1.0, %v1617
        %v1619 = vmul.f32 %v1616, %v1618
        %v1620 = vadd.f32 %v1616, %v1619
        %vm1621 = vweird.f32 %v1615
        %vm1622 = vweird.f32 %v1616
        %vm1623 = vmor %vm1621, %vm1622
        %v1624 = vsel %vm1623, %v1616, %v1620
        %v1625 = vand.u32 2147483647, %v1615
        %vm1626 = vcmp.eq.f32.partialorder %v1625, 8.507059e+37
        %v1627 = vand.u32 %v1615, 2147483648
        %v1628 = vor.u32 1.1754944e-38, %v1627
        %v1629 = vsel %vm1626, %v1628, %v1624
        %v1630 = vmul.f32 1.0, %v1629
        %v1631 = vxor.u32 %v1557, 2147483648
        %v1632 = vmul.f32 %v1631, 1.442695
        %v1633 = vpow.pop %v1632
        %v1634 = vadd.f32 %v1633, 1.0
        %v1635 = vrcp.pop %v1634
        %v1636 = vmul.f32 %v1634, %v1635
        %v1637 = vsub.f32 1.0, %v1636
        %v1638 = vmul.f32 %v1635, %v1637
        %v1639 = vadd.f32 %v1635, %v1638
        %vm1640 = vweird.f32 %v1634
        %vm1641 = vweird.f32 %v1635
        %vm1642 = vmor %vm1640, %vm1641
        %v1643 = vsel %vm1642, %v1635, %v1639
        %v1644 = vand.u32 2147483647, %v1634
        %vm1645 = vcmp.eq.f32.partialorder %v1644, 8.507059e+37
        %v1646 = vand.u32 %v1634, 2147483648
        %v1647 = vor.u32 1.1754944e-38, %v1646
        %v1648 = vsel %vm1645, %v1647, %v1643
        %v1649 = vmul.f32 1.0, %v1648
        %v1650 = vmul.f32 %v1630, %v1609
        %v1651 = vadd.f32 %v1583, %v1650
        %v1652 = vtanh.pop %v1651
        %v1653 = vsub.f32 1.0, %v1649
        %v1654 = vmul.f32 %v1653, %v1652
        %v1655 = vmul.f32 %v1649, %v1111
        %v1656 = vadd.f32 %v1654, %v1655
        %1657 = vst [vmem:[#allocation2] sm:$0xff] %v1656
        %s1658 = scalar_lea.vmem %s374, 16
        %v1659 = vld [vmem:[%s1658] sm:$0xff]
        %1660 = vset.pattern.permute.xlu0 0
        %1661 = vperm.xlu0 %1660, %v1659
        %v1662 = vpop.permute.xlu0 %1661
        %vm1663 = vcmp.eq.s32.totalorder %v392, %v1662
        %v1664 = vsel %vm1663, 1, 0
        %v1665 = vcvt.s32.f32 %v1664
        %v1666 = vpack.c.bf16 %v1665, %v1665
        %v1667 = vld [vmem:[%s1] sm:$0xf]
        %v1668 = vld [vmem:[%s1 + $0x4] sm:$0xf]
        %v1669 = vld [vmem:[%s1 + $0x8] sm:$0xf]
        %v1670 = vld [vmem:[%s1 + $0xc] sm:$0xf]
        %v1671 = vld [vmem:[%s1 + $0x10] sm:$0xf]
        %v1672 = vld [vmem:[%s1 + $0x14] sm:$0xf]
        %v1673 = vld [vmem:[%s1 + $0x18] sm:$0xf]
        %v1674 = vld [vmem:[%s1 + $0x1c] sm:$0xf]
        %v1675 = vld [vmem:[%s1 + $0x20] sm:$0xf]
        %v1676 = vld [vmem:[%s1 + $0x24] sm:$0xf]
        %v1677 = vld [vmem:[%s1 + $0x28] sm:$0xf]
        %v1678 = vld [vmem:[%s1 + $0x2c] sm:$0xf]
        %v1679 = vld [vmem:[%s1 + $0x30] sm:$0xf]
        %v1680 = vld [vmem:[%s1 + $0x34] sm:$0xf]
        %v1681 = vld [vmem:[%s1 + $0x38] sm:$0xf]
        %v1682 = vld [vmem:[%s1 + $0x3c] sm:$0xf]
        %v1699 = vunpack.c.l.b16 %v1667
        %v1700 = vunpack.c.l.b16 %v1668
        %v1701 = vunpack.c.l.b16 %v1669
        %v1702 = vunpack.c.l.b16 %v1670
        %v1703 = vunpack.c.l.b16 %v1671
        %v1704 = vunpack.c.l.b16 %v1672
        %v1705 = vunpack.c.l.b16 %v1673
        %v1706 = vunpack.c.l.b16 %v1674
        %v1707 = vunpack.c.l.b16 %v1675
        %v1708 = vunpack.c.l.b16 %v1676
        %v1709 = vunpack.c.l.b16 %v1677
        %v1710 = vunpack.c.l.b16 %v1678
        %v1711 = vunpack.c.l.b16 %v1679
        %v1712 = vunpack.c.l.b16 %v1680
        %v1713 = vunpack.c.l.b16 %v1681
        %v1714 = vunpack.c.l.b16 %v1682
        %v1715 = vpack.c.b16 %v1700, %v1699
        %v1716 = vpack.c.b16 %v1702, %v1701
        %v1717 = vpack.c.b16 %v1704, %v1703
        %v1718 = vpack.c.b16 %v1706, %v1705
        %v1719 = vpack.c.b16 %v1708, %v1707
        %v1720 = vpack.c.b16 %v1710, %v1709
        %v1721 = vpack.c.b16 %v1712, %v1711
        %v1722 = vpack.c.b16 %v1714, %v1713
        %1731 = vmatpush.bf16.msra.mxu0 %v1722
        %1732 = vmatpush.bf16.msra.mxu0 %v1721
        %1733 = vmatpush.bf16.msra.mxu0 %v1720
        %1734 = vmatpush.bf16.msra.mxu0 %v1719
        %1735 = vmatpush.bf16.msra.mxu0 %v1718
        %1736 = vmatpush.bf16.msra.mxu0 %v1717
        %1737 = vmatpush.bf16.msra.mxu0 %v1716
        %1738 = vmatpush.bf16.msra.mxu0 %v1715
        %1739 = vmatmul.bf16.gmra.mxu0 %v1666
        %v1740 = vpop.f32.mrf.mxu0
        %v1741 = vadd.f32 0.0, %v1740
        %v1742 = vpop.f32.mrf.mxu0
        %1743 = vdwg.mxu0
        %v1744 = vld [vmem:[#allocation2] sm:$0xff]
        %v1745 = vpack.c.bf16 %v1741, %v1741
        %v1746 = vpack.c.bf16 %v1744, %v1744
        %v1747 = vld [vmem:[%s2] sm:$0xff]
        %v1748 = vld [vmem:[%s2 + $0x8] sm:$0xff]
        %v1749 = vld [vmem:[%s2 + $0x10] sm:$0xff]
        %v1750 = vld [vmem:[%s2 + $0x18] sm:$0xff]
        %v1751 = vld [vmem:[%s2 + $0x20] sm:$0xff]
        %v1752 = vld [vmem:[%s2 + $0x28] sm:$0xff]
        %v1753 = vld [vmem:[%s2 + $0x30] sm:$0xff]
        %v1754 = vld [vmem:[%s2 + $0x38] sm:$0xff]
        %v1755 = vld [vmem:[%s2 + $0x40] sm:$0xff]
        %v1756 = vld [vmem:[%s2 + $0x48] sm:$0xff]
        %v1757 = vld [vmem:[%s2 + $0x50] sm:$0xff]
        %v1758 = vld [vmem:[%s2 + $0x58] sm:$0xff]
        %v1759 = vld [vmem:[%s2 + $0x60] sm:$0xff]
        %v1760 = vld [vmem:[%s2 + $0x68] sm:$0xff]
        %v1761 = vld [vmem:[%s2 + $0x70] sm:$0xff]
        %v1762 = vld [vmem:[%s2 + $0x78] sm:$0xff]
        %v1763 = vld [vmem:[%s2 + $0x80] sm:$0xff]
        %v1764 = vld [vmem:[%s2 + $0x88] sm:$0xff]
        %v1765 = vld [vmem:[%s2 + $0x90] sm:$0xff]
        %v1766 = vld [vmem:[%s2 + $0x98] sm:$0xff]
        %v1767 = vld [vmem:[%s2 + $0xa0] sm:$0xff]
        %v1768 = vld [vmem:[%s2 + $0xa8] sm:$0xff]
        %v1769 = vld [vmem:[%s2 + $0xb0] sm:$0xff]
        %v1770 = vld [vmem:[%s2 + $0xb8] sm:$0xff]
        %v1771 = vld [vmem:[%s2 + $0xc0] sm:$0xff]
        %v1772 = vld [vmem:[%s2 + $0xc8] sm:$0xff]
        %v1773 = vld [vmem:[%s2 + $0xd0] sm:$0xff]
        %v1774 = vld [vmem:[%s2 + $0xd8] sm:$0xff]
        %v1775 = vld [vmem:[%s2 + $0xe0] sm:$0xff]
        %v1776 = vld [vmem:[%s2 + $0xe8] sm:$0xff]
        %v1777 = vld [vmem:[%s2 + $0xf0] sm:$0xff]
        %v1778 = vld [vmem:[%s2 + $0xf8] sm:$0xff]
        %v1779 = vld [vmem:[%s2 + $0x100] sm:$0xff]
        %v1780 = vld [vmem:[%s2 + $0x108] sm:$0xff]
        %v1781 = vld [vmem:[%s2 + $0x110] sm:$0xff]
        %v1782 = vld [vmem:[%s2 + $0x118] sm:$0xff]
        %v1783 = vld [vmem:[%s2 + $0x120] sm:$0xff]
        %v1784 = vld [vmem:[%s2 + $0x128] sm:$0xff]
        %v1785 = vld [vmem:[%s2 + $0x130] sm:$0xff]
        %v1786 = vld [vmem:[%s2 + $0x138] sm:$0xff]
        %v1787 = vld [vmem:[%s2 + $0x140] sm:$0xff]
        %v1788 = vld [vmem:[%s2 + $0x148] sm:$0xff]
        %v1789 = vld [vmem:[%s2 + $0x150] sm:$0xff]
        %v1790 = vld [vmem:[%s2 + $0x158] sm:$0xff]
        %v1791 = vld [vmem:[%s2 + $0x160] sm:$0xff]
        %v1792 = vld [vmem:[%s2 + $0x168] sm:$0xff]
        %v1793 = vld [vmem:[%s2 + $0x170] sm:$0xff]
        %v1794 = vld [vmem:[%s2 + $0x178] sm:$0xff]
        %v1795 = vld [vmem:[%s2 + $0x180] sm:$0xff]
        %v1796 = vld [vmem:[%s2 + $0x188] sm:$0xff]
        %v1797 = vld [vmem:[%s2 + $0x190] sm:$0xff]
        %v1798 = vld [vmem:[%s2 + $0x198] sm:$0xff]
        %v1799 = vld [vmem:[%s2 + $0x1a0] sm:$0xff]
        %v1800 = vld [vmem:[%s2 + $0x1a8] sm:$0xff]
        %v1801 = vld [vmem:[%s2 + $0x1b0] sm:$0xff]
        %v1802 = vld [vmem:[%s2 + $0x1b8] sm:$0xff]
        %v1803 = vld [vmem:[%s2 + $0x1c0] sm:$0xff]
        %v1804 = vld [vmem:[%s2 + $0x1c8] sm:$0xff]
        %v1805 = vld [vmem:[%s2 + $0x1d0] sm:$0xff]
        %v1806 = vld [vmem:[%s2 + $0x1d8] sm:$0xff]
        %v1807 = vld [vmem:[%s2 + $0x1e0] sm:$0xff]
        %v1808 = vld [vmem:[%s2 + $0x1e8] sm:$0xff]
        %v1809 = vld [vmem:[%s2 + $0x1f0] sm:$0xff]
        %v1810 = vld [vmem:[%s2 + $0x1f8] sm:$0xff]
        %v1811 = vld [vmem:[%s3] sm:$0xf]
        %v1813 = vperm.slane %v1811, 0
        %v1814 = vperm.slane %v1811, 1
        %v1815 = vperm.slane %v1811, 2
        %v1816 = vperm.slane %v1811, 3
        %v1885 = vunpack.c.l.b16 %v1747
        %v1886 = vunpack.c.h.b16 %v1747
        %v1887 = vunpack.c.l.b16 %v1748
        %v1888 = vunpack.c.h.b16 %v1748
        %v1889 = vunpack.c.l.b16 %v1749
        %v1890 = vunpack.c.h.b16 %v1749
        %v1891 = vunpack.c.l.b16 %v1750
        %v1892 = vunpack.c.h.b16 %v1750
        %v1893 = vunpack.c.l.b16 %v1751
        %v1894 = vunpack.c.h.b16 %v1751
        %v1895 = vunpack.c.l.b16 %v1752
        %v1896 = vunpack.c.h.b16 %v1752
        %v1897 = vunpack.c.l.b16 %v1753
        %v1898 = vunpack.c.h.b16 %v1753
        %v1899 = vunpack.c.l.b16 %v1754
        %v1900 = vunpack.c.h.b16 %v1754
        %v1901 = vunpack.c.l.b16 %v1755
        %v1902 = vunpack.c.h.b16 %v1755
        %v1903 = vunpack.c.l.b16 %v1756
        %v1904 = vunpack.c.h.b16 %v1756
        %v1905 = vunpack.c.l.b16 %v1757
        %v1906 = vunpack.c.h.b16 %v1757
        %v1907 = vunpack.c.l.b16 %v1758
        %v1908 = vunpack.c.h.b16 %v1758
        %v1909 = vunpack.c.l.b16 %v1759
        %v1910 = vunpack.c.h.b16 %v1759
        %v1911 = vunpack.c.l.b16 %v1760
        %v1912 = vunpack.c.h.b16 %v1760
        %v1913 = vunpack.c.l.b16 %v1761
        %v1914 = vunpack.c.h.b16 %v1761
        %v1915 = vunpack.c.l.b16 %v1762
        %v1916 = vunpack.c.h.b16 %v1762
        %v1917 = vunpack.c.l.b16 %v1763
        %v1918 = vunpack.c.h.b16 %v1763
        %v1919 = vunpack.c.l.b16 %v1764
        %v1920 = vunpack.c.h.b16 %v1764
        %v1921 = vunpack.c.l.b16 %v1765
        %v1922 = vunpack.c.h.b16 %v1765
        %v1923 = vunpack.c.l.b16 %v1766
        %v1924 = vunpack.c.h.b16 %v1766
        %v1925 = vunpack.c.l.b16 %v1767
        %v1926 = vunpack.c.h.b16 %v1767
        %v1927 = vunpack.c.l.b16 %v1768
        %v1928 = vunpack.c.h.b16 %v1768
        %v1929 = vunpack.c.l.b16 %v1769
        %v1930 = vunpack.c.h.b16 %v1769
        %v1931 = vunpack.c.l.b16 %v1770
        %v1932 = vunpack.c.h.b16 %v1770
        %v1933 = vunpack.c.l.b16 %v1771
        %v1934 = vunpack.c.h.b16 %v1771
        %v1935 = vunpack.c.l.b16 %v1772
        %v1936 = vunpack.c.h.b16 %v1772
        %v1937 = vunpack.c.l.b16 %v1773
        %v1938 = vunpack.c.h.b16 %v1773
        %v1939 = vunpack.c.l.b16 %v1774
        %v1940 = vunpack.c.h.b16 %v1774
        %v1941 = vunpack.c.l.b16 %v1775
        %v1942 = vunpack.c.h.b16 %v1775
        %v1943 = vunpack.c.l.b16 %v1776
        %v1944 = vunpack.c.h.b16 %v1776
        %v1945 = vunpack.c.l.b16 %v1777
        %v1946 = vunpack.c.h.b16 %v1777
        %v1947 = vunpack.c.l.b16 %v1778
        %v1948 = vunpack.c.h.b16 %v1778
        %v1949 = vunpack.c.l.b16 %v1779
        %v1950 = vunpack.c.h.b16 %v1779
        %v1951 = vunpack.c.l.b16 %v1780
        %v1952 = vunpack.c.h.b16 %v1780
        %v1953 = vunpack.c.l.b16 %v1781
        %v1954 = vunpack.c.h.b16 %v1781
        %v1955 = vunpack.c.l.b16 %v1782
        %v1956 = vunpack.c.h.b16 %v1782
        %v1957 = vunpack.c.l.b16 %v1783
        %v1958 = vunpack.c.h.b16 %v1783
        %v1959 = vunpack.c.l.b16 %v1784
        %v1960 = vunpack.c.h.b16 %v1784
        %v1961 = vunpack.c.l.b16 %v1785
        %v1962 = vunpack.c.h.b16 %v1785
        %v1963 = vunpack.c.l.b16 %v1786
        %v1964 = vunpack.c.h.b16 %v1786
        %v1965 = vunpack.c.l.b16 %v1787
        %v1966 = vunpack.c.h.b16 %v1787
        %v1967 = vunpack.c.l.b16 %v1788
        %v1968 = vunpack.c.h.b16 %v1788
        %v1969 = vunpack.c.l.b16 %v1789
        %v1970 = vunpack.c.h.b16 %v1789
        %v1971 = vunpack.c.l.b16 %v1790
        %v1972 = vunpack.c.h.b16 %v1790
        %v1973 = vunpack.c.l.b16 %v1791
        %v1974 = vunpack.c.h.b16 %v1791
        %v1975 = vunpack.c.l.b16 %v1792
        %v1976 = vunpack.c.h.b16 %v1792
        %v1977 = vunpack.c.l.b16 %v1793
        %v1978 = vunpack.c.h.b16 %v1793
        %v1979 = vunpack.c.l.b16 %v1794
        %v1980 = vunpack.c.h.b16 %v1794
        %v1981 = vunpack.c.l.b16 %v1795
        %v1982 = vunpack.c.h.b16 %v1795
        %v1983 = vunpack.c.l.b16 %v1796
        %v1984 = vunpack.c.h.b16 %v1796
        %v1985 = vunpack.c.l.b16 %v1797
        %v1986 = vunpack.c.h.b16 %v1797
        %v1987 = vunpack.c.l.b16 %v1798
        %v1988 = vunpack.c.h.b16 %v1798
        %v1989 = vunpack.c.l.b16 %v1799
        %v1990 = vunpack.c.h.b16 %v1799
        %v1991 = vunpack.c.l.b16 %v1800
        %v1992 = vunpack.c.h.b16 %v1800
        %v1993 = vunpack.c.l.b16 %v1801
        %v1994 = vunpack.c.h.b16 %v1801
        %v1995 = vunpack.c.l.b16 %v1802
        %v1996 = vunpack.c.h.b16 %v1802
        %v1997 = vunpack.c.l.b16 %v1803
        %v1998 = vunpack.c.h.b16 %v1803
        %v1999 = vunpack.c.l.b16 %v1804
        %v2000 = vunpack.c.h.b16 %v1804
        %v2001 = vunpack.c.l.b16 %v1805
        %v2002 = vunpack.c.h.b16 %v1805
        %v2003 = vunpack.c.l.b16 %v1806
        %v2004 = vunpack.c.h.b16 %v1806
        %v2005 = vunpack.c.l.b16 %v1807
        %v2006 = vunpack.c.h.b16 %v1807
        %v2007 = vunpack.c.l.b16 %v1808
        %v2008 = vunpack.c.h.b16 %v1808
        %v2009 = vunpack.c.l.b16 %v1809
        %v2010 = vunpack.c.h.b16 %v1809
        %v2011 = vunpack.c.l.b16 %v1810
        %v2012 = vunpack.c.h.b16 %v1810
        %v2013 = vpack.c.b16 %v1889, %v1885
        %v2014 = vpack.c.b16 %v1890, %v1886
        %v2015 = vpack.c.b16 %v1891, %v1887
        %v2016 = vpack.c.b16 %v1892, %v1888
        %v2017 = vpack.c.b16 %v1897, %v1893
        %v2018 = vpack.c.b16 %v1898, %v1894
        %v2019 = vpack.c.b16 %v1899, %v1895
        %v2020 = vpack.c.b16 %v1900, %v1896
        %v2021 = vpack.c.b16 %v1905, %v1901
        %v2022 = vpack.c.b16 %v1906, %v1902
        %v2023 = vpack.c.b16 %v1907, %v1903
        %v2024 = vpack.c.b16 %v1908, %v1904
        %v2025 = vpack.c.b16 %v1913, %v1909
        %v2026 = vpack.c.b16 %v1914, %v1910
        %v2027 = vpack.c.b16 %v1915, %v1911
        %v2028 = vpack.c.b16 %v1916, %v1912
        %v2029 = vpack.c.b16 %v1921, %v1917
        %v2030 = vpack.c.b16 %v1922, %v1918
        %v2031 = vpack.c.b16 %v1923, %v1919
        %v2032 = vpack.c.b16 %v1924, %v1920
        %v2033 = vpack.c.b16 %v1929, %v1925
        %v2034 = vpack.c.b16 %v1930, %v1926
        %v2035 = vpack.c.b16 %v1931, %v1927
        %v2036 = vpack.c.b16 %v1932, %v1928
        %v2037 = vpack.c.b16 %v1937, %v1933
        %v2038 = vpack.c.b16 %v1938, %v1934
        %v2039 = vpack.c.b16 %v1939, %v1935
        %v2040 = vpack.c.b16 %v1940, %v1936
        %v2041 = vpack.c.b16 %v1945, %v1941
        %v2042 = vpack.c.b16 %v1946, %v1942
        %v2043 = vpack.c.b16 %v1947, %v1943
        %v2044 = vpack.c.b16 %v1948, %v1944
        %v2045 = vpack.c.b16 %v1953, %v1949
        %v2046 = vpack.c.b16 %v1954, %v1950
        %v2047 = vpack.c.b16 %v1955, %v1951
        %v2048 = vpack.c.b16 %v1956, %v1952
        %v2049 = vpack.c.b16 %v1961, %v1957
        %v2050 = vpack.c.b16 %v1962, %v1958
        %v2051 = vpack.c.b16 %v1963, %v1959
        %v2052 = vpack.c.b16 %v1964, %v1960
        %v2053 = vpack.c.b16 %v1969, %v1965
        %v2054 = vpack.c.b16 %v1970, %v1966
        %v2055 = vpack.c.b16 %v1971, %v1967
        %v2056 = vpack.c.b16 %v1972, %v1968
        %v2057 = vpack.c.b16 %v1977, %v1973
        %v2058 = vpack.c.b16 %v1978, %v1974
        %v2059 = vpack.c.b16 %v1979, %v1975
        %v2060 = vpack.c.b16 %v1980, %v1976
        %v2061 = vpack.c.b16 %v1985, %v1981
        %v2062 = vpack.c.b16 %v1986, %v1982
        %v2063 = vpack.c.b16 %v1987, %v1983
        %v2064 = vpack.c.b16 %v1988, %v1984
        %v2065 = vpack.c.b16 %v1993, %v1989
        %v2066 = vpack.c.b16 %v1994, %v1990
        %v2067 = vpack.c.b16 %v1995, %v1991
        %v2068 = vpack.c.b16 %v1996, %v1992
        %v2069 = vpack.c.b16 %v2001, %v1997
        %v2070 = vpack.c.b16 %v2002, %v1998
        %v2071 = vpack.c.b16 %v2003, %v1999
        %v2072 = vpack.c.b16 %v2004, %v2000
        %v2073 = vpack.c.b16 %v2009, %v2005
        %v2074 = vpack.c.b16 %v2010, %v2006
        %v2075 = vpack.c.b16 %v2011, %v2007
        %v2076 = vpack.c.b16 %v2012, %v2008
        %2141 = vmatpush.bf16.msra.mxu0 %v2041
        %2142 = vmatpush.bf16.msra.mxu0 %v2037
        %2143 = vmatpush.bf16.msra.mxu0 %v2033
        %2144 = vmatpush.bf16.msra.mxu0 %v2029
        %2145 = vmatpush.bf16.msra.mxu0 %v2025
        %2146 = vmatpush.bf16.msra.mxu0 %v2021
        %2147 = vmatpush.bf16.msra.mxu0 %v2017
        %2148 = vmatpush.bf16.msra.mxu0 %v2013
        %2149 = vmatmul.bf16.gmra.mxu0 %v1745
        %v2150 = vpop.f32.mrf.mxu0
        %v2151 = vadd.f32 %v1813, %v2150
        %v2152 = vpop.f32.mrf.mxu0
        %2153 = vdwg.mxu0
        %2154 = vmatpush.bf16.msra.mxu0 %v2073
        %2155 = vmatpush.bf16.msra.mxu0 %v2069
        %2156 = vmatpush.bf16.msra.mxu0 %v2065
        %2157 = vmatpush.bf16.msra.mxu0 %v2061
        %2158 = vmatpush.bf16.msra.mxu0 %v2057
        %2159 = vmatpush.bf16.msra.mxu0 %v2053
        %2160 = vmatpush.bf16.msra.mxu0 %v2049
        %2161 = vmatpush.bf16.msra.mxu0 %v2045
        %2162 = vmatmul.bf16.gmra.mxu0 %v1746
        %v2163 = vpop.f32.mrf.mxu0
        %v2164 = vadd.f32 %v2151, %v2163
        %v2165 = vpop.f32.mrf.mxu0
        %2166 = vdwg.mxu0
        %2167 = vmatpush.bf16.msra.mxu0 %v2042
        %2168 = vmatpush.bf16.msra.mxu0 %v2038
        %2169 = vmatpush.bf16.msra.mxu0 %v2034
        %2170 = vmatpush.bf16.msra.mxu0 %v2030
        %2171 = vmatpush.bf16.msra.mxu0 %v2026
        %2172 = vmatpush.bf16.msra.mxu0 %v2022
        %2173 = vmatpush.bf16.msra.mxu0 %v2018
        %2174 = vmatpush.bf16.msra.mxu0 %v2014
        %2175 = vmatmul.bf16.gmra.mxu0 %v1745
        %v2176 = vpop.f32.mrf.mxu0
        %v2177 = vadd.f32 %v1814, %v2176
        %v2178 = vpop.f32.mrf.mxu0
        %2179 = vdwg.mxu0
        %2180 = vmatpush.bf16.msra.mxu0 %v2074
        %2181 = vmatpush.bf16.msra.mxu0 %v2070
        %2182 = vmatpush.bf16.msra.mxu0 %v2066
        %2183 = vmatpush.bf16.msra.mxu0 %v2062
        %2184 = vmatpush.bf16.msra.mxu0 %v2058
        %2185 = vmatpush.bf16.msra.mxu0 %v2054
        %2186 = vmatpush.bf16.msra.mxu0 %v2050
        %2187 = vmatpush.bf16.msra.mxu0 %v2046
        %2188 = vmatmul.bf16.gmra.mxu0 %v1746
        %v2189 = vpop.f32.mrf.mxu0
        %v2190 = vadd.f32 %v2177, %v2189
        %v2191 = vpop.f32.mrf.mxu0
        %2192 = vdwg.mxu0
        %2193 = vmatpush.bf16.msra.mxu0 %v2043
        %2194 = vmatpush.bf16.msra.mxu0 %v2039
        %2195 = vmatpush.bf16.msra.mxu0 %v2035
        %2196 = vmatpush.bf16.msra.mxu0 %v2031
        %2197 = vmatpush.bf16.msra.mxu0 %v2027
        %2198 = vmatpush.bf16.msra.mxu0 %v2023
        %2199 = vmatpush.bf16.msra.mxu0 %v2019
        %2200 = vmatpush.bf16.msra.mxu0 %v2015
        %2201 = vmatmul.bf16.gmra.mxu0 %v1745
        %v2202 = vpop.f32.mrf.mxu0
        %v2203 = vadd.f32 %v1815, %v2202
        %v2204 = vpop.f32.mrf.mxu0
        %2205 = vdwg.mxu0
        %2206 = vmatpush.bf16.msra.mxu0 %v2075
        %2207 = vmatpush.bf16.msra.mxu0 %v2071
        %2208 = vmatpush.bf16.msra.mxu0 %v2067
        %2209 = vmatpush.bf16.msra.mxu0 %v2063
        %2210 = vmatpush.bf16.msra.mxu0 %v2059
        %2211 = vmatpush.bf16.msra.mxu0 %v2055
        %2212 = vmatpush.bf16.msra.mxu0 %v2051
        %2213 = vmatpush.bf16.msra.mxu0 %v2047
        %2214 = vmatmul.bf16.gmra.mxu0 %v1746
        %v2215 = vpop.f32.mrf.mxu0
        %v2216 = vadd.f32 %v2203, %v2215
        %v2217 = vpop.f32.mrf.mxu0
        %2218 = vdwg.mxu0
        %2219 = vmatpush.bf16.msra.mxu0 %v2044
        %2220 = vmatpush.bf16.msra.mxu0 %v2040
        %2221 = vmatpush.bf16.msra.mxu0 %v2036
        %2222 = vmatpush.bf16.msra.mxu0 %v2032
        %2223 = vmatpush.bf16.msra.mxu0 %v2028
        %2224 = vmatpush.bf16.msra.mxu0 %v2024
        %2225 = vmatpush.bf16.msra.mxu0 %v2020
        %2226 = vmatpush.bf16.msra.mxu0 %v2016
        %2227 = vmatmul.bf16.gmra.mxu0 %v1745
        %v2228 = vpop.f32.mrf.mxu0
        %v2229 = vadd.f32 %v1816, %v2228
        %v2230 = vpop.f32.mrf.mxu0
        %2231 = vdwg.mxu0
        %2232 = vmatpush.bf16.msra.mxu0 %v2076
        %2233 = vmatpush.bf16.msra.mxu0 %v2072
        %2234 = vmatpush.bf16.msra.mxu0 %v2068
        %2235 = vmatpush.bf16.msra.mxu0 %v2064
        %2236 = vmatpush.bf16.msra.mxu0 %v2060
        %2237 = vmatpush.bf16.msra.mxu0 %v2056
        %2238 = vmatpush.bf16.msra.mxu0 %v2052
        %2239 = vmatpush.bf16.msra.mxu0 %v2048
        %2240 = vmatmul.bf16.gmra.mxu0 %v1746
        %v2241 = vpop.f32.mrf.mxu0
        %v2242 = vadd.f32 %v2229, %v2241
        %v2243 = vpop.f32.mrf.mxu0
        %2244 = vdwg.mxu0
        %v2245 = vxor.u32 %v2164, 2147483648
        %v2246 = vmul.f32 %v2245, 1.442695
        %v2247 = vpow.pop %v2246
        %v2248 = vadd.f32 %v2247, 1.0
        %v2249 = vrcp.pop %v2248
        %v2250 = vmul.f32 %v2248, %v2249
        %v2251 = vsub.f32 1.0, %v2250
        %v2252 = vmul.f32 %v2249, %v2251
        %v2253 = vadd.f32 %v2249, %v2252
        %vm2254 = vweird.f32 %v2248
        %vm2255 = vweird.f32 %v2249
        %vm2256 = vmor %vm2254, %vm2255
        %v2257 = vsel %vm2256, %v2249, %v2253
        %v2258 = vand.u32 2147483647, %v2248
        %vm2259 = vcmp.eq.f32.partialorder %v2258, 8.507059e+37
        %v2260 = vand.u32 %v2248, 2147483648
        %v2261 = vor.u32 1.1754944e-38, %v2260
        %v2262 = vsel %vm2259, %v2261, %v2257
        %v2263 = vmul.f32 1.0, %v2262
        %v2264 = vxor.u32 %v2190, 2147483648
        %v2265 = vmul.f32 %v2264, 1.442695
        %v2266 = vpow.pop %v2265
        %v2267 = vadd.f32 %v2266, 1.0
        %v2268 = vrcp.pop %v2267
        %v2269 = vmul.f32 %v2267, %v2268
        %v2270 = vsub.f32 1.0, %v2269
        %v2271 = vmul.f32 %v2268, %v2270
        %v2272 = vadd.f32 %v2268, %v2271
        %vm2273 = vweird.f32 %v2267
        %vm2274 = vweird.f32 %v2268
        %vm2275 = vmor %vm2273, %vm2274
        %v2276 = vsel %vm2275, %v2268, %v2272
        %v2277 = vand.u32 2147483647, %v2267
        %vm2278 = vcmp.eq.f32.partialorder %v2277, 8.507059e+37
        %v2279 = vand.u32 %v2267, 2147483648
        %v2280 = vor.u32 1.1754944e-38, %v2279
        %v2281 = vsel %vm2278, %v2280, %v2276
        %v2282 = vmul.f32 1.0, %v2281
        %v2283 = vmul.f32 %v2263, %v2242
        %v2284 = vadd.f32 %v2216, %v2283
        %v2285 = vtanh.pop %v2284
        %v2286 = vsub.f32 1.0, %v2282
        %v2287 = vmul.f32 %v2286, %v2285
        %v2288 = vmul.f32 %v2282, %v1744
        %v2289 = vadd.f32 %v2287, %v2288
        %2290 = vst [vmem:[#allocation2] sm:$0xff] %v2289
        %s2291 = scalar_lea.vmem %s374, 24
        %v2292 = vld [vmem:[%s2291] sm:$0xff]
        %2293 = vset.pattern.permute.xlu0 0
        %2294 = vperm.xlu0 %2293, %v2292
        %v2295 = vpop.permute.xlu0 %2294
        %vm2296 = vcmp.eq.s32.totalorder %v392, %v2295
        %v2297 = vsel %vm2296, 1, 0
        %v2298 = vcvt.s32.f32 %v2297
        %v2299 = vpack.c.bf16 %v2298, %v2298
        %v2300 = vld [vmem:[%s1] sm:$0xf]
        %v2301 = vld [vmem:[%s1 + $0x4] sm:$0xf]
        %v2302 = vld [vmem:[%s1 + $0x8] sm:$0xf]
        %v2303 = vld [vmem:[%s1 + $0xc] sm:$0xf]
        %v2304 = vld [vmem:[%s1 + $0x10] sm:$0xf]
        %v2305 = vld [vmem:[%s1 + $0x14] sm:$0xf]
        %v2306 = vld [vmem:[%s1 + $0x18] sm:$0xf]
        %v2307 = vld [vmem:[%s1 + $0x1c] sm:$0xf]
        %v2308 = vld [vmem:[%s1 + $0x20] sm:$0xf]
        %v2309 = vld [vmem:[%s1 + $0x24] sm:$0xf]
        %v2310 = vld [vmem:[%s1 + $0x28] sm:$0xf]
        %v2311 = vld [vmem:[%s1 + $0x2c] sm:$0xf]
        %v2312 = vld [vmem:[%s1 + $0x30] sm:$0xf]
        %v2313 = vld [vmem:[%s1 + $0x34] sm:$0xf]
        %v2314 = vld [vmem:[%s1 + $0x38] sm:$0xf]
        %v2315 = vld [vmem:[%s1 + $0x3c] sm:$0xf]
        %v2332 = vunpack.c.l.b16 %v2300
        %v2333 = vunpack.c.l.b16 %v2301
        %v2334 = vunpack.c.l.b16 %v2302
        %v2335 = vunpack.c.l.b16 %v2303
        %v2336 = vunpack.c.l.b16 %v2304
        %v2337 = vunpack.c.l.b16 %v2305
        %v2338 = vunpack.c.l.b16 %v2306
        %v2339 = vunpack.c.l.b16 %v2307
        %v2340 = vunpack.c.l.b16 %v2308
        %v2341 = vunpack.c.l.b16 %v2309
        %v2342 = vunpack.c.l.b16 %v2310
        %v2343 = vunpack.c.l.b16 %v2311
        %v2344 = vunpack.c.l.b16 %v2312
        %v2345 = vunpack.c.l.b16 %v2313
        %v2346 = vunpack.c.l.b16 %v2314
        %v2347 = vunpack.c.l.b16 %v2315
        %v2348 = vpack.c.b16 %v2333, %v2332
        %v2349 = vpack.c.b16 %v2335, %v2334
        %v2350 = vpack.c.b16 %v2337, %v2336
        %v2351 = vpack.c.b16 %v2339, %v2338
        %v2352 = vpack.c.b16 %v2341, %v2340
        %v2353 = vpack.c.b16 %v2343, %v2342
        %v2354 = vpack.c.b16 %v2345, %v2344
        %v2355 = vpack.c.b16 %v2347, %v2346
        %2364 = vmatpush.bf16.msra.mxu0 %v2355
        %2365 = vmatpush.bf16.msra.mxu0 %v2354
        %2366 = vmatpush.bf16.msra.mxu0 %v2353
        %2367 = vmatpush.bf16.msra.mxu0 %v2352
        %2368 = vmatpush.bf16.msra.mxu0 %v2351
        %2369 = vmatpush.bf16.msra.mxu0 %v2350
        %2370 = vmatpush.bf16.msra.mxu0 %v2349
        %2371 = vmatpush.bf16.msra.mxu0 %v2348
        %2372 = vmatmul.bf16.gmra.mxu0 %v2299
        %v2373 = vpop.f32.mrf.mxu0
        %v2374 = vadd.f32 0.0, %v2373
        %v2375 = vpop.f32.mrf.mxu0
        %2376 = vdwg.mxu0
        %v2377 = vld [vmem:[#allocation2] sm:$0xff]
        %v2378 = vpack.c.bf16 %v2374, %v2374
        %v2379 = vpack.c.bf16 %v2377, %v2377
        %v2380 = vld [vmem:[%s2] sm:$0xff]
        %v2381 = vld [vmem:[%s2 + $0x8] sm:$0xff]
        %v2382 = vld [vmem:[%s2 + $0x10] sm:$0xff]
        %v2383 = vld [vmem:[%s2 + $0x18] sm:$0xff]
        %v2384 = vld [vmem:[%s2 + $0x20] sm:$0xff]
        %v2385 = vld [vmem:[%s2 + $0x28] sm:$0xff]
        %v2386 = vld [vmem:[%s2 + $0x30] sm:$0xff]
        %v2387 = vld [vmem:[%s2 + $0x38] sm:$0xff]
        %v2388 = vld [vmem:[%s2 + $0x40] sm:$0xff]
        %v2389 = vld [vmem:[%s2 + $0x48] sm:$0xff]
        %v2390 = vld [vmem:[%s2 + $0x50] sm:$0xff]
        %v2391 = vld [vmem:[%s2 + $0x58] sm:$0xff]
        %v2392 = vld [vmem:[%s2 + $0x60] sm:$0xff]
        %v2393 = vld [vmem:[%s2 + $0x68] sm:$0xff]
        %v2394 = vld [vmem:[%s2 + $0x70] sm:$0xff]
        %v2395 = vld [vmem:[%s2 + $0x78] sm:$0xff]
        %v2396 = vld [vmem:[%s2 + $0x80] sm:$0xff]
        %v2397 = vld [vmem:[%s2 + $0x88] sm:$0xff]
        %v2398 = vld [vmem:[%s2 + $0x90] sm:$0xff]
        %v2399 = vld [vmem:[%s2 + $0x98] sm:$0xff]
        %v2400 = vld [vmem:[%s2 + $0xa0] sm:$0xff]
        %v2401 = vld [vmem:[%s2 + $0xa8] sm:$0xff]
        %v2402 = vld [vmem:[%s2 + $0xb0] sm:$0xff]
        %v2403 = vld [vmem:[%s2 + $0xb8] sm:$0xff]
        %v2404 = vld [vmem:[%s2 + $0xc0] sm:$0xff]
        %v2405 = vld [vmem:[%s2 + $0xc8] sm:$0xff]
        %v2406 = vld [vmem:[%s2 + $0xd0] sm:$0xff]
        %v2407 = vld [vmem:[%s2 + $0xd8] sm:$0xff]
        %v2408 = vld [vmem:[%s2 + $0xe0] sm:$0xff]
        %v2409 = vld [vmem:[%s2 + $0xe8] sm:$0xff]
        %v2410 = vld [vmem:[%s2 + $0xf0] sm:$0xff]
        %v2411 = vld [vmem:[%s2 + $0xf8] sm:$0xff]
        %v2412 = vld [vmem:[%s2 + $0x100] sm:$0xff]
        %v2413 = vld [vmem:[%s2 + $0x108] sm:$0xff]
        %v2414 = vld [vmem:[%s2 + $0x110] sm:$0xff]
        %v2415 = vld [vmem:[%s2 + $0x118] sm:$0xff]
        %v2416 = vld [vmem:[%s2 + $0x120] sm:$0xff]
        %v2417 = vld [vmem:[%s2 + $0x128] sm:$0xff]
        %v2418 = vld [vmem:[%s2 + $0x130] sm:$0xff]
        %v2419 = vld [vmem:[%s2 + $0x138] sm:$0xff]
        %v2420 = vld [vmem:[%s2 + $0x140] sm:$0xff]
        %v2421 = vld [vmem:[%s2 + $0x148] sm:$0xff]
        %v2422 = vld [vmem:[%s2 + $0x150] sm:$0xff]
        %v2423 = vld [vmem:[%s2 + $0x158] sm:$0xff]
        %v2424 = vld [vmem:[%s2 + $0x160] sm:$0xff]
        %v2425 = vld [vmem:[%s2 + $0x168] sm:$0xff]
        %v2426 = vld [vmem:[%s2 + $0x170] sm:$0xff]
        %v2427 = vld [vmem:[%s2 + $0x178] sm:$0xff]
        %v2428 = vld [vmem:[%s2 + $0x180] sm:$0xff]
        %v2429 = vld [vmem:[%s2 + $0x188] sm:$0xff]
        %v2430 = vld [vmem:[%s2 + $0x190] sm:$0xff]
        %v2431 = vld [vmem:[%s2 + $0x198] sm:$0xff]
        %v2432 = vld [vmem:[%s2 + $0x1a0] sm:$0xff]
        %v2433 = vld [vmem:[%s2 + $0x1a8] sm:$0xff]
        %v2434 = vld [vmem:[%s2 + $0x1b0] sm:$0xff]
        %v2435 = vld [vmem:[%s2 + $0x1b8] sm:$0xff]
        %v2436 = vld [vmem:[%s2 + $0x1c0] sm:$0xff]
        %v2437 = vld [vmem:[%s2 + $0x1c8] sm:$0xff]
        %v2438 = vld [vmem:[%s2 + $0x1d0] sm:$0xff]
        %v2439 = vld [vmem:[%s2 + $0x1d8] sm:$0xff]
        %v2440 = vld [vmem:[%s2 + $0x1e0] sm:$0xff]
        %v2441 = vld [vmem:[%s2 + $0x1e8] sm:$0xff]
        %v2442 = vld [vmem:[%s2 + $0x1f0] sm:$0xff]
        %v2443 = vld [vmem:[%s2 + $0x1f8] sm:$0xff]
        %v2444 = vld [vmem:[%s3] sm:$0xf]
        %v2446 = vperm.slane %v2444, 0
        %v2447 = vperm.slane %v2444, 1
        %v2448 = vperm.slane %v2444, 2
        %v2449 = vperm.slane %v2444, 3
        %v2518 = vunpack.c.l.b16 %v2380
        %v2519 = vunpack.c.h.b16 %v2380
        %v2520 = vunpack.c.l.b16 %v2381
        %v2521 = vunpack.c.h.b16 %v2381
        %v2522 = vunpack.c.l.b16 %v2382
        %v2523 = vunpack.c.h.b16 %v2382
        %v2524 = vunpack.c.l.b16 %v2383
        %v2525 = vunpack.c.h.b16 %v2383
        %v2526 = vunpack.c.l.b16 %v2384
        %v2527 = vunpack.c.h.b16 %v2384
        %v2528 = vunpack.c.l.b16 %v2385
        %v2529 = vunpack.c.h.b16 %v2385
        %v2530 = vunpack.c.l.b16 %v2386
        %v2531 = vunpack.c.h.b16 %v2386
        %v2532 = vunpack.c.l.b16 %v2387
        %v2533 = vunpack.c.h.b16 %v2387
        %v2534 = vunpack.c.l.b16 %v2388
        %v2535 = vunpack.c.h.b16 %v2388
        %v2536 = vunpack.c.l.b16 %v2389
        %v2537 = vunpack.c.h.b16 %v2389
        %v2538 = vunpack.c.l.b16 %v2390
        %v2539 = vunpack.c.h.b16 %v2390
        %v2540 = vunpack.c.l.b16 %v2391
        %v2541 = vunpack.c.h.b16 %v2391
        %v2542 = vunpack.c.l.b16 %v2392
        %v2543 = vunpack.c.h.b16 %v2392
        %v2544 = vunpack.c.l.b16 %v2393
        %v2545 = vunpack.c.h.b16 %v2393
        %v2546 = vunpack.c.l.b16 %v2394
        %v2547 = vunpack.c.h.b16 %v2394
        %v2548 = vunpack.c.l.b16 %v2395
        %v2549 = vunpack.c.h.b16 %v2395
        %v2550 = vunpack.c.l.b16 %v2396
        %v2551 = vunpack.c.h.b16 %v2396
        %v2552 = vunpack.c.l.b16 %v2397
        %v2553 = vunpack.c.h.b16 %v2397
        %v2554 = vunpack.c.l.b16 %v2398
        %v2555 = vunpack.c.h.b16 %v2398
        %v2556 = vunpack.c.l.b16 %v2399
        %v2557 = vunpack.c.h.b16 %v2399
        %v2558 = vunpack.c.l.b16 %v2400
        %v2559 = vunpack.c.h.b16 %v2400
        %v2560 = vunpack.c.l.b16 %v2401
        %v2561 = vunpack.c.h.b16 %v2401
        %v2562 = vunpack.c.l.b16 %v2402
        %v2563 = vunpack.c.h.b16 %v2402
        %v2564 = vunpack.c.l.b16 %v2403
        %v2565 = vunpack.c.h.b16 %v2403
        %v2566 = vunpack.c.l.b16 %v2404
        %v2567 = vunpack.c.h.b16 %v2404
        %v2568 = vunpack.c.l.b16 %v2405
        %v2569 = vunpack.c.h.b16 %v2405
        %v2570 = vunpack.c.l.b16 %v2406
        %v2571 = vunpack.c.h.b16 %v2406
        %v2572 = vunpack.c.l.b16 %v2407
        %v2573 = vunpack.c.h.b16 %v2407
        %v2574 = vunpack.c.l.b16 %v2408
        %v2575 = vunpack.c.h.b16 %v2408
        %v2576 = vunpack.c.l.b16 %v2409
        %v2577 = vunpack.c.h.b16 %v2409
        %v2578 = vunpack.c.l.b16 %v2410
        %v2579 = vunpack.c.h.b16 %v2410
        %v2580 = vunpack.c.l.b16 %v2411
        %v2581 = vunpack.c.h.b16 %v2411
        %v2582 = vunpack.c.l.b16 %v2412
        %v2583 = vunpack.c.h.b16 %v2412
        %v2584 = vunpack.c.l.b16 %v2413
        %v2585 = vunpack.c.h.b16 %v2413
        %v2586 = vunpack.c.l.b16 %v2414
        %v2587 = vunpack.c.h.b16 %v2414
        %v2588 = vunpack.c.l.b16 %v2415
        %v2589 = vunpack.c.h.b16 %v2415
        %v2590 = vunpack.c.l.b16 %v2416
        %v2591 = vunpack.c.h.b16 %v2416
        %v2592 = vunpack.c.l.b16 %v2417
        %v2593 = vunpack.c.h.b16 %v2417
        %v2594 = vunpack.c.l.b16 %v2418
        %v2595 = vunpack.c.h.b16 %v2418
        %v2596 = vunpack.c.l.b16 %v2419
        %v2597 = vunpack.c.h.b16 %v2419
        %v2598 = vunpack.c.l.b16 %v2420
        %v2599 = vunpack.c.h.b16 %v2420
        %v2600 = vunpack.c.l.b16 %v2421
        %v2601 = vunpack.c.h.b16 %v2421
        %v2602 = vunpack.c.l.b16 %v2422
        %v2603 = vunpack.c.h.b16 %v2422
        %v2604 = vunpack.c.l.b16 %v2423
        %v2605 = vunpack.c.h.b16 %v2423
        %v2606 = vunpack.c.l.b16 %v2424
        %v2607 = vunpack.c.h.b16 %v2424
        %v2608 = vunpack.c.l.b16 %v2425
        %v2609 = vunpack.c.h.b16 %v2425
        %v2610 = vunpack.c.l.b16 %v2426
        %v2611 = vunpack.c.h.b16 %v2426
        %v2612 = vunpack.c.l.b16 %v2427
        %v2613 = vunpack.c.h.b16 %v2427
        %v2614 = vunpack.c.l.b16 %v2428
        %v2615 = vunpack.c.h.b16 %v2428
        %v2616 = vunpack.c.l.b16 %v2429
        %v2617 = vunpack.c.h.b16 %v2429
        %v2618 = vunpack.c.l.b16 %v2430
        %v2619 = vunpack.c.h.b16 %v2430
        %v2620 = vunpack.c.l.b16 %v2431
        %v2621 = vunpack.c.h.b16 %v2431
        %v2622 = vunpack.c.l.b16 %v2432
        %v2623 = vunpack.c.h.b16 %v2432
        %v2624 = vunpack.c.l.b16 %v2433
        %v2625 = vunpack.c.h.b16 %v2433
        %v2626 = vunpack.c.l.b16 %v2434
        %v2627 = vunpack.c.h.b16 %v2434
        %v2628 = vunpack.c.l.b16 %v2435
        %v2629 = vunpack.c.h.b16 %v2435
        %v2630 = vunpack.c.l.b16 %v2436
        %v2631 = vunpack.c.h.b16 %v2436
        %v2632 = vunpack.c.l.b16 %v2437
        %v2633 = vunpack.c.h.b16 %v2437
        %v2634 = vunpack.c.l.b16 %v2438
        %v2635 = vunpack.c.h.b16 %v2438
        %v2636 = vunpack.c.l.b16 %v2439
        %v2637 = vunpack.c.h.b16 %v2439
        %v2638 = vunpack.c.l.b16 %v2440
        %v2639 = vunpack.c.h.b16 %v2440
        %v2640 = vunpack.c.l.b16 %v2441
        %v2641 = vunpack.c.h.b16 %v2441
        %v2642 = vunpack.c.l.b16 %v2442
        %v2643 = vunpack.c.h.b16 %v2442
        %v2644 = vunpack.c.l.b16 %v2443
        %v2645 = vunpack.c.h.b16 %v2443
        %v2646 = vpack.c.b16 %v2522, %v2518
        %v2647 = vpack.c.b16 %v2523, %v2519
        %v2648 = vpack.c.b16 %v2524, %v2520
        %v2649 = vpack.c.b16 %v2525, %v2521
        %v2650 = vpack.c.b16 %v2530, %v2526
        %v2651 = vpack.c.b16 %v2531, %v2527
        %v2652 = vpack.c.b16 %v2532, %v2528
        %v2653 = vpack.c.b16 %v2533, %v2529
        %v2654 = vpack.c.b16 %v2538, %v2534
        %v2655 = vpack.c.b16 %v2539, %v2535
        %v2656 = vpack.c.b16 %v2540, %v2536
        %v2657 = vpack.c.b16 %v2541, %v2537
        %v2658 = vpack.c.b16 %v2546, %v2542
        %v2659 = vpack.c.b16 %v2547, %v2543
        %v2660 = vpack.c.b16 %v2548, %v2544
        %v2661 = vpack.c.b16 %v2549, %v2545
        %v2662 = vpack.c.b16 %v2554, %v2550
        %v2663 = vpack.c.b16 %v2555, %v2551
        %v2664 = vpack.c.b16 %v2556, %v2552
        %v2665 = vpack.c.b16 %v2557, %v2553
        %v2666 = vpack.c.b16 %v2562, %v2558
        %v2667 = vpack.c.b16 %v2563, %v2559
        %v2668 = vpack.c.b16 %v2564, %v2560
        %v2669 = vpack.c.b16 %v2565, %v2561
        %v2670 = vpack.c.b16 %v2570, %v2566
        %v2671 = vpack.c.b16 %v2571, %v2567
        %v2672 = vpack.c.b16 %v2572, %v2568
        %v2673 = vpack.c.b16 %v2573, %v2569
        %v2674 = vpack.c.b16 %v2578, %v2574
        %v2675 = vpack.c.b16 %v2579, %v2575
        %v2676 = vpack.c.b16 %v2580, %v2576
        %v2677 = vpack.c.b16 %v2581, %v2577
        %v2678 = vpack.c.b16 %v2586, %v2582
        %v2679 = vpack.c.b16 %v2587, %v2583
        %v2680 = vpack.c.b16 %v2588, %v2584
        %v2681 = vpack.c.b16 %v2589, %v2585
        %v2682 = vpack.c.b16 %v2594, %v2590
        %v2683 = vpack.c.b16 %v2595, %v2591
        %v2684 = vpack.c.b16 %v2596, %v2592
        %v2685 = vpack.c.b16 %v2597, %v2593
        %v2686 = vpack.c.b16 %v2602, %v2598
        %v2687 = vpack.c.b16 %v2603, %v2599
        %v2688 = vpack.c.b16 %v2604, %v2600
        %v2689 = vpack.c.b16 %v2605, %v2601
        %v2690 = vpack.c.b16 %v2610, %v2606
        %v2691 = vpack.c.b16 %v2611, %v2607
        %v2692 = vpack.c.b16 %v2612, %v2608
        %v2693 = vpack.c.b16 %v2613, %v2609
        %v2694 = vpack.c.b16 %v2618, %v2614
        %v2695 = vpack.c.b16 %v2619, %v2615
        %v2696 = vpack.c.b16 %v2620, %v2616
        %v2697 = vpack.c.b16 %v2621, %v2617
        %v2698 = vpack.c.b16 %v2626, %v2622
        %v2699 = vpack.c.b16 %v2627, %v2623
        %v2700 = vpack.c.b16 %v2628, %v2624
        %v2701 = vpack.c.b16 %v2629, %v2625
        %v2702 = vpack.c.b16 %v2634, %v2630
        %v2703 = vpack.c.b16 %v2635, %v2631
        %v2704 = vpack.c.b16 %v2636, %v2632
        %v2705 = vpack.c.b16 %v2637, %v2633
        %v2706 = vpack.c.b16 %v2642, %v2638
        %v2707 = vpack.c.b16 %v2643, %v2639
        %v2708 = vpack.c.b16 %v2644, %v2640
        %v2709 = vpack.c.b16 %v2645, %v2641
        %2774 = vmatpush.bf16.msra.mxu0 %v2674
        %2775 = vmatpush.bf16.msra.mxu0 %v2670
        %2776 = vmatpush.bf16.msra.mxu0 %v2666
        %2777 = vmatpush.bf16.msra.mxu0 %v2662
        %2778 = vmatpush.bf16.msra.mxu0 %v2658
        %2779 = vmatpush.bf16.msra.mxu0 %v2654
        %2780 = vmatpush.bf16.msra.mxu0 %v2650
        %2781 = vmatpush.bf16.msra.mxu0 %v2646
        %2782 = vmatmul.bf16.gmra.mxu0 %v2378
        %v2783 = vpop.f32.mrf.mxu0
        %v2784 = vadd.f32 %v2446, %v2783
        %v2785 = vpop.f32.mrf.mxu0
        %2786 = vdwg.mxu0
        %2787 = vmatpush.bf16.msra.mxu0 %v2706
        %2788 = vmatpush.bf16.msra.mxu0 %v2702
        %2789 = vmatpush.bf16.msra.mxu0 %v2698
        %2790 = vmatpush.bf16.msra.mxu0 %v2694
        %2791 = vmatpush.bf16.msra.mxu0 %v2690
        %2792 = vmatpush.bf16.msra.mxu0 %v2686
        %2793 = vmatpush.bf16.msra.mxu0 %v2682
        %2794 = vmatpush.bf16.msra.mxu0 %v2678
        %2795 = vmatmul.bf16.gmra.mxu0 %v2379
        %v2796 = vpop.f32.mrf.mxu0
        %v2797 = vadd.f32 %v2784, %v2796
        %v2798 = vpop.f32.mrf.mxu0
        %2799 = vdwg.mxu0
        %2800 = vmatpush.bf16.msra.mxu0 %v2675
        %2801 = vmatpush.bf16.msra.mxu0 %v2671
        %2802 = vmatpush.bf16.msra.mxu0 %v2667
        %2803 = vmatpush.bf16.msra.mxu0 %v2663
        %2804 = vmatpush.bf16.msra.mxu0 %v2659
        %2805 = vmatpush.bf16.msra.mxu0 %v2655
        %2806 = vmatpush.bf16.msra.mxu0 %v2651
        %2807 = vmatpush.bf16.msra.mxu0 %v2647
        %2808 = vmatmul.bf16.gmra.mxu0 %v2378
        %v2809 = vpop.f32.mrf.mxu0
        %v2810 = vadd.f32 %v2447, %v2809
        %v2811 = vpop.f32.mrf.mxu0
        %2812 = vdwg.mxu0
        %2813 = vmatpush.bf16.msra.mxu0 %v2707
        %2814 = vmatpush.bf16.msra.mxu0 %v2703
        %2815 = vmatpush.bf16.msra.mxu0 %v2699
        %2816 = vmatpush.bf16.msra.mxu0 %v2695
        %2817 = vmatpush.bf16.msra.mxu0 %v2691
        %2818 = vmatpush.bf16.msra.mxu0 %v2687
        %2819 = vmatpush.bf16.msra.mxu0 %v2683
        %2820 = vmatpush.bf16.msra.mxu0 %v2679
        %2821 = vmatmul.bf16.gmra.mxu0 %v2379
        %v2822 = vpop.f32.mrf.mxu0
        %v2823 = vadd.f32 %v2810, %v2822
        %v2824 = vpop.f32.mrf.mxu0
        %2825 = vdwg.mxu0
        %2826 = vmatpush.bf16.msra.mxu0 %v2676
        %2827 = vmatpush.bf16.msra.mxu0 %v2672
        %2828 = vmatpush.bf16.msra.mxu0 %v2668
        %2829 = vmatpush.bf16.msra.mxu0 %v2664
        %2830 = vmatpush.bf16.msra.mxu0 %v2660
        %2831 = vmatpush.bf16.msra.mxu0 %v2656
        %2832 = vmatpush.bf16.msra.mxu0 %v2652
        %2833 = vmatpush.bf16.msra.mxu0 %v2648
        %2834 = vmatmul.bf16.gmra.mxu0 %v2378
        %v2835 = vpop.f32.mrf.mxu0
        %v2836 = vadd.f32 %v2448, %v2835
        %v2837 = vpop.f32.mrf.mxu0
        %2838 = vdwg.mxu0
        %2839 = vmatpush.bf16.msra.mxu0 %v2708
        %2840 = vmatpush.bf16.msra.mxu0 %v2704
        %2841 = vmatpush.bf16.msra.mxu0 %v2700
        %2842 = vmatpush.bf16.msra.mxu0 %v2696
        %2843 = vmatpush.bf16.msra.mxu0 %v2692
        %2844 = vmatpush.bf16.msra.mxu0 %v2688
        %2845 = vmatpush.bf16.msra.mxu0 %v2684
        %2846 = vmatpush.bf16.msra.mxu0 %v2680
        %2847 = vmatmul.bf16.gmra.mxu0 %v2379
        %v2848 = vpop.f32.mrf.mxu0
        %v2849 = vadd.f32 %v2836, %v2848
        %v2850 = vpop.f32.mrf.mxu0
        %2851 = vdwg.mxu0
        %2852 = vmatpush.bf16.msra.mxu0 %v2677
        %2853 = vmatpush.bf16.msra.mxu0 %v2673
        %2854 = vmatpush.bf16.msra.mxu0 %v2669
        %2855 = vmatpush.bf16.msra.mxu0 %v2665
        %2856 = vmatpush.bf16.msra.mxu0 %v2661
        %2857 = vmatpush.bf16.msra.mxu0 %v2657
        %2858 = vmatpush.bf16.msra.mxu0 %v2653
        %2859 = vmatpush.bf16.msra.mxu0 %v2649
        %2860 = vmatmul.bf16.gmra.mxu0 %v2378
        %v2861 = vpop.f32.mrf.mxu0
        %v2862 = vadd.f32 %v2449, %v2861
        %v2863 = vpop.f32.mrf.mxu0
        %2864 = vdwg.mxu0
        %2865 = vmatpush.bf16.msra.mxu0 %v2709
        %2866 = vmatpush.bf16.msra.mxu0 %v2705
        %2867 = vmatpush.bf16.msra.mxu0 %v2701
        %2868 = vmatpush.bf16.msra.mxu0 %v2697
        %2869 = vmatpush.bf16.msra.mxu0 %v2693
        %2870 = vmatpush.bf16.msra.mxu0 %v2689
        %2871 = vmatpush.bf16.msra.mxu0 %v2685
        %2872 = vmatpush.bf16.msra.mxu0 %v2681
        %2873 = vmatmul.bf16.gmra.mxu0 %v2379
        %v2874 = vpop.f32.mrf.mxu0
        %v2875 = vadd.f32 %v2862, %v2874
        %v2876 = vpop.f32.mrf.mxu0
        %2877 = vdwg.mxu0
        %v2878 = vxor.u32 %v2797, 2147483648
        %v2879 = vmul.f32 %v2878, 1.442695
        %v2880 = vpow.pop %v2879
        %v2881 = vadd.f32 %v2880, 1.0
        %v2882 = vrcp.pop %v2881
        %v2883 = vmul.f32 %v2881, %v2882
        %v2884 = vsub.f32 1.0, %v2883
        %v2885 = vmul.f32 %v2882, %v2884
        %v2886 = vadd.f32 %v2882, %v2885
        %vm2887 = vweird.f32 %v2881
        %vm2888 = vweird.f32 %v2882
        %vm2889 = vmor %vm2887, %vm2888
        %v2890 = vsel %vm2889, %v2882, %v2886
        %v2891 = vand.u32 2147483647, %v2881
        %vm2892 = vcmp.eq.f32.partialorder %v2891, 8.507059e+37
        %v2893 = vand.u32 %v2881, 2147483648
        %v2894 = vor.u32 1.1754944e-38, %v2893
        %v2895 = vsel %vm2892, %v2894, %v2890
        %v2896 = vmul.f32 1.0, %v2895
        %v2897 = vxor.u32 %v2823, 2147483648
        %v2898 = vmul.f32 %v2897, 1.442695
        %v2899 = vpow.pop %v2898
        %v2900 = vadd.f32 %v2899, 1.0
        %v2901 = vrcp.pop %v2900
        %v2902 = vmul.f32 %v2900, %v2901
        %v2903 = vsub.f32 1.0, %v2902
        %v2904 = vmul.f32 %v2901, %v2903
        %v2905 = vadd.f32 %v2901, %v2904
        %vm2906 = vweird.f32 %v2900
        %vm2907 = vweird.f32 %v2901
        %vm2908 = vmor %vm2906, %vm2907
        %v2909 = vsel %vm2908, %v2901, %v2905
        %v2910 = vand.u32 2147483647, %v2900
        %vm2911 = vcmp.eq.f32.partialorder %v2910, 8.507059e+37
        %v2912 = vand.u32 %v2900, 2147483648
        %v2913 = vor.u32 1.1754944e-38, %v2912
        %v2914 = vsel %vm2911, %v2913, %v2909
        %v2915 = vmul.f32 1.0, %v2914
        %v2916 = vmul.f32 %v2896, %v2875
        %v2917 = vadd.f32 %v2849, %v2916
        %v2918 = vtanh.pop %v2917
        %v2919 = vsub.f32 1.0, %v2915
        %v2920 = vmul.f32 %v2919, %v2918
        %v2921 = vmul.f32 %v2915, %v2377
        %v2922 = vadd.f32 %v2920, %v2921
        %2923 = vst [vmem:[#allocation2] sm:$0xff] %v2922
        %s2924 = scalar_lea.vmem %s374, 32
        %v2925 = vld [vmem:[%s2924] sm:$0xff]
        %2926 = vset.pattern.permute.xlu0 0
        %2927 = vperm.xlu0 %2926, %v2925
        %v2928 = vpop.permute.xlu0 %2927
        %vm2929 = vcmp.eq.s32.totalorder %v392, %v2928
        %v2930 = vsel %vm2929, 1, 0
        %v2931 = vcvt.s32.f32 %v2930
        %v2932 = vpack.c.bf16 %v2931, %v2931
        %v2933 = vld [vmem:[%s1] sm:$0xf]
        %v2934 = vld [vmem:[%s1 + $0x4] sm:$0xf]
        %v2935 = vld [vmem:[%s1 + $0x8] sm:$0xf]
        %v2936 = vld [vmem:[%s1 + $0xc] sm:$0xf]
        %v2937 = vld [vmem:[%s1 + $0x10] sm:$0xf]
        %v2938 = vld [vmem:[%s1 + $0x14] sm:$0xf]
        %v2939 = vld [vmem:[%s1 + $0x18] sm:$0xf]
        %v2940 = vld [vmem:[%s1 + $0x1c] sm:$0xf]
        %v2941 = vld [vmem:[%s1 + $0x20] sm:$0xf]
        %v2942 = vld [vmem:[%s1 + $0x24] sm:$0xf]
        %v2943 = vld [vmem:[%s1 + $0x28] sm:$0xf]
        %v2944 = vld [vmem:[%s1 + $0x2c] sm:$0xf]
        %v2945 = vld [vmem:[%s1 + $0x30] sm:$0xf]
        %v2946 = vld [vmem:[%s1 + $0x34] sm:$0xf]
        %v2947 = vld [vmem:[%s1 + $0x38] sm:$0xf]
        %v2948 = vld [vmem:[%s1 + $0x3c] sm:$0xf]
        %v2965 = vunpack.c.l.b16 %v2933
        %v2966 = vunpack.c.l.b16 %v2934
        %v2967 = vunpack.c.l.b16 %v2935
        %v2968 = vunpack.c.l.b16 %v2936
        %v2969 = vunpack.c.l.b16 %v2937
        %v2970 = vunpack.c.l.b16 %v2938
        %v2971 = vunpack.c.l.b16 %v2939
        %v2972 = vunpack.c.l.b16 %v2940
        %v2973 = vunpack.c.l.b16 %v2941
        %v2974 = vunpack.c.l.b16 %v2942
        %v2975 = vunpack.c.l.b16 %v2943
        %v2976 = vunpack.c.l.b16 %v2944
        %v2977 = vunpack.c.l.b16 %v2945
        %v2978 = vunpack.c.l.b16 %v2946
        %v2979 = vunpack.c.l.b16 %v2947
        %v2980 = vunpack.c.l.b16 %v2948
        %v2981 = vpack.c.b16 %v2966, %v2965
        %v2982 = vpack.c.b16 %v2968, %v2967
        %v2983 = vpack.c.b16 %v2970, %v2969
        %v2984 = vpack.c.b16 %v2972, %v2971
        %v2985 = vpack.c.b16 %v2974, %v2973
        %v2986 = vpack.c.b16 %v2976, %v2975
        %v2987 = vpack.c.b16 %v2978, %v2977
        %v2988 = vpack.c.b16 %v2980, %v2979
        %2997 = vmatpush.bf16.msra.mxu0 %v2988
        %2998 = vmatpush.bf16.msra.mxu0 %v2987
        %2999 = vmatpush.bf16.msra.mxu0 %v2986
        %3000 = vmatpush.bf16.msra.mxu0 %v2985
        %3001 = vmatpush.bf16.msra.mxu0 %v2984
        %3002 = vmatpush.bf16.msra.mxu0 %v2983
        %3003 = vmatpush.bf16.msra.mxu0 %v2982
        %3004 = vmatpush.bf16.msra.mxu0 %v2981
        %3005 = vmatmul.bf16.gmra.mxu0 %v2932
        %v3006 = vpop.f32.mrf.mxu0
        %v3007 = vadd.f32 0.0, %v3006
        %v3008 = vpop.f32.mrf.mxu0
        %3009 = vdwg.mxu0
        %v3010 = vld [vmem:[#allocation2] sm:$0xff]
        %v3011 = vpack.c.bf16 %v3007, %v3007
        %v3012 = vpack.c.bf16 %v3010, %v3010
        %v3013 = vld [vmem:[%s2] sm:$0xff]
        %v3014 = vld [vmem:[%s2 + $0x8] sm:$0xff]
        %v3015 = vld [vmem:[%s2 + $0x10] sm:$0xff]
        %v3016 = vld [vmem:[%s2 + $0x18] sm:$0xff]
        %v3017 = vld [vmem:[%s2 + $0x20] sm:$0xff]
        %v3018 = vld [vmem:[%s2 + $0x28] sm:$0xff]
        %v3019 = vld [vmem:[%s2 + $0x30] sm:$0xff]
        %v3020 = vld [vmem:[%s2 + $0x38] sm:$0xff]
        %v3021 = vld [vmem:[%s2 + $0x40] sm:$0xff]
        %v3022 = vld [vmem:[%s2 + $0x48] sm:$0xff]
        %v3023 = vld [vmem:[%s2 + $0x50] sm:$0xff]
        %v3024 = vld [vmem:[%s2 + $0x58] sm:$0xff]
        %v3025 = vld [vmem:[%s2 + $0x60] sm:$0xff]
        %v3026 = vld [vmem:[%s2 + $0x68] sm:$0xff]
        %v3027 = vld [vmem:[%s2 + $0x70] sm:$0xff]
        %v3028 = vld [vmem:[%s2 + $0x78] sm:$0xff]
        %v3029 = vld [vmem:[%s2 + $0x80] sm:$0xff]
        %v3030 = vld [vmem:[%s2 + $0x88] sm:$0xff]
        %v3031 = vld [vmem:[%s2 + $0x90] sm:$0xff]
        %v3032 = vld [vmem:[%s2 + $0x98] sm:$0xff]
        %v3033 = vld [vmem:[%s2 + $0xa0] sm:$0xff]
        %v3034 = vld [vmem:[%s2 + $0xa8] sm:$0xff]
        %v3035 = vld [vmem:[%s2 + $0xb0] sm:$0xff]
        %v3036 = vld [vmem:[%s2 + $0xb8] sm:$0xff]
        %v3037 = vld [vmem:[%s2 + $0xc0] sm:$0xff]
        %v3038 = vld [vmem:[%s2 + $0xc8] sm:$0xff]
        %v3039 = vld [vmem:[%s2 + $0xd0] sm:$0xff]
        %v3040 = vld [vmem:[%s2 + $0xd8] sm:$0xff]
        %v3041 = vld [vmem:[%s2 + $0xe0] sm:$0xff]
        %v3042 = vld [vmem:[%s2 + $0xe8] sm:$0xff]
        %v3043 = vld [vmem:[%s2 + $0xf0] sm:$0xff]
        %v3044 = vld [vmem:[%s2 + $0xf8] sm:$0xff]
        %v3045 = vld [vmem:[%s2 + $0x100] sm:$0xff]
        %v3046 = vld [vmem:[%s2 + $0x108] sm:$0xff]
        %v3047 = vld [vmem:[%s2 + $0x110] sm:$0xff]
        %v3048 = vld [vmem:[%s2 + $0x118] sm:$0xff]
        %v3049 = vld [vmem:[%s2 + $0x120] sm:$0xff]
        %v3050 = vld [vmem:[%s2 + $0x128] sm:$0xff]
        %v3051 = vld [vmem:[%s2 + $0x130] sm:$0xff]
        %v3052 = vld [vmem:[%s2 + $0x138] sm:$0xff]
        %v3053 = vld [vmem:[%s2 + $0x140] sm:$0xff]
        %v3054 = vld [vmem:[%s2 + $0x148] sm:$0xff]
        %v3055 = vld [vmem:[%s2 + $0x150] sm:$0xff]
        %v3056 = vld [vmem:[%s2 + $0x158] sm:$0xff]
        %v3057 = vld [vmem:[%s2 + $0x160] sm:$0xff]
        %v3058 = vld [vmem:[%s2 + $0x168] sm:$0xff]
        %v3059 = vld [vmem:[%s2 + $0x170] sm:$0xff]
        %v3060 = vld [vmem:[%s2 + $0x178] sm:$0xff]
        %v3061 = vld [vmem:[%s2 + $0x180] sm:$0xff]
        %v3062 = vld [vmem:[%s2 + $0x188] sm:$0xff]
        %v3063 = vld [vmem:[%s2 + $0x190] sm:$0xff]
        %v3064 = vld [vmem:[%s2 + $0x198] sm:$0xff]
        %v3065 = vld [vmem:[%s2 + $0x1a0] sm:$0xff]
        %v3066 = vld [vmem:[%s2 + $0x1a8] sm:$0xff]
        %v3067 = vld [vmem:[%s2 + $0x1b0] sm:$0xff]
        %v3068 = vld [vmem:[%s2 + $0x1b8] sm:$0xff]
        %v3069 = vld [vmem:[%s2 + $0x1c0] sm:$0xff]
        %v3070 = vld [vmem:[%s2 + $0x1c8] sm:$0xff]
        %v3071 = vld [vmem:[%s2 + $0x1d0] sm:$0xff]
        %v3072 = vld [vmem:[%s2 + $0x1d8] sm:$0xff]
        %v3073 = vld [vmem:[%s2 + $0x1e0] sm:$0xff]
        %v3074 = vld [vmem:[%s2 + $0x1e8] sm:$0xff]
        %v3075 = vld [vmem:[%s2 + $0x1f0] sm:$0xff]
        %v3076 = vld [vmem:[%s2 + $0x1f8] sm:$0xff]
        %v3077 = vld [vmem:[%s3] sm:$0xf]
        %v3079 = vperm.slane %v3077, 0
        %v3080 = vperm.slane %v3077, 1
        %v3081 = vperm.slane %v3077, 2
        %v3082 = vperm.slane %v3077, 3
        %v3151 = vunpack.c.l.b16 %v3013
        %v3152 = vunpack.c.h.b16 %v3013
        %v3153 = vunpack.c.l.b16 %v3014
        %v3154 = vunpack.c.h.b16 %v3014
        %v3155 = vunpack.c.l.b16 %v3015
        %v3156 = vunpack.c.h.b16 %v3015
        %v3157 = vunpack.c.l.b16 %v3016
        %v3158 = vunpack.c.h.b16 %v3016
        %v3159 = vunpack.c.l.b16 %v3017
        %v3160 = vunpack.c.h.b16 %v3017
        %v3161 = vunpack.c.l.b16 %v3018
        %v3162 = vunpack.c.h.b16 %v3018
        %v3163 = vunpack.c.l.b16 %v3019
        %v3164 = vunpack.c.h.b16 %v3019
        %v3165 = vunpack.c.l.b16 %v3020
        %v3166 = vunpack.c.h.b16 %v3020
        %v3167 = vunpack.c.l.b16 %v3021
        %v3168 = vunpack.c.h.b16 %v3021
        %v3169 = vunpack.c.l.b16 %v3022
        %v3170 = vunpack.c.h.b16 %v3022
        %v3171 = vunpack.c.l.b16 %v3023
        %v3172 = vunpack.c.h.b16 %v3023
        %v3173 = vunpack.c.l.b16 %v3024
        %v3174 = vunpack.c.h.b16 %v3024
        %v3175 = vunpack.c.l.b16 %v3025
        %v3176 = vunpack.c.h.b16 %v3025
        %v3177 = vunpack.c.l.b16 %v3026
        %v3178 = vunpack.c.h.b16 %v3026
        %v3179 = vunpack.c.l.b16 %v3027
        %v3180 = vunpack.c.h.b16 %v3027
        %v3181 = vunpack.c.l.b16 %v3028
        %v3182 = vunpack.c.h.b16 %v3028
        %v3183 = vunpack.c.l.b16 %v3029
        %v3184 = vunpack.c.h.b16 %v3029
        %v3185 = vunpack.c.l.b16 %v3030
        %v3186 = vunpack.c.h.b16 %v3030
        %v3187 = vunpack.c.l.b16 %v3031
        %v3188 = vunpack.c.h.b16 %v3031
        %v3189 = vunpack.c.l.b16 %v3032
        %v3190 = vunpack.c.h.b16 %v3032
        %v3191 = vunpack.c.l.b16 %v3033
        %v3192 = vunpack.c.h.b16 %v3033
        %v3193 = vunpack.c.l.b16 %v3034
        %v3194 = vunpack.c.h.b16 %v3034
        %v3195 = vunpack.c.l.b16 %v3035
        %v3196 = vunpack.c.h.b16 %v3035
        %v3197 = vunpack.c.l.b16 %v3036
        %v3198 = vunpack.c.h.b16 %v3036
        %v3199 = vunpack.c.l.b16 %v3037
        %v3200 = vunpack.c.h.b16 %v3037
        %v3201 = vunpack.c.l.b16 %v3038
        %v3202 = vunpack.c.h.b16 %v3038
        %v3203 = vunpack.c.l.b16 %v3039
        %v3204 = vunpack.c.h.b16 %v3039
        %v3205 = vunpack.c.l.b16 %v3040
        %v3206 = vunpack.c.h.b16 %v3040
        %v3207 = vunpack.c.l.b16 %v3041
        %v3208 = vunpack.c.h.b16 %v3041
        %v3209 = vunpack.c.l.b16 %v3042
        %v3210 = vunpack.c.h.b16 %v3042
        %v3211 = vunpack.c.l.b16 %v3043
        %v3212 = vunpack.c.h.b16 %v3043
        %v3213 = vunpack.c.l.b16 %v3044
        %v3214 = vunpack.c.h.b16 %v3044
        %v3215 = vunpack.c.l.b16 %v3045
        %v3216 = vunpack.c.h.b16 %v3045
        %v3217 = vunpack.c.l.b16 %v3046
        %v3218 = vunpack.c.h.b16 %v3046
        %v3219 = vunpack.c.l.b16 %v3047
        %v3220 = vunpack.c.h.b16 %v3047
        %v3221 = vunpack.c.l.b16 %v3048
        %v3222 = vunpack.c.h.b16 %v3048
        %v3223 = vunpack.c.l.b16 %v3049
        %v3224 = vunpack.c.h.b16 %v3049
        %v3225 = vunpack.c.l.b16 %v3050
        %v3226 = vunpack.c.h.b16 %v3050
        %v3227 = vunpack.c.l.b16 %v3051
        %v3228 = vunpack.c.h.b16 %v3051
        %v3229 = vunpack.c.l.b16 %v3052
        %v3230 = vunpack.c.h.b16 %v3052
        %v3231 = vunpack.c.l.b16 %v3053
        %v3232 = vunpack.c.h.b16 %v3053
        %v3233 = vunpack.c.l.b16 %v3054
        %v3234 = vunpack.c.h.b16 %v3054
        %v3235 = vunpack.c.l.b16 %v3055
        %v3236 = vunpack.c.h.b16 %v3055
        %v3237 = vunpack.c.l.b16 %v3056
        %v3238 = vunpack.c.h.b16 %v3056
        %v3239 = vunpack.c.l.b16 %v3057
        %v3240 = vunpack.c.h.b16 %v3057
        %v3241 = vunpack.c.l.b16 %v3058
        %v3242 = vunpack.c.h.b16 %v3058
        %v3243 = vunpack.c.l.b16 %v3059
        %v3244 = vunpack.c.h.b16 %v3059
        %v3245 = vunpack.c.l.b16 %v3060
        %v3246 = vunpack.c.h.b16 %v3060
        %v3247 = vunpack.c.l.b16 %v3061
        %v3248 = vunpack.c.h.b16 %v3061
        %v3249 = vunpack.c.l.b16 %v3062
        %v3250 = vunpack.c.h.b16 %v3062
        %v3251 = vunpack.c.l.b16 %v3063
        %v3252 = vunpack.c.h.b16 %v3063
        %v3253 = vunpack.c.l.b16 %v3064
        %v3254 = vunpack.c.h.b16 %v3064
        %v3255 = vunpack.c.l.b16 %v3065
        %v3256 = vunpack.c.h.b16 %v3065
        %v3257 = vunpack.c.l.b16 %v3066
        %v3258 = vunpack.c.h.b16 %v3066
        %v3259 = vunpack.c.l.b16 %v3067
        %v3260 = vunpack.c.h.b16 %v3067
        %v3261 = vunpack.c.l.b16 %v3068
        %v3262 = vunpack.c.h.b16 %v3068
        %v3263 = vunpack.c.l.b16 %v3069
        %v3264 = vunpack.c.h.b16 %v3069
        %v3265 = vunpack.c.l.b16 %v3070
        %v3266 = vunpack.c.h.b16 %v3070
        %v3267 = vunpack.c.l.b16 %v3071
        %v3268 = vunpack.c.h.b16 %v3071
        %v3269 = vunpack.c.l.b16 %v3072
        %v3270 = vunpack.c.h.b16 %v3072
        %v3271 = vunpack.c.l.b16 %v3073
        %v3272 = vunpack.c.h.b16 %v3073
        %v3273 = vunpack.c.l.b16 %v3074
        %v3274 = vunpack.c.h.b16 %v3074
        %v3275 = vunpack.c.l.b16 %v3075
        %v3276 = vunpack.c.h.b16 %v3075
        %v3277 = vunpack.c.l.b16 %v3076
        %v3278 = vunpack.c.h.b16 %v3076
        %v3279 = vpack.c.b16 %v3155, %v3151
        %v3280 = vpack.c.b16 %v3156, %v3152
        %v3281 = vpack.c.b16 %v3157, %v3153
        %v3282 = vpack.c.b16 %v3158, %v3154
        %v3283 = vpack.c.b16 %v3163, %v3159
        %v3284 = vpack.c.b16 %v3164, %v3160
        %v3285 = vpack.c.b16 %v3165, %v3161
        %v3286 = vpack.c.b16 %v3166, %v3162
        %v3287 = vpack.c.b16 %v3171, %v3167
        %v3288 = vpack.c.b16 %v3172, %v3168
        %v3289 = vpack.c.b16 %v3173, %v3169
        %v3290 = vpack.c.b16 %v3174, %v3170
        %v3291 = vpack.c.b16 %v3179, %v3175
        %v3292 = vpack.c.b16 %v3180, %v3176
        %v3293 = vpack.c.b16 %v3181, %v3177
        %v3294 = vpack.c.b16 %v3182, %v3178
        %v3295 = vpack.c.b16 %v3187, %v3183
        %v3296 = vpack.c.b16 %v3188, %v3184
        %v3297 = vpack.c.b16 %v3189, %v3185
        %v3298 = vpack.c.b16 %v3190, %v3186
        %v3299 = vpack.c.b16 %v3195, %v3191
        %v3300 = vpack.c.b16 %v3196, %v3192
        %v3301 = vpack.c.b16 %v3197, %v3193
        %v3302 = vpack.c.b16 %v3198, %v3194
        %v3303 = vpack.c.b16 %v3203, %v3199
        %v3304 = vpack.c.b16 %v3204, %v3200
        %v3305 = vpack.c.b16 %v3205, %v3201
        %v3306 = vpack.c.b16 %v3206, %v3202
        %v3307 = vpack.c.b16 %v3211, %v3207
        %v3308 = vpack.c.b16 %v3212, %v3208
        %v3309 = vpack.c.b16 %v3213, %v3209
        %v3310 = vpack.c.b16 %v3214, %v3210
        %v3311 = vpack.c.b16 %v3219, %v3215
        %v3312 = vpack.c.b16 %v3220, %v3216
        %v3313 = vpack.c.b16 %v3221, %v3217
        %v3314 = vpack.c.b16 %v3222, %v3218
        %v3315 = vpack.c.b16 %v3227, %v3223
        %v3316 = vpack.c.b16 %v3228, %v3224
        %v3317 = vpack.c.b16 %v3229, %v3225
        %v3318 = vpack.c.b16 %v3230, %v3226
        %v3319 = vpack.c.b16 %v3235, %v3231
        %v3320 = vpack.c.b16 %v3236, %v3232
        %v3321 = vpack.c.b16 %v3237, %v3233
        %v3322 = vpack.c.b16 %v3238, %v3234
        %v3323 = vpack.c.b16 %v3243, %v3239
        %v3324 = vpack.c.b16 %v3244, %v3240
        %v3325 = vpack.c.b16 %v3245, %v3241
        %v3326 = vpack.c.b16 %v3246, %v3242
        %v3327 = vpack.c.b16 %v3251, %v3247
        %v3328 = vpack.c.b16 %v3252, %v3248
        %v3329 = vpack.c.b16 %v3253, %v3249
        %v3330 = vpack.c.b16 %v3254, %v3250
        %v3331 = vpack.c.b16 %v3259, %v3255
        %v3332 = vpack.c.b16 %v3260, %v3256
        %v3333 = vpack.c.b16 %v3261, %v3257
        %v3334 = vpack.c.b16 %v3262, %v3258
        %v3335 = vpack.c.b16 %v3267, %v3263
        %v3336 = vpack.c.b16 %v3268, %v3264
        %v3337 = vpack.c.b16 %v3269, %v3265
        %v3338 = vpack.c.b16 %v3270, %v3266
        %v3339 = vpack.c.b16 %v3275, %v3271
        %v3340 = vpack.c.b16 %v3276, %v3272
        %v3341 = vpack.c.b16 %v3277, %v3273
        %v3342 = vpack.c.b16 %v3278, %v3274
        %3407 = vmatpush.bf16.msra.mxu0 %v3307
        %3408 = vmatpush.bf16.msra.mxu0 %v3303
        %3409 = vmatpush.bf16.msra.mxu0 %v3299
        %3410 = vmatpush.bf16.msra.mxu0 %v3295
        %3411 = vmatpush.bf16.msra.mxu0 %v3291
        %3412 = vmatpush.bf16.msra.mxu0 %v3287
        %3413 = vmatpush.bf16.msra.mxu0 %v3283
        %3414 = vmatpush.bf16.msra.mxu0 %v3279
        %3415 = vmatmul.bf16.gmra.mxu0 %v3011
        %v3416 = vpop.f32.mrf.mxu0
        %v3417 = vadd.f32 %v3079, %v3416
        %v3418 = vpop.f32.mrf.mxu0
        %3419 = vdwg.mxu0
        %3420 = vmatpush.bf16.msra.mxu0 %v3339
        %3421 = vmatpush.bf16.msra.mxu0 %v3335
        %3422 = vmatpush.bf16.msra.mxu0 %v3331
        %3423 = vmatpush.bf16.msra.mxu0 %v3327
        %3424 = vmatpush.bf16.msra.mxu0 %v3323
        %3425 = vmatpush.bf16.msra.mxu0 %v3319
        %3426 = vmatpush.bf16.msra.mxu0 %v3315
        %3427 = vmatpush.bf16.msra.mxu0 %v3311
        %3428 = vmatmul.bf16.gmra.mxu0 %v3012
        %v3429 = vpop.f32.mrf.mxu0
        %v3430 = vadd.f32 %v3417, %v3429
        %v3431 = vpop.f32.mrf.mxu0
        %3432 = vdwg.mxu0
        %3433 = vmatpush.bf16.msra.mxu0 %v3308
        %3434 = vmatpush.bf16.msra.mxu0 %v3304
        %3435 = vmatpush.bf16.msra.mxu0 %v3300
        %3436 = vmatpush.bf16.msra.mxu0 %v3296
        %3437 = vmatpush.bf16.msra.mxu0 %v3292
        %3438 = vmatpush.bf16.msra.mxu0 %v3288
        %3439 = vmatpush.bf16.msra.mxu0 %v3284
        %3440 = vmatpush.bf16.msra.mxu0 %v3280
        %3441 = vmatmul.bf16.gmra.mxu0 %v3011
        %v3442 = vpop.f32.mrf.mxu0
        %v3443 = vadd.f32 %v3080, %v3442
        %v3444 = vpop.f32.mrf.mxu0
        %3445 = vdwg.mxu0
        %3446 = vmatpush.bf16.msra.mxu0 %v3340
        %3447 = vmatpush.bf16.msra.mxu0 %v3336
        %3448 = vmatpush.bf16.msra.mxu0 %v3332
        %3449 = vmatpush.bf16.msra.mxu0 %v3328
        %3450 = vmatpush.bf16.msra.mxu0 %v3324
        %3451 = vmatpush.bf16.msra.mxu0 %v3320
        %3452 = vmatpush.bf16.msra.mxu0 %v3316
        %3453 = vmatpush.bf16.msra.mxu0 %v3312
        %3454 = vmatmul.bf16.gmra.mxu0 %v3012
        %v3455 = vpop.f32.mrf.mxu0
        %v3456 = vadd.f32 %v3443, %v3455
        %v3457 = vpop.f32.mrf.mxu0
        %3458 = vdwg.mxu0
        %3459 = vmatpush.bf16.msra.mxu0 %v3309
        %3460 = vmatpush.bf16.msra.mxu0 %v3305
        %3461 = vmatpush.bf16.msra.mxu0 %v3301
        %3462 = vmatpush.bf16.msra.mxu0 %v3297
        %3463 = vmatpush.bf16.msra.mxu0 %v3293
        %3464 = vmatpush.bf16.msra.mxu0 %v3289
        %3465 = vmatpush.bf16.msra.mxu0 %v3285
        %3466 = vmatpush.bf16.msra.mxu0 %v3281
        %3467 = vmatmul.bf16.gmra.mxu0 %v3011
        %v3468 = vpop.f32.mrf.mxu0
        %v3469 = vadd.f32 %v3081, %v3468
        %v3470 = vpop.f32.mrf.mxu0
        %3471 = vdwg.mxu0
        %3472 = vmatpush.bf16.msra.mxu0 %v3341
        %3473 = vmatpush.bf16.msra.mxu0 %v3337
        %3474 = vmatpush.bf16.msra.mxu0 %v3333
        %3475 = vmatpush.bf16.msra.mxu0 %v3329
        %3476 = vmatpush.bf16.msra.mxu0 %v3325
        %3477 = vmatpush.bf16.msra.mxu0 %v3321
        %3478 = vmatpush.bf16.msra.mxu0 %v3317
        %3479 = vmatpush.bf16.msra.mxu0 %v3313
        %3480 = vmatmul.bf16.gmra.mxu0 %v3012
        %v3481 = vpop.f32.mrf.mxu0
        %v3482 = vadd.f32 %v3469, %v3481
        %v3483 = vpop.f32.mrf.mxu0
        %3484 = vdwg.mxu0
        %3485 = vmatpush.bf16.msra.mxu0 %v3310
        %3486 = vmatpush.bf16.msra.mxu0 %v3306
        %3487 = vmatpush.bf16.msra.mxu0 %v3302
        %3488 = vmatpush.bf16.msra.mxu0 %v3298
        %3489 = vmatpush.bf16.msra.mxu0 %v3294
        %3490 = vmatpush.bf16.msra.mxu0 %v3290
        %3491 = vmatpush.bf16.msra.mxu0 %v3286
        %3492 = vmatpush.bf16.msra.mxu0 %v3282
        %3493 = vmatmul.bf16.gmra.mxu0 %v3011
        %v3494 = vpop.f32.mrf.mxu0
        %v3495 = vadd.f32 %v3082, %v3494
        %v3496 = vpop.f32.mrf.mxu0
        %3497 = vdwg.mxu0
        %3498 = vmatpush.bf16.msra.mxu0 %v3342
        %3499 = vmatpush.bf16.msra.mxu0 %v3338
        %3500 = vmatpush.bf16.msra.mxu0 %v3334
        %3501 = vmatpush.bf16.msra.mxu0 %v3330
        %3502 = vmatpush.bf16.msra.mxu0 %v3326
        %3503 = vmatpush.bf16.msra.mxu0 %v3322
        %3504 = vmatpush.bf16.msra.mxu0 %v3318
        %3505 = vmatpush.bf16.msra.mxu0 %v3314
        %3506 = vmatmul.bf16.gmra.mxu0 %v3012
        %v3507 = vpop.f32.mrf.mxu0
        %v3508 = vadd.f32 %v3495, %v3507
        %v3509 = vpop.f32.mrf.mxu0
        %3510 = vdwg.mxu0
        %v3511 = vxor.u32 %v3430, 2147483648
        %v3512 = vmul.f32 %v3511, 1.442695
        %v3513 = vpow.pop %v3512
        %v3514 = vadd.f32 %v3513, 1.0
        %v3515 = vrcp.pop %v3514
        %v3516 = vmul.f32 %v3514, %v3515
        %v3517 = vsub.f32 1.0, %v3516
        %v3518 = vmul.f32 %v3515, %v3517
        %v3519 = vadd.f32 %v3515, %v3518
        %vm3520 = vweird.f32 %v3514
        %vm3521 = vweird.f32 %v3515
        %vm3522 = vmor %vm3520, %vm3521
        %v3523 = vsel %vm3522, %v3515, %v3519
        %v3524 = vand.u32 2147483647, %v3514
        %vm3525 = vcmp.eq.f32.partialorder %v3524, 8.507059e+37
        %v3526 = vand.u32 %v3514, 2147483648
        %v3527 = vor.u32 1.1754944e-38, %v3526
        %v3528 = vsel %vm3525, %v3527, %v3523
        %v3529 = vmul.f32 1.0, %v3528
        %v3530 = vxor.u32 %v3456, 2147483648
        %v3531 = vmul.f32 %v3530, 1.442695
        %v3532 = vpow.pop %v3531
        %v3533 = vadd.f32 %v3532, 1.0
        %v3534 = vrcp.pop %v3533
        %v3535 = vmul.f32 %v3533, %v3534
        %v3536 = vsub.f32 1.0, %v3535
        %v3537 = vmul.f32 %v3534, %v3536
        %v3538 = vadd.f32 %v3534, %v3537
        %vm3539 = vweird.f32 %v3533
        %vm3540 = vweird.f32 %v3534
        %vm3541 = vmor %vm3539, %vm3540
        %v3542 = vsel %vm3541, %v3534, %v3538
        %v3543 = vand.u32 2147483647, %v3533
        %vm3544 = vcmp.eq.f32.partialorder %v3543, 8.507059e+37
        %v3545 = vand.u32 %v3533, 2147483648
        %v3546 = vor.u32 1.1754944e-38, %v3545
        %v3547 = vsel %vm3544, %v3546, %v3542
        %v3548 = vmul.f32 1.0, %v3547
        %v3549 = vmul.f32 %v3529, %v3508
        %v3550 = vadd.f32 %v3482, %v3549
        %v3551 = vtanh.pop %v3550
        %v3552 = vsub.f32 1.0, %v3548
        %v3553 = vmul.f32 %v3552, %v3551
        %v3554 = vmul.f32 %v3548, %v3010
        %v3555 = vadd.f32 %v3553, %v3554
        %3556 = vst [vmem:[#allocation2] sm:$0xff] %v3555
        %s3557 = scalar_lea.vmem %s374, 40
        %v3558 = vld [vmem:[%s3557] sm:$0xff]
        %3559 = vset.pattern.permute.xlu0 0
        %3560 = vperm.xlu0 %3559, %v3558
        %v3561 = vpop.permute.xlu0 %3560
        %vm3562 = vcmp.eq.s32.totalorder %v392, %v3561
        %v3563 = vsel %vm3562, 1, 0
        %v3564 = vcvt.s32.f32 %v3563
        %v3565 = vpack.c.bf16 %v3564, %v3564
        %v3566 = vld [vmem:[%s1] sm:$0xf]
        %v3567 = vld [vmem:[%s1 + $0x4] sm:$0xf]
        %v3568 = vld [vmem:[%s1 + $0x8] sm:$0xf]
        %v3569 = vld [vmem:[%s1 + $0xc] sm:$0xf]
        %v3570 = vld [vmem:[%s1 + $0x10] sm:$0xf]
        %v3571 = vld [vmem:[%s1 + $0x14] sm:$0xf]
        %v3572 = vld [vmem:[%s1 + $0x18] sm:$0xf]
        %v3573 = vld [vmem:[%s1 + $0x1c] sm:$0xf]
        %v3574 = vld [vmem:[%s1 + $0x20] sm:$0xf]
        %v3575 = vld [vmem:[%s1 + $0x24] sm:$0xf]
        %v3576 = vld [vmem:[%s1 + $0x28] sm:$0xf]
        %v3577 = vld [vmem:[%s1 + $0x2c] sm:$0xf]
        %v3578 = vld [vmem:[%s1 + $0x30] sm:$0xf]
        %v3579 = vld [vmem:[%s1 + $0x34] sm:$0xf]
        %v3580 = vld [vmem:[%s1 + $0x38] sm:$0xf]
        %v3581 = vld [vmem:[%s1 + $0x3c] sm:$0xf]
        %v3598 = vunpack.c.l.b16 %v3566
        %v3599 = vunpack.c.l.b16 %v3567
        %v3600 = vunpack.c.l.b16 %v3568
        %v3601 = vunpack.c.l.b16 %v3569
        %v3602 = vunpack.c.l.b16 %v3570
        %v3603 = vunpack.c.l.b16 %v3571
        %v3604 = vunpack.c.l.b16 %v3572
        %v3605 = vunpack.c.l.b16 %v3573
        %v3606 = vunpack.c.l.b16 %v3574
        %v3607 = vunpack.c.l.b16 %v3575
        %v3608 = vunpack.c.l.b16 %v3576
        %v3609 = vunpack.c.l.b16 %v3577
        %v3610 = vunpack.c.l.b16 %v3578
        %v3611 = vunpack.c.l.b16 %v3579
        %v3612 = vunpack.c.l.b16 %v3580
        %v3613 = vunpack.c.l.b16 %v3581
        %v3614 = vpack.c.b16 %v3599, %v3598
        %v3615 = vpack.c.b16 %v3601, %v3600
        %v3616 = vpack.c.b16 %v3603, %v3602
        %v3617 = vpack.c.b16 %v3605, %v3604
        %v3618 = vpack.c.b16 %v3607, %v3606
        %v3619 = vpack.c.b16 %v3609, %v3608
        %v3620 = vpack.c.b16 %v3611, %v3610
        %v3621 = vpack.c.b16 %v3613, %v3612
        %3630 = vmatpush.bf16.msra.mxu0 %v3621
        %3631 = vmatpush.bf16.msra.mxu0 %v3620
        %3632 = vmatpush.bf16.msra.mxu0 %v3619
        %3633 = vmatpush.bf16.msra.mxu0 %v3618
        %3634 = vmatpush.bf16.msra.mxu0 %v3617
        %3635 = vmatpush.bf16.msra.mxu0 %v3616
        %3636 = vmatpush.bf16.msra.mxu0 %v3615
        %3637 = vmatpush.bf16.msra.mxu0 %v3614
        %3638 = vmatmul.bf16.gmra.mxu0 %v3565
        %v3639 = vpop.f32.mrf.mxu0
        %v3640 = vadd.f32 0.0, %v3639
        %v3641 = vpop.f32.mrf.mxu0
        %3642 = vdwg.mxu0
        %v3643 = vld [vmem:[#allocation2] sm:$0xff]
        %v3644 = vpack.c.bf16 %v3640, %v3640
        %v3645 = vpack.c.bf16 %v3643, %v3643
        %v3646 = vld [vmem:[%s2] sm:$0xff]
        %v3647 = vld [vmem:[%s2 + $0x8] sm:$0xff]
        %v3648 = vld [vmem:[%s2 + $0x10] sm:$0xff]
        %v3649 = vld [vmem:[%s2 + $0x18] sm:$0xff]
        %v3650 = vld [vmem:[%s2 + $0x20] sm:$0xff]
        %v3651 = vld [vmem:[%s2 + $0x28] sm:$0xff]
        %v3652 = vld [vmem:[%s2 + $0x30] sm:$0xff]
        %v3653 = vld [vmem:[%s2 + $0x38] sm:$0xff]
        %v3654 = vld [vmem:[%s2 + $0x40] sm:$0xff]
        %v3655 = vld [vmem:[%s2 + $0x48] sm:$0xff]
        %v3656 = vld [vmem:[%s2 + $0x50] sm:$0xff]
        %v3657 = vld [vmem:[%s2 + $0x58] sm:$0xff]
        %v3658 = vld [vmem:[%s2 + $0x60] sm:$0xff]
        %v3659 = vld [vmem:[%s2 + $0x68] sm:$0xff]
        %v3660 = vld [vmem:[%s2 + $0x70] sm:$0xff]
        %v3661 = vld [vmem:[%s2 + $0x78] sm:$0xff]
        %v3662 = vld [vmem:[%s2 + $0x80] sm:$0xff]
        %v3663 = vld [vmem:[%s2 + $0x88] sm:$0xff]
        %v3664 = vld [vmem:[%s2 + $0x90] sm:$0xff]
        %v3665 = vld [vmem:[%s2 + $0x98] sm:$0xff]
        %v3666 = vld [vmem:[%s2 + $0xa0] sm:$0xff]
        %v3667 = vld [vmem:[%s2 + $0xa8] sm:$0xff]
        %v3668 = vld [vmem:[%s2 + $0xb0] sm:$0xff]
        %v3669 = vld [vmem:[%s2 + $0xb8] sm:$0xff]
        %v3670 = vld [vmem:[%s2 + $0xc0] sm:$0xff]
        %v3671 = vld [vmem:[%s2 + $0xc8] sm:$0xff]
        %v3672 = vld [vmem:[%s2 + $0xd0] sm:$0xff]
        %v3673 = vld [vmem:[%s2 + $0xd8] sm:$0xff]
        %v3674 = vld [vmem:[%s2 + $0xe0] sm:$0xff]
        %v3675 = vld [vmem:[%s2 + $0xe8] sm:$0xff]
        %v3676 = vld [vmem:[%s2 + $0xf0] sm:$0xff]
        %v3677 = vld [vmem:[%s2 + $0xf8] sm:$0xff]
        %v3678 = vld [vmem:[%s2 + $0x100] sm:$0xff]
        %v3679 = vld [vmem:[%s2 + $0x108] sm:$0xff]
        %v3680 = vld [vmem:[%s2 + $0x110] sm:$0xff]
        %v3681 = vld [vmem:[%s2 + $0x118] sm:$0xff]
        %v3682 = vld [vmem:[%s2 + $0x120] sm:$0xff]
        %v3683 = vld [vmem:[%s2 + $0x128] sm:$0xff]
        %v3684 = vld [vmem:[%s2 + $0x130] sm:$0xff]
        %v3685 = vld [vmem:[%s2 + $0x138] sm:$0xff]
        %v3686 = vld [vmem:[%s2 + $0x140] sm:$0xff]
        %v3687 = vld [vmem:[%s2 + $0x148] sm:$0xff]
        %v3688 = vld [vmem:[%s2 + $0x150] sm:$0xff]
        %v3689 = vld [vmem:[%s2 + $0x158] sm:$0xff]
        %v3690 = vld [vmem:[%s2 + $0x160] sm:$0xff]
        %v3691 = vld [vmem:[%s2 + $0x168] sm:$0xff]
        %v3692 = vld [vmem:[%s2 + $0x170] sm:$0xff]
        %v3693 = vld [vmem:[%s2 + $0x178] sm:$0xff]
        %v3694 = vld [vmem:[%s2 + $0x180] sm:$0xff]
        %v3695 = vld [vmem:[%s2 + $0x188] sm:$0xff]
        %v3696 = vld [vmem:[%s2 + $0x190] sm:$0xff]
        %v3697 = vld [vmem:[%s2 + $0x198] sm:$0xff]
        %v3698 = vld [vmem:[%s2 + $0x1a0] sm:$0xff]
        %v3699 = vld [vmem:[%s2 + $0x1a8] sm:$0xff]
        %v3700 = vld [vmem:[%s2 + $0x1b0] sm:$0xff]
        %v3701 = vld [vmem:[%s2 + $0x1b8] sm:$0xff]
        %v3702 = vld [vmem:[%s2 + $0x1c0] sm:$0xff]
        %v3703 = vld [vmem:[%s2 + $0x1c8] sm:$0xff]
        %v3704 = vld [vmem:[%s2 + $0x1d0] sm:$0xff]
        %v3705 = vld [vmem:[%s2 + $0x1d8] sm:$0xff]
        %v3706 = vld [vmem:[%s2 + $0x1e0] sm:$0xff]
        %v3707 = vld [vmem:[%s2 + $0x1e8] sm:$0xff]
        %v3708 = vld [vmem:[%s2 + $0x1f0] sm:$0xff]
        %v3709 = vld [vmem:[%s2 + $0x1f8] sm:$0xff]
        %v3710 = vld [vmem:[%s3] sm:$0xf]
        %v3712 = vperm.slane %v3710, 0
        %v3713 = vperm.slane %v3710, 1
        %v3714 = vperm.slane %v3710, 2
        %v3715 = vperm.slane %v3710, 3
        %v3784 = vunpack.c.l.b16 %v3646
        %v3785 = vunpack.c.h.b16 %v3646
        %v3786 = vunpack.c.l.b16 %v3647
        %v3787 = vunpack.c.h.b16 %v3647
        %v3788 = vunpack.c.l.b16 %v3648
        %v3789 = vunpack.c.h.b16 %v3648
        %v3790 = vunpack.c.l.b16 %v3649
        %v3791 = vunpack.c.h.b16 %v3649
        %v3792 = vunpack.c.l.b16 %v3650
        %v3793 = vunpack.c.h.b16 %v3650
        %v3794 = vunpack.c.l.b16 %v3651
        %v3795 = vunpack.c.h.b16 %v3651
        %v3796 = vunpack.c.l.b16 %v3652
        %v3797 = vunpack.c.h.b16 %v3652
        %v3798 = vunpack.c.l.b16 %v3653
        %v3799 = vunpack.c.h.b16 %v3653
        %v3800 = vunpack.c.l.b16 %v3654
        %v3801 = vunpack.c.h.b16 %v3654
        %v3802 = vunpack.c.l.b16 %v3655
        %v3803 = vunpack.c.h.b16 %v3655
        %v3804 = vunpack.c.l.b16 %v3656
        %v3805 = vunpack.c.h.b16 %v3656
        %v3806 = vunpack.c.l.b16 %v3657
        %v3807 = vunpack.c.h.b16 %v3657
        %v3808 = vunpack.c.l.b16 %v3658
        %v3809 = vunpack.c.h.b16 %v3658
        %v3810 = vunpack.c.l.b16 %v3659
        %v3811 = vunpack.c.h.b16 %v3659
        %v3812 = vunpack.c.l.b16 %v3660
        %v3813 = vunpack.c.h.b16 %v3660
        %v3814 = vunpack.c.l.b16 %v3661
        %v3815 = vunpack.c.h.b16 %v3661
        %v3816 = vunpack.c.l.b16 %v3662
        %v3817 = vunpack.c.h.b16 %v3662
        %v3818 = vunpack.c.l.b16 %v3663
        %v3819 = vunpack.c.h.b16 %v3663
        %v3820 = vunpack.c.l.b16 %v3664
        %v3821 = vunpack.c.h.b16 %v3664
        %v3822 = vunpack.c.l.b16 %v3665
        %v3823 = vunpack.c.h.b16 %v3665
        %v3824 = vunpack.c.l.b16 %v3666
        %v3825 = vunpack.c.h.b16 %v3666
        %v3826 = vunpack.c.l.b16 %v3667
        %v3827 = vunpack.c.h.b16 %v3667
        %v3828 = vunpack.c.l.b16 %v3668
        %v3829 = vunpack.c.h.b16 %v3668
        %v3830 = vunpack.c.l.b16 %v3669
        %v3831 = vunpack.c.h.b16 %v3669
        %v3832 = vunpack.c.l.b16 %v3670
        %v3833 = vunpack.c.h.b16 %v3670
        %v3834 = vunpack.c.l.b16 %v3671
        %v3835 = vunpack.c.h.b16 %v3671
        %v3836 = vunpack.c.l.b16 %v3672
        %v3837 = vunpack.c.h.b16 %v3672
        %v3838 = vunpack.c.l.b16 %v3673
        %v3839 = vunpack.c.h.b16 %v3673
        %v3840 = vunpack.c.l.b16 %v3674
        %v3841 = vunpack.c.h.b16 %v3674
        %v3842 = vunpack.c.l.b16 %v3675
        %v3843 = vunpack.c.h.b16 %v3675
        %v3844 = vunpack.c.l.b16 %v3676
        %v3845 = vunpack.c.h.b16 %v3676
        %v3846 = vunpack.c.l.b16 %v3677
        %v3847 = vunpack.c.h.b16 %v3677
        %v3848 = vunpack.c.l.b16 %v3678
        %v3849 = vunpack.c.h.b16 %v3678
        %v3850 = vunpack.c.l.b16 %v3679
        %v3851 = vunpack.c.h.b16 %v3679
        %v3852 = vunpack.c.l.b16 %v3680
        %v3853 = vunpack.c.h.b16 %v3680
        %v3854 = vunpack.c.l.b16 %v3681
        %v3855 = vunpack.c.h.b16 %v3681
        %v3856 = vunpack.c.l.b16 %v3682
        %v3857 = vunpack.c.h.b16 %v3682
        %v3858 = vunpack.c.l.b16 %v3683
        %v3859 = vunpack.c.h.b16 %v3683
        %v3860 = vunpack.c.l.b16 %v3684
        %v3861 = vunpack.c.h.b16 %v3684
        %v3862 = vunpack.c.l.b16 %v3685
        %v3863 = vunpack.c.h.b16 %v3685
        %v3864 = vunpack.c.l.b16 %v3686
        %v3865 = vunpack.c.h.b16 %v3686
        %v3866 = vunpack.c.l.b16 %v3687
        %v3867 = vunpack.c.h.b16 %v3687
        %v3868 = vunpack.c.l.b16 %v3688
        %v3869 = vunpack.c.h.b16 %v3688
        %v3870 = vunpack.c.l.b16 %v3689
        %v3871 = vunpack.c.h.b16 %v3689
        %v3872 = vunpack.c.l.b16 %v3690
        %v3873 = vunpack.c.h.b16 %v3690
        %v3874 = vunpack.c.l.b16 %v3691
        %v3875 = vunpack.c.h.b16 %v3691
        %v3876 = vunpack.c.l.b16 %v3692
        %v3877 = vunpack.c.h.b16 %v3692
        %v3878 = vunpack.c.l.b16 %v3693
        %v3879 = vunpack.c.h.b16 %v3693
        %v3880 = vunpack.c.l.b16 %v3694
        %v3881 = vunpack.c.h.b16 %v3694
        %v3882 = vunpack.c.l.b16 %v3695
        %v3883 = vunpack.c.h.b16 %v3695
        %v3884 = vunpack.c.l.b16 %v3696
        %v3885 = vunpack.c.h.b16 %v3696
        %v3886 = vunpack.c.l.b16 %v3697
        %v3887 = vunpack.c.h.b16 %v3697
        %v3888 = vunpack.c.l.b16 %v3698
        %v3889 = vunpack.c.h.b16 %v3698
        %v3890 = vunpack.c.l.b16 %v3699
        %v3891 = vunpack.c.h.b16 %v3699
        %v3892 = vunpack.c.l.b16 %v3700
        %v3893 = vunpack.c.h.b16 %v3700
        %v3894 = vunpack.c.l.b16 %v3701
        %v3895 = vunpack.c.h.b16 %v3701
        %v3896 = vunpack.c.l.b16 %v3702
        %v3897 = vunpack.c.h.b16 %v3702
        %v3898 = vunpack.c.l.b16 %v3703
        %v3899 = vunpack.c.h.b16 %v3703
        %v3900 = vunpack.c.l.b16 %v3704
        %v3901 = vunpack.c.h.b16 %v3704
        %v3902 = vunpack.c.l.b16 %v3705
        %v3903 = vunpack.c.h.b16 %v3705
        %v3904 = vunpack.c.l.b16 %v3706
        %v3905 = vunpack.c.h.b16 %v3706
        %v3906 = vunpack.c.l.b16 %v3707
        %v3907 = vunpack.c.h.b16 %v3707
        %v3908 = vunpack.c.l.b16 %v3708
        %v3909 = vunpack.c.h.b16 %v3708
        %v3910 = vunpack.c.l.b16 %v3709
        %v3911 = vunpack.c.h.b16 %v3709
        %v3912 = vpack.c.b16 %v3788, %v3784
        %v3913 = vpack.c.b16 %v3789, %v3785
        %v3914 = vpack.c.b16 %v3790, %v3786
        %v3915 = vpack.c.b16 %v3791, %v3787
        %v3916 = vpack.c.b16 %v3796, %v3792
        %v3917 = vpack.c.b16 %v3797, %v3793
        %v3918 = vpack.c.b16 %v3798, %v3794
        %v3919 = vpack.c.b16 %v3799, %v3795
        %v3920 = vpack.c.b16 %v3804, %v3800
        %v3921 = vpack.c.b16 %v3805, %v3801
        %v3922 = vpack.c.b16 %v3806, %v3802
        %v3923 = vpack.c.b16 %v3807, %v3803
        %v3924 = vpack.c.b16 %v3812, %v3808
        %v3925 = vpack.c.b16 %v3813, %v3809
        %v3926 = vpack.c.b16 %v3814, %v3810
        %v3927 = vpack.c.b16 %v3815, %v3811
        %v3928 = vpack.c.b16 %v3820, %v3816
        %v3929 = vpack.c.b16 %v3821, %v3817
        %v3930 = vpack.c.b16 %v3822, %v3818
        %v3931 = vpack.c.b16 %v3823, %v3819
        %v3932 = vpack.c.b16 %v3828, %v3824
        %v3933 = vpack.c.b16 %v3829, %v3825
        %v3934 = vpack.c.b16 %v3830, %v3826
        %v3935 = vpack.c.b16 %v3831, %v3827
        %v3936 = vpack.c.b16 %v3836, %v3832
        %v3937 = vpack.c.b16 %v3837, %v3833
        %v3938 = vpack.c.b16 %v3838, %v3834
        %v3939 = vpack.c.b16 %v3839, %v3835
        %v3940 = vpack.c.b16 %v3844, %v3840
        %v3941 = vpack.c.b16 %v3845, %v3841
        %v3942 = vpack.c.b16 %v3846, %v3842
        %v3943 = vpack.c.b16 %v3847, %v3843
        %v3944 = vpack.c.b16 %v3852, %v3848
        %v3945 = vpack.c.b16 %v3853, %v3849
        %v3946 = vpack.c.b16 %v3854, %v3850
        %v3947 = vpack.c.b16 %v3855, %v3851
        %v3948 = vpack.c.b16 %v3860, %v3856
        %v3949 = vpack.c.b16 %v3861, %v3857
        %v3950 = vpack.c.b16 %v3862, %v3858
        %v3951 = vpack.c.b16 %v3863, %v3859
        %v3952 = vpack.c.b16 %v3868, %v3864
        %v3953 = vpack.c.b16 %v3869, %v3865
        %v3954 = vpack.c.b16 %v3870, %v3866
        %v3955 = vpack.c.b16 %v3871, %v3867
        %v3956 = vpack.c.b16 %v3876, %v3872
        %v3957 = vpack.c.b16 %v3877, %v3873
        %v3958 = vpack.c.b16 %v3878, %v3874
        %v3959 = vpack.c.b16 %v3879, %v3875
        %v3960 = vpack.c.b16 %v3884, %v3880
        %v3961 = vpack.c.b16 %v3885, %v3881
        %v3962 = vpack.c.b16 %v3886, %v3882
        %v3963 = vpack.c.b16 %v3887, %v3883
        %v3964 = vpack.c.b16 %v3892, %v3888
        %v3965 = vpack.c.b16 %v3893, %v3889
        %v3966 = vpack.c.b16 %v3894, %v3890
        %v3967 = vpack.c.b16 %v3895, %v3891
        %v3968 = vpack.c.b16 %v3900, %v3896
        %v3969 = vpack.c.b16 %v3901, %v3897
        %v3970 = vpack.c.b16 %v3902, %v3898
        %v3971 = vpack.c.b16 %v3903, %v3899
        %v3972 = vpack.c.b16 %v3908, %v3904
        %v3973 = vpack.c.b16 %v3909, %v3905
        %v3974 = vpack.c.b16 %v3910, %v3906
        %v3975 = vpack.c.b16 %v3911, %v3907
        %4040 = vmatpush.bf16.msra.mxu0 %v3940
        %4041 = vmatpush.bf16.msra.mxu0 %v3936
        %4042 = vmatpush.bf16.msra.mxu0 %v3932
        %4043 = vmatpush.bf16.msra.mxu0 %v3928
        %4044 = vmatpush.bf16.msra.mxu0 %v3924
        %4045 = vmatpush.bf16.msra.mxu0 %v3920
        %4046 = vmatpush.bf16.msra.mxu0 %v3916
        %4047 = vmatpush.bf16.msra.mxu0 %v3912
        %4048 = vmatmul.bf16.gmra.mxu0 %v3644
        %v4049 = vpop.f32.mrf.mxu0
        %v4050 = vadd.f32 %v3712, %v4049
        %v4051 = vpop.f32.mrf.mxu0
        %4052 = vdwg.mxu0
        %4053 = vmatpush.bf16.msra.mxu0 %v3972
        %4054 = vmatpush.bf16.msra.mxu0 %v3968
        %4055 = vmatpush.bf16.msra.mxu0 %v3964
        %4056 = vmatpush.bf16.msra.mxu0 %v3960
        %4057 = vmatpush.bf16.msra.mxu0 %v3956
        %4058 = vmatpush.bf16.msra.mxu0 %v3952
        %4059 = vmatpush.bf16.msra.mxu0 %v3948
        %4060 = vmatpush.bf16.msra.mxu0 %v3944
        %4061 = vmatmul.bf16.gmra.mxu0 %v3645
        %v4062 = vpop.f32.mrf.mxu0
        %v4063 = vadd.f32 %v4050, %v4062
        %v4064 = vpop.f32.mrf.mxu0
        %4065 = vdwg.mxu0
        %4066 = vmatpush.bf16.msra.mxu0 %v3941
        %4067 = vmatpush.bf16.msra.mxu0 %v3937
        %4068 = vmatpush.bf16.msra.mxu0 %v3933
        %4069 = vmatpush.bf16.msra.mxu0 %v3929
        %4070 = vmatpush.bf16.msra.mxu0 %v3925
        %4071 = vmatpush.bf16.msra.mxu0 %v3921
        %4072 = vmatpush.bf16.msra.mxu0 %v3917
        %4073 = vmatpush.bf16.msra.mxu0 %v3913
        %4074 = vmatmul.bf16.gmra.mxu0 %v3644
        %v4075 = vpop.f32.mrf.mxu0
        %v4076 = vadd.f32 %v3713, %v4075
        %v4077 = vpop.f32.mrf.mxu0
        %4078 = vdwg.mxu0
        %4079 = vmatpush.bf16.msra.mxu0 %v3973
        %4080 = vmatpush.bf16.msra.mxu0 %v3969
        %4081 = vmatpush.bf16.msra.mxu0 %v3965
        %4082 = vmatpush.bf16.msra.mxu0 %v3961
        %4083 = vmatpush.bf16.msra.mxu0 %v3957
        %4084 = vmatpush.bf16.msra.mxu0 %v3953
        %4085 = vmatpush.bf16.msra.mxu0 %v3949
        %4086 = vmatpush.bf16.msra.mxu0 %v3945
        %4087 = vmatmul.bf16.gmra.mxu0 %v3645
        %v4088 = vpop.f32.mrf.mxu0
        %v4089 = vadd.f32 %v4076, %v4088
        %v4090 = vpop.f32.mrf.mxu0
        %4091 = vdwg.mxu0
        %4092 = vmatpush.bf16.msra.mxu0 %v3942
        %4093 = vmatpush.bf16.msra.mxu0 %v3938
        %4094 = vmatpush.bf16.msra.mxu0 %v3934
        %4095 = vmatpush.bf16.msra.mxu0 %v3930
        %4096 = vmatpush.bf16.msra.mxu0 %v3926
        %4097 = vmatpush.bf16.msra.mxu0 %v3922
        %4098 = vmatpush.bf16.msra.mxu0 %v3918
        %4099 = vmatpush.bf16.msra.mxu0 %v3914
        %4100 = vmatmul.bf16.gmra.mxu0 %v3644
        %v4101 = vpop.f32.mrf.mxu0
        %v4102 = vadd.f32 %v3714, %v4101
        %v4103 = vpop.f32.mrf.mxu0
        %4104 = vdwg.mxu0
        %4105 = vmatpush.bf16.msra.mxu0 %v3974
        %4106 = vmatpush.bf16.msra.mxu0 %v3970
        %4107 = vmatpush.bf16.msra.mxu0 %v3966
        %4108 = vmatpush.bf16.msra.mxu0 %v3962
        %4109 = vmatpush.bf16.msra.mxu0 %v3958
        %4110 = vmatpush.bf16.msra.mxu0 %v3954
        %4111 = vmatpush.bf16.msra.mxu0 %v3950
        %4112 = vmatpush.bf16.msra.mxu0 %v3946
        %4113 = vmatmul.bf16.gmra.mxu0 %v3645
        %v4114 = vpop.f32.mrf.mxu0
        %v4115 = vadd.f32 %v4102, %v4114
        %v4116 = vpop.f32.mrf.mxu0
        %4117 = vdwg.mxu0
        %4118 = vmatpush.bf16.msra.mxu0 %v3943
        %4119 = vmatpush.bf16.msra.mxu0 %v3939
        %4120 = vmatpush.bf16.msra.mxu0 %v3935
        %4121 = vmatpush.bf16.msra.mxu0 %v3931
        %4122 = vmatpush.bf16.msra.mxu0 %v3927
        %4123 = vmatpush.bf16.msra.mxu0 %v3923
        %4124 = vmatpush.bf16.msra.mxu0 %v3919
        %4125 = vmatpush.bf16.msra.mxu0 %v3915
        %4126 = vmatmul.bf16.gmra.mxu0 %v3644
        %v4127 = vpop.f32.mrf.mxu0
        %v4128 = vadd.f32 %v3715, %v4127
        %v4129 = vpop.f32.mrf.mxu0
        %4130 = vdwg.mxu0
        %4131 = vmatpush.bf16.msra.mxu0 %v3975
        %4132 = vmatpush.bf16.msra.mxu0 %v3971
        %4133 = vmatpush.bf16.msra.mxu0 %v3967
        %4134 = vmatpush.bf16.msra.mxu0 %v3963
        %4135 = vmatpush.bf16.msra.mxu0 %v3959
        %4136 = vmatpush.bf16.msra.mxu0 %v3955
        %4137 = vmatpush.bf16.msra.mxu0 %v3951
        %4138 = vmatpush.bf16.msra.mxu0 %v3947
        %4139 = vmatmul.bf16.gmra.mxu0 %v3645
        %v4140 = vpop.f32.mrf.mxu0
        %v4141 = vadd.f32 %v4128, %v4140
        %v4142 = vpop.f32.mrf.mxu0
        %4143 = vdwg.mxu0
        %v4144 = vxor.u32 %v4063, 2147483648
        %v4145 = vmul.f32 %v4144, 1.442695
        %v4146 = vpow.pop %v4145
        %v4147 = vadd.f32 %v4146, 1.0
        %v4148 = vrcp.pop %v4147
        %v4149 = vmul.f32 %v4147, %v4148
        %v4150 = vsub.f32 1.0, %v4149
        %v4151 = vmul.f32 %v4148, %v4150
        %v4152 = vadd.f32 %v4148, %v4151
        %vm4153 = vweird.f32 %v4147
        %vm4154 = vweird.f32 %v4148
        %vm4155 = vmor %vm4153, %vm4154
        %v4156 = vsel %vm4155, %v4148, %v4152
        %v4157 = vand.u32 2147483647, %v4147
        %vm4158 = vcmp.eq.f32.partialorder %v4157, 8.507059e+37
        %v4159 = vand.u32 %v4147, 2147483648
        %v4160 = vor.u32 1.1754944e-38, %v4159
        %v4161 = vsel %vm4158, %v4160, %v4156
        %v4162 = vmul.f32 1.0, %v4161
        %v4163 = vxor.u32 %v4089, 2147483648
        %v4164 = vmul.f32 %v4163, 1.442695
        %v4165 = vpow.pop %v4164
        %v4166 = vadd.f32 %v4165, 1.0
        %v4167 = vrcp.pop %v4166
        %v4168 = vmul.f32 %v4166, %v4167
        %v4169 = vsub.f32 1.0, %v4168
        %v4170 = vmul.f32 %v4167, %v4169
        %v4171 = vadd.f32 %v4167, %v4170
        %vm4172 = vweird.f32 %v4166
        %vm4173 = vweird.f32 %v4167
        %vm4174 = vmor %vm4172, %vm4173
        %v4175 = vsel %vm4174, %v4167, %v4171
        %v4176 = vand.u32 2147483647, %v4166
        %vm4177 = vcmp.eq.f32.partialorder %v4176, 8.507059e+37
        %v4178 = vand.u32 %v4166, 2147483648
        %v4179 = vor.u32 1.1754944e-38, %v4178
        %v4180 = vsel %vm4177, %v4179, %v4175
        %v4181 = vmul.f32 1.0, %v4180
        %v4182 = vmul.f32 %v4162, %v4141
        %v4183 = vadd.f32 %v4115, %v4182
        %v4184 = vtanh.pop %v4183
        %v4185 = vsub.f32 1.0, %v4181
        %v4186 = vmul.f32 %v4185, %v4184
        %v4187 = vmul.f32 %v4181, %v3643
        %v4188 = vadd.f32 %v4186, %v4187
        %4189 = vst [vmem:[#allocation2] sm:$0xff] %v4188
        %s4190 = scalar_lea.vmem %s374, 48
        %v4191 = vld [vmem:[%s4190] sm:$0xff]
        %4192 = vset.pattern.permute.xlu0 0
        %4193 = vperm.xlu0 %4192, %v4191
        %v4194 = vpop.permute.xlu0 %4193
        %vm4195 = vcmp.eq.s32.totalorder %v392, %v4194
        %v4196 = vsel %vm4195, 1, 0
        %v4197 = vcvt.s32.f32 %v4196
        %v4198 = vpack.c.bf16 %v4197, %v4197
        %v4199 = vld [vmem:[%s1] sm:$0xf]
        %v4200 = vld [vmem:[%s1 + $0x4] sm:$0xf]
        %v4201 = vld [vmem:[%s1 + $0x8] sm:$0xf]
        %v4202 = vld [vmem:[%s1 + $0xc] sm:$0xf]
        %v4203 = vld [vmem:[%s1 + $0x10] sm:$0xf]
        %v4204 = vld [vmem:[%s1 + $0x14] sm:$0xf]
        %v4205 = vld [vmem:[%s1 + $0x18] sm:$0xf]
        %v4206 = vld [vmem:[%s1 + $0x1c] sm:$0xf]
        %v4207 = vld [vmem:[%s1 + $0x20] sm:$0xf]
        %v4208 = vld [vmem:[%s1 + $0x24] sm:$0xf]
        %v4209 = vld [vmem:[%s1 + $0x28] sm:$0xf]
        %v4210 = vld [vmem:[%s1 + $0x2c] sm:$0xf]
        %v4211 = vld [vmem:[%s1 + $0x30] sm:$0xf]
        %v4212 = vld [vmem:[%s1 + $0x34] sm:$0xf]
        %v4213 = vld [vmem:[%s1 + $0x38] sm:$0xf]
        %v4214 = vld [vmem:[%s1 + $0x3c] sm:$0xf]
        %v4231 = vunpack.c.l.b16 %v4199
        %v4232 = vunpack.c.l.b16 %v4200
        %v4233 = vunpack.c.l.b16 %v4201
        %v4234 = vunpack.c.l.b16 %v4202
        %v4235 = vunpack.c.l.b16 %v4203
        %v4236 = vunpack.c.l.b16 %v4204
        %v4237 = vunpack.c.l.b16 %v4205
        %v4238 = vunpack.c.l.b16 %v4206
        %v4239 = vunpack.c.l.b16 %v4207
        %v4240 = vunpack.c.l.b16 %v4208
        %v4241 = vunpack.c.l.b16 %v4209
        %v4242 = vunpack.c.l.b16 %v4210
        %v4243 = vunpack.c.l.b16 %v4211
        %v4244 = vunpack.c.l.b16 %v4212
        %v4245 = vunpack.c.l.b16 %v4213
        %v4246 = vunpack.c.l.b16 %v4214
        %v4247 = vpack.c.b16 %v4232, %v4231
        %v4248 = vpack.c.b16 %v4234, %v4233
        %v4249 = vpack.c.b16 %v4236, %v4235
        %v4250 = vpack.c.b16 %v4238, %v4237
        %v4251 = vpack.c.b16 %v4240, %v4239
        %v4252 = vpack.c.b16 %v4242, %v4241
        %v4253 = vpack.c.b16 %v4244, %v4243
        %v4254 = vpack.c.b16 %v4246, %v4245
        %4263 = vmatpush.bf16.msra.mxu0 %v4254
        %4264 = vmatpush.bf16.msra.mxu0 %v4253
        %4265 = vmatpush.bf16.msra.mxu0 %v4252
        %4266 = vmatpush.bf16.msra.mxu0 %v4251
        %4267 = vmatpush.bf16.msra.mxu0 %v4250
        %4268 = vmatpush.bf16.msra.mxu0 %v4249
        %4269 = vmatpush.bf16.msra.mxu0 %v4248
        %4270 = vmatpush.bf16.msra.mxu0 %v4247
        %4271 = vmatmul.bf16.gmra.mxu0 %v4198
        %v4272 = vpop.f32.mrf.mxu0
        %v4273 = vadd.f32 0.0, %v4272
        %v4274 = vpop.f32.mrf.mxu0
        %4275 = vdwg.mxu0
        %v4276 = vld [vmem:[#allocation2] sm:$0xff]
        %v4277 = vpack.c.bf16 %v4273, %v4273
        %v4278 = vpack.c.bf16 %v4276, %v4276
        %v4279 = vld [vmem:[%s2] sm:$0xff]
        %v4280 = vld [vmem:[%s2 + $0x8] sm:$0xff]
        %v4281 = vld [vmem:[%s2 + $0x10] sm:$0xff]
        %v4282 = vld [vmem:[%s2 + $0x18] sm:$0xff]
        %v4283 = vld [vmem:[%s2 + $0x20] sm:$0xff]
        %v4284 = vld [vmem:[%s2 + $0x28] sm:$0xff]
        %v4285 = vld [vmem:[%s2 + $0x30] sm:$0xff]
        %v4286 = vld [vmem:[%s2 + $0x38] sm:$0xff]
        %v4287 = vld [vmem:[%s2 + $0x40] sm:$0xff]
        %v4288 = vld [vmem:[%s2 + $0x48] sm:$0xff]
        %v4289 = vld [vmem:[%s2 + $0x50] sm:$0xff]
        %v4290 = vld [vmem:[%s2 + $0x58] sm:$0xff]
        %v4291 = vld [vmem:[%s2 + $0x60] sm:$0xff]
        %v4292 = vld [vmem:[%s2 + $0x68] sm:$0xff]
        %v4293 = vld [vmem:[%s2 + $0x70] sm:$0xff]
        %v4294 = vld [vmem:[%s2 + $0x78] sm:$0xff]
        %v4295 = vld [vmem:[%s2 + $0x80] sm:$0xff]
        %v4296 = vld [vmem:[%s2 + $0x88] sm:$0xff]
        %v4297 = vld [vmem:[%s2 + $0x90] sm:$0xff]
        %v4298 = vld [vmem:[%s2 + $0x98] sm:$0xff]
        %v4299 = vld [vmem:[%s2 + $0xa0] sm:$0xff]
        %v4300 = vld [vmem:[%s2 + $0xa8] sm:$0xff]
        %v4301 = vld [vmem:[%s2 + $0xb0] sm:$0xff]
        %v4302 = vld [vmem:[%s2 + $0xb8] sm:$0xff]
        %v4303 = vld [vmem:[%s2 + $0xc0] sm:$0xff]
        %v4304 = vld [vmem:[%s2 + $0xc8] sm:$0xff]
        %v4305 = vld [vmem:[%s2 + $0xd0] sm:$0xff]
        %v4306 = vld [vmem:[%s2 + $0xd8] sm:$0xff]
        %v4307 = vld [vmem:[%s2 + $0xe0] sm:$0xff]
        %v4308 = vld [vmem:[%s2 + $0xe8] sm:$0xff]
        %v4309 = vld [vmem:[%s2 + $0xf0] sm:$0xff]
        %v4310 = vld [vmem:[%s2 + $0xf8] sm:$0xff]
        %v4311 = vld [vmem:[%s2 + $0x100] sm:$0xff]
        %v4312 = vld [vmem:[%s2 + $0x108] sm:$0xff]
        %v4313 = vld [vmem:[%s2 + $0x110] sm:$0xff]
        %v4314 = vld [vmem:[%s2 + $0x118] sm:$0xff]
        %v4315 = vld [vmem:[%s2 + $0x120] sm:$0xff]
        %v4316 = vld [vmem:[%s2 + $0x128] sm:$0xff]
        %v4317 = vld [vmem:[%s2 + $0x130] sm:$0xff]
        %v4318 = vld [vmem:[%s2 + $0x138] sm:$0xff]
        %v4319 = vld [vmem:[%s2 + $0x140] sm:$0xff]
        %v4320 = vld [vmem:[%s2 + $0x148] sm:$0xff]
        %v4321 = vld [vmem:[%s2 + $0x150] sm:$0xff]
        %v4322 = vld [vmem:[%s2 + $0x158] sm:$0xff]
        %v4323 = vld [vmem:[%s2 + $0x160] sm:$0xff]
        %v4324 = vld [vmem:[%s2 + $0x168] sm:$0xff]
        %v4325 = vld [vmem:[%s2 + $0x170] sm:$0xff]
        %v4326 = vld [vmem:[%s2 + $0x178] sm:$0xff]
        %v4327 = vld [vmem:[%s2 + $0x180] sm:$0xff]
        %v4328 = vld [vmem:[%s2 + $0x188] sm:$0xff]
        %v4329 = vld [vmem:[%s2 + $0x190] sm:$0xff]
        %v4330 = vld [vmem:[%s2 + $0x198] sm:$0xff]
        %v4331 = vld [vmem:[%s2 + $0x1a0] sm:$0xff]
        %v4332 = vld [vmem:[%s2 + $0x1a8] sm:$0xff]
        %v4333 = vld [vmem:[%s2 + $0x1b0] sm:$0xff]
        %v4334 = vld [vmem:[%s2 + $0x1b8] sm:$0xff]
        %v4335 = vld [vmem:[%s2 + $0x1c0] sm:$0xff]
        %v4336 = vld [vmem:[%s2 + $0x1c8] sm:$0xff]
        %v4337 = vld [vmem:[%s2 + $0x1d0] sm:$0xff]
        %v4338 = vld [vmem:[%s2 + $0x1d8] sm:$0xff]
        %v4339 = vld [vmem:[%s2 + $0x1e0] sm:$0xff]
        %v4340 = vld [vmem:[%s2 + $0x1e8] sm:$0xff]
        %v4341 = vld [vmem:[%s2 + $0x1f0] sm:$0xff]
        %v4342 = vld [vmem:[%s2 + $0x1f8] sm:$0xff]
        %v4343 = vld [vmem:[%s3] sm:$0xf]
        %v4345 = vperm.slane %v4343, 0
        %v4346 = vperm.slane %v4343, 1
        %v4347 = vperm.slane %v4343, 2
        %v4348 = vperm.slane %v4343, 3
        %v4417 = vunpack.c.l.b16 %v4279
        %v4418 = vunpack.c.h.b16 %v4279
        %v4419 = vunpack.c.l.b16 %v4280
        %v4420 = vunpack.c.h.b16 %v4280
        %v4421 = vunpack.c.l.b16 %v4281
        %v4422 = vunpack.c.h.b16 %v4281
        %v4423 = vunpack.c.l.b16 %v4282
        %v4424 = vunpack.c.h.b16 %v4282
        %v4425 = vunpack.c.l.b16 %v4283
        %v4426 = vunpack.c.h.b16 %v4283
        %v4427 = vunpack.c.l.b16 %v4284
        %v4428 = vunpack.c.h.b16 %v4284
        %v4429 = vunpack.c.l.b16 %v4285
        %v4430 = vunpack.c.h.b16 %v4285
        %v4431 = vunpack.c.l.b16 %v4286
        %v4432 = vunpack.c.h.b16 %v4286
        %v4433 = vunpack.c.l.b16 %v4287
        %v4434 = vunpack.c.h.b16 %v4287
        %v4435 = vunpack.c.l.b16 %v4288
        %v4436 = vunpack.c.h.b16 %v4288
        %v4437 = vunpack.c.l.b16 %v4289
        %v4438 = vunpack.c.h.b16 %v4289
        %v4439 = vunpack.c.l.b16 %v4290
        %v4440 = vunpack.c.h.b16 %v4290
        %v4441 = vunpack.c.l.b16 %v4291
        %v4442 = vunpack.c.h.b16 %v4291
        %v4443 = vunpack.c.l.b16 %v4292
        %v4444 = vunpack.c.h.b16 %v4292
        %v4445 = vunpack.c.l.b16 %v4293
        %v4446 = vunpack.c.h.b16 %v4293
        %v4447 = vunpack.c.l.b16 %v4294
        %v4448 = vunpack.c.h.b16 %v4294
        %v4449 = vunpack.c.l.b16 %v4295
        %v4450 = vunpack.c.h.b16 %v4295
        %v4451 = vunpack.c.l.b16 %v4296
        %v4452 = vunpack.c.h.b16 %v4296
        %v4453 = vunpack.c.l.b16 %v4297
        %v4454 = vunpack.c.h.b16 %v4297
        %v4455 = vunpack.c.l.b16 %v4298
        %v4456 = vunpack.c.h.b16 %v4298
        %v4457 = vunpack.c.l.b16 %v4299
        %v4458 = vunpack.c.h.b16 %v4299
        %v4459 = vunpack.c.l.b16 %v4300
        %v4460 = vunpack.c.h.b16 %v4300
        %v4461 = vunpack.c.l.b16 %v4301
        %v4462 = vunpack.c.h.b16 %v4301
        %v4463 = vunpack.c.l.b16 %v4302
        %v4464 = vunpack.c.h.b16 %v4302
        %v4465 = vunpack.c.l.b16 %v4303
        %v4466 = vunpack.c.h.b16 %v4303
        %v4467 = vunpack.c.l.b16 %v4304
        %v4468 = vunpack.c.h.b16 %v4304
        %v4469 = vunpack.c.l.b16 %v4305
        %v4470 = vunpack.c.h.b16 %v4305
        %v4471 = vunpack.c.l.b16 %v4306
        %v4472 = vunpack.c.h.b16 %v4306
        %v4473 = vunpack.c.l.b16 %v4307
        %v4474 = vunpack.c.h.b16 %v4307
        %v4475 = vunpack.c.l.b16 %v4308
        %v4476 = vunpack.c.h.b16 %v4308
        %v4477 = vunpack.c.l.b16 %v4309
        %v4478 = vunpack.c.h.b16 %v4309
        %v4479 = vunpack.c.l.b16 %v4310
        %v4480 = vunpack.c.h.b16 %v4310
        %v4481 = vunpack.c.l.b16 %v4311
        %v4482 = vunpack.c.h.b16 %v4311
        %v4483 = vunpack.c.l.b16 %v4312
        %v4484 = vunpack.c.h.b16 %v4312
        %v4485 = vunpack.c.l.b16 %v4313
        %v4486 = vunpack.c.h.b16 %v4313
        %v4487 = vunpack.c.l.b16 %v4314
        %v4488 = vunpack.c.h.b16 %v4314
        %v4489 = vunpack.c.l.b16 %v4315
        %v4490 = vunpack.c.h.b16 %v4315
        %v4491 = vunpack.c.l.b16 %v4316
        %v4492 = vunpack.c.h.b16 %v4316
        %v4493 = vunpack.c.l.b16 %v4317
        %v4494 = vunpack.c.h.b16 %v4317
        %v4495 = vunpack.c.l.b16 %v4318
        %v4496 = vunpack.c.h.b16 %v4318
        %v4497 = vunpack.c.l.b16 %v4319
        %v4498 = vunpack.c.h.b16 %v4319
        %v4499 = vunpack.c.l.b16 %v4320
        %v4500 = vunpack.c.h.b16 %v4320
        %v4501 = vunpack.c.l.b16 %v4321
        %v4502 = vunpack.c.h.b16 %v4321
        %v4503 = vunpack.c.l.b16 %v4322
        %v4504 = vunpack.c.h.b16 %v4322
        %v4505 = vunpack.c.l.b16 %v4323
        %v4506 = vunpack.c.h.b16 %v4323
        %v4507 = vunpack.c.l.b16 %v4324
        %v4508 = vunpack.c.h.b16 %v4324
        %v4509 = vunpack.c.l.b16 %v4325
        %v4510 = vunpack.c.h.b16 %v4325
        %v4511 = vunpack.c.l.b16 %v4326
        %v4512 = vunpack.c.h.b16 %v4326
        %v4513 = vunpack.c.l.b16 %v4327
        %v4514 = vunpack.c.h.b16 %v4327
        %v4515 = vunpack.c.l.b16 %v4328
        %v4516 = vunpack.c.h.b16 %v4328
        %v4517 = vunpack.c.l.b16 %v4329
        %v4518 = vunpack.c.h.b16 %v4329
        %v4519 = vunpack.c.l.b16 %v4330
        %v4520 = vunpack.c.h.b16 %v4330
        %v4521 = vunpack.c.l.b16 %v4331
        %v4522 = vunpack.c.h.b16 %v4331
        %v4523 = vunpack.c.l.b16 %v4332
        %v4524 = vunpack.c.h.b16 %v4332
        %v4525 = vunpack.c.l.b16 %v4333
        %v4526 = vunpack.c.h.b16 %v4333
        %v4527 = vunpack.c.l.b16 %v4334
        %v4528 = vunpack.c.h.b16 %v4334
        %v4529 = vunpack.c.l.b16 %v4335
        %v4530 = vunpack.c.h.b16 %v4335
        %v4531 = vunpack.c.l.b16 %v4336
        %v4532 = vunpack.c.h.b16 %v4336
        %v4533 = vunpack.c.l.b16 %v4337
        %v4534 = vunpack.c.h.b16 %v4337
        %v4535 = vunpack.c.l.b16 %v4338
        %v4536 = vunpack.c.h.b16 %v4338
        %v4537 = vunpack.c.l.b16 %v4339
        %v4538 = vunpack.c.h.b16 %v4339
        %v4539 = vunpack.c.l.b16 %v4340
        %v4540 = vunpack.c.h.b16 %v4340
        %v4541 = vunpack.c.l.b16 %v4341
        %v4542 = vunpack.c.h.b16 %v4341
        %v4543 = vunpack.c.l.b16 %v4342
        %v4544 = vunpack.c.h.b16 %v4342
        %v4545 = vpack.c.b16 %v4421, %v4417
        %v4546 = vpack.c.b16 %v4422, %v4418
        %v4547 = vpack.c.b16 %v4423, %v4419
        %v4548 = vpack.c.b16 %v4424, %v4420
        %v4549 = vpack.c.b16 %v4429, %v4425
        %v4550 = vpack.c.b16 %v4430, %v4426
        %v4551 = vpack.c.b16 %v4431, %v4427
        %v4552 = vpack.c.b16 %v4432, %v4428
        %v4553 = vpack.c.b16 %v4437, %v4433
        %v4554 = vpack.c.b16 %v4438, %v4434
        %v4555 = vpack.c.b16 %v4439, %v4435
        %v4556 = vpack.c.b16 %v4440, %v4436
        %v4557 = vpack.c.b16 %v4445, %v4441
        %v4558 = vpack.c.b16 %v4446, %v4442
        %v4559 = vpack.c.b16 %v4447, %v4443
        %v4560 = vpack.c.b16 %v4448, %v4444
        %v4561 = vpack.c.b16 %v4453, %v4449
        %v4562 = vpack.c.b16 %v4454, %v4450
        %v4563 = vpack.c.b16 %v4455, %v4451
        %v4564 = vpack.c.b16 %v4456, %v4452
        %v4565 = vpack.c.b16 %v4461, %v4457
        %v4566 = vpack.c.b16 %v4462, %v4458
        %v4567 = vpack.c.b16 %v4463, %v4459
        %v4568 = vpack.c.b16 %v4464, %v4460
        %v4569 = vpack.c.b16 %v4469, %v4465
        %v4570 = vpack.c.b16 %v4470, %v4466
        %v4571 = vpack.c.b16 %v4471, %v4467
        %v4572 = vpack.c.b16 %v4472, %v4468
        %v4573 = vpack.c.b16 %v4477, %v4473
        %v4574 = vpack.c.b16 %v4478, %v4474
        %v4575 = vpack.c.b16 %v4479, %v4475
        %v4576 = vpack.c.b16 %v4480, %v4476
        %v4577 = vpack.c.b16 %v4485, %v4481
        %v4578 = vpack.c.b16 %v4486, %v4482
        %v4579 = vpack.c.b16 %v4487, %v4483
        %v4580 = vpack.c.b16 %v4488, %v4484
        %v4581 = vpack.c.b16 %v4493, %v4489
        %v4582 = vpack.c.b16 %v4494, %v4490
        %v4583 = vpack.c.b16 %v4495, %v4491
        %v4584 = vpack.c.b16 %v4496, %v4492
        %v4585 = vpack.c.b16 %v4501, %v4497
        %v4586 = vpack.c.b16 %v4502, %v4498
        %v4587 = vpack.c.b16 %v4503, %v4499
        %v4588 = vpack.c.b16 %v4504, %v4500
        %v4589 = vpack.c.b16 %v4509, %v4505
        %v4590 = vpack.c.b16 %v4510, %v4506
        %v4591 = vpack.c.b16 %v4511, %v4507
        %v4592 = vpack.c.b16 %v4512, %v4508
        %v4593 = vpack.c.b16 %v4517, %v4513
        %v4594 = vpack.c.b16 %v4518, %v4514
        %v4595 = vpack.c.b16 %v4519, %v4515
        %v4596 = vpack.c.b16 %v4520, %v4516
        %v4597 = vpack.c.b16 %v4525, %v4521
        %v4598 = vpack.c.b16 %v4526, %v4522
        %v4599 = vpack.c.b16 %v4527, %v4523
        %v4600 = vpack.c.b16 %v4528, %v4524
        %v4601 = vpack.c.b16 %v4533, %v4529
        %v4602 = vpack.c.b16 %v4534, %v4530
        %v4603 = vpack.c.b16 %v4535, %v4531
        %v4604 = vpack.c.b16 %v4536, %v4532
        %v4605 = vpack.c.b16 %v4541, %v4537
        %v4606 = vpack.c.b16 %v4542, %v4538
        %v4607 = vpack.c.b16 %v4543, %v4539
        %v4608 = vpack.c.b16 %v4544, %v4540
        %4673 = vmatpush.bf16.msra.mxu0 %v4573
        %4674 = vmatpush.bf16.msra.mxu0 %v4569
        %4675 = vmatpush.bf16.msra.mxu0 %v4565
        %4676 = vmatpush.bf16.msra.mxu0 %v4561
        %4677 = vmatpush.bf16.msra.mxu0 %v4557
        %4678 = vmatpush.bf16.msra.mxu0 %v4553
        %4679 = vmatpush.bf16.msra.mxu0 %v4549
        %4680 = vmatpush.bf16.msra.mxu0 %v4545
        %4681 = vmatmul.bf16.gmra.mxu0 %v4277
        %v4682 = vpop.f32.mrf.mxu0
        %v4683 = vadd.f32 %v4345, %v4682
        %v4684 = vpop.f32.mrf.mxu0
        %4685 = vdwg.mxu0
        %4686 = vmatpush.bf16.msra.mxu0 %v4605
        %4687 = vmatpush.bf16.msra.mxu0 %v4601
        %4688 = vmatpush.bf16.msra.mxu0 %v4597
        %4689 = vmatpush.bf16.msra.mxu0 %v4593
        %4690 = vmatpush.bf16.msra.mxu0 %v4589
        %4691 = vmatpush.bf16.msra.mxu0 %v4585
        %4692 = vmatpush.bf16.msra.mxu0 %v4581
        %4693 = vmatpush.bf16.msra.mxu0 %v4577
        %4694 = vmatmul.bf16.gmra.mxu0 %v4278
        %v4695 = vpop.f32.mrf.mxu0
        %v4696 = vadd.f32 %v4683, %v4695
        %v4697 = vpop.f32.mrf.mxu0
        %4698 = vdwg.mxu0
        %4699 = vmatpush.bf16.msra.mxu0 %v4574
        %4700 = vmatpush.bf16.msra.mxu0 %v4570
        %4701 = vmatpush.bf16.msra.mxu0 %v4566
        %4702 = vmatpush.bf16.msra.mxu0 %v4562
        %4703 = vmatpush.bf16.msra.mxu0 %v4558
        %4704 = vmatpush.bf16.msra.mxu0 %v4554
        %4705 = vmatpush.bf16.msra.mxu0 %v4550
        %4706 = vmatpush.bf16.msra.mxu0 %v4546
        %4707 = vmatmul.bf16.gmra.mxu0 %v4277
        %v4708 = vpop.f32.mrf.mxu0
        %v4709 = vadd.f32 %v4346, %v4708
        %v4710 = vpop.f32.mrf.mxu0
        %4711 = vdwg.mxu0
        %4712 = vmatpush.bf16.msra.mxu0 %v4606
        %4713 = vmatpush.bf16.msra.mxu0 %v4602
        %4714 = vmatpush.bf16.msra.mxu0 %v4598
        %4715 = vmatpush.bf16.msra.mxu0 %v4594
        %4716 = vmatpush.bf16.msra.mxu0 %v4590
        %4717 = vmatpush.bf16.msra.mxu0 %v4586
        %4718 = vmatpush.bf16.msra.mxu0 %v4582
        %4719 = vmatpush.bf16.msra.mxu0 %v4578
        %4720 = vmatmul.bf16.gmra.mxu0 %v4278
        %v4721 = vpop.f32.mrf.mxu0
        %v4722 = vadd.f32 %v4709, %v4721
        %v4723 = vpop.f32.mrf.mxu0
        %4724 = vdwg.mxu0
        %4725 = vmatpush.bf16.msra.mxu0 %v4575
        %4726 = vmatpush.bf16.msra.mxu0 %v4571
        %4727 = vmatpush.bf16.msra.mxu0 %v4567
        %4728 = vmatpush.bf16.msra.mxu0 %v4563
        %4729 = vmatpush.bf16.msra.mxu0 %v4559
        %4730 = vmatpush.bf16.msra.mxu0 %v4555
        %4731 = vmatpush.bf16.msra.mxu0 %v4551
        %4732 = vmatpush.bf16.msra.mxu0 %v4547
        %4733 = vmatmul.bf16.gmra.mxu0 %v4277
        %v4734 = vpop.f32.mrf.mxu0
        %v4735 = vadd.f32 %v4347, %v4734
        %v4736 = vpop.f32.mrf.mxu0
        %4737 = vdwg.mxu0
        %4738 = vmatpush.bf16.msra.mxu0 %v4607
        %4739 = vmatpush.bf16.msra.mxu0 %v4603
        %4740 = vmatpush.bf16.msra.mxu0 %v4599
        %4741 = vmatpush.bf16.msra.mxu0 %v4595
        %4742 = vmatpush.bf16.msra.mxu0 %v4591
        %4743 = vmatpush.bf16.msra.mxu0 %v4587
        %4744 = vmatpush.bf16.msra.mxu0 %v4583
        %4745 = vmatpush.bf16.msra.mxu0 %v4579
        %4746 = vmatmul.bf16.gmra.mxu0 %v4278
        %v4747 = vpop.f32.mrf.mxu0
        %v4748 = vadd.f32 %v4735, %v4747
        %v4749 = vpop.f32.mrf.mxu0
        %4750 = vdwg.mxu0
        %4751 = vmatpush.bf16.msra.mxu0 %v4576
        %4752 = vmatpush.bf16.msra.mxu0 %v4572
        %4753 = vmatpush.bf16.msra.mxu0 %v4568
        %4754 = vmatpush.bf16.msra.mxu0 %v4564
        %4755 = vmatpush.bf16.msra.mxu0 %v4560
        %4756 = vmatpush.bf16.msra.mxu0 %v4556
        %4757 = vmatpush.bf16.msra.mxu0 %v4552
        %4758 = vmatpush.bf16.msra.mxu0 %v4548
        %4759 = vmatmul.bf16.gmra.mxu0 %v4277
        %v4760 = vpop.f32.mrf.mxu0
        %v4761 = vadd.f32 %v4348, %v4760
        %v4762 = vpop.f32.mrf.mxu0
        %4763 = vdwg.mxu0
        %4764 = vmatpush.bf16.msra.mxu0 %v4608
        %4765 = vmatpush.bf16.msra.mxu0 %v4604
        %4766 = vmatpush.bf16.msra.mxu0 %v4600
        %4767 = vmatpush.bf16.msra.mxu0 %v4596
        %4768 = vmatpush.bf16.msra.mxu0 %v4592
        %4769 = vmatpush.bf16.msra.mxu0 %v4588
        %4770 = vmatpush.bf16.msra.mxu0 %v4584
        %4771 = vmatpush.bf16.msra.mxu0 %v4580
        %4772 = vmatmul.bf16.gmra.mxu0 %v4278
        %v4773 = vpop.f32.mrf.mxu0
        %v4774 = vadd.f32 %v4761, %v4773
        %v4775 = vpop.f32.mrf.mxu0
        %4776 = vdwg.mxu0
        %v4777 = vxor.u32 %v4696, 2147483648
        %v4778 = vmul.f32 %v4777, 1.442695
        %v4779 = vpow.pop %v4778
        %v4780 = vadd.f32 %v4779, 1.0
        %v4781 = vrcp.pop %v4780
        %v4782 = vmul.f32 %v4780, %v4781
        %v4783 = vsub.f32 1.0, %v4782
        %v4784 = vmul.f32 %v4781, %v4783
        %v4785 = vadd.f32 %v4781, %v4784
        %vm4786 = vweird.f32 %v4780
        %vm4787 = vweird.f32 %v4781
        %vm4788 = vmor %vm4786, %vm4787
        %v4789 = vsel %vm4788, %v4781, %v4785
        %v4790 = vand.u32 2147483647, %v4780
        %vm4791 = vcmp.eq.f32.partialorder %v4790, 8.507059e+37
        %v4792 = vand.u32 %v4780, 2147483648
        %v4793 = vor.u32 1.1754944e-38, %v4792
        %v4794 = vsel %vm4791, %v4793, %v4789
        %v4795 = vmul.f32 1.0, %v4794
        %v4796 = vxor.u32 %v4722, 2147483648
        %v4797 = vmul.f32 %v4796, 1.442695
        %v4798 = vpow.pop %v4797
        %v4799 = vadd.f32 %v4798, 1.0
        %v4800 = vrcp.pop %v4799
        %v4801 = vmul.f32 %v4799, %v4800
        %v4802 = vsub.f32 1.0, %v4801
        %v4803 = vmul.f32 %v4800, %v4802
        %v4804 = vadd.f32 %v4800, %v4803
        %vm4805 = vweird.f32 %v4799
        %vm4806 = vweird.f32 %v4800
        %vm4807 = vmor %vm4805, %vm4806
        %v4808 = vsel %vm4807, %v4800, %v4804
        %v4809 = vand.u32 2147483647, %v4799
        %vm4810 = vcmp.eq.f32.partialorder %v4809, 8.507059e+37
        %v4811 = vand.u32 %v4799, 2147483648
        %v4812 = vor.u32 1.1754944e-38, %v4811
        %v4813 = vsel %vm4810, %v4812, %v4808
        %v4814 = vmul.f32 1.0, %v4813
        %v4815 = vmul.f32 %v4795, %v4774
        %v4816 = vadd.f32 %v4748, %v4815
        %v4817 = vtanh.pop %v4816
        %v4818 = vsub.f32 1.0, %v4814
        %v4819 = vmul.f32 %v4818, %v4817
        %v4820 = vmul.f32 %v4814, %v4276
        %v4821 = vadd.f32 %v4819, %v4820
        %4822 = vst [vmem:[#allocation2] sm:$0xff] %v4821
        %s4823 = scalar_lea.vmem %s374, 56
        %v4824 = vld [vmem:[%s4823] sm:$0xff]
        %4825 = vset.pattern.permute.xlu0 0
        %4826 = vperm.xlu0 %4825, %v4824
        %v4827 = vpop.permute.xlu0 %4826
        %vm4828 = vcmp.eq.s32.totalorder %v392, %v4827
        %v4829 = vsel %vm4828, 1, 0
        %v4830 = vcvt.s32.f32 %v4829
        %v4831 = vpack.c.bf16 %v4830, %v4830
        %v4832 = vld [vmem:[%s1] sm:$0xf]
        %v4833 = vld [vmem:[%s1 + $0x4] sm:$0xf]
        %v4834 = vld [vmem:[%s1 + $0x8] sm:$0xf]
        %v4835 = vld [vmem:[%s1 + $0xc] sm:$0xf]
        %v4836 = vld [vmem:[%s1 + $0x10] sm:$0xf]
        %v4837 = vld [vmem:[%s1 + $0x14] sm:$0xf]
        %v4838 = vld [vmem:[%s1 + $0x18] sm:$0xf]
        %v4839 = vld [vmem:[%s1 + $0x1c] sm:$0xf]
        %v4840 = vld [vmem:[%s1 + $0x20] sm:$0xf]
        %v4841 = vld [vmem:[%s1 + $0x24] sm:$0xf]
        %v4842 = vld [vmem:[%s1 + $0x28] sm:$0xf]
        %v4843 = vld [vmem:[%s1 + $0x2c] sm:$0xf]
        %v4844 = vld [vmem:[%s1 + $0x30] sm:$0xf]
        %v4845 = vld [vmem:[%s1 + $0x34] sm:$0xf]
        %v4846 = vld [vmem:[%s1 + $0x38] sm:$0xf]
        %v4847 = vld [vmem:[%s1 + $0x3c] sm:$0xf]
        %v4864 = vunpack.c.l.b16 %v4832
        %v4865 = vunpack.c.l.b16 %v4833
        %v4866 = vunpack.c.l.b16 %v4834
        %v4867 = vunpack.c.l.b16 %v4835
        %v4868 = vunpack.c.l.b16 %v4836
        %v4869 = vunpack.c.l.b16 %v4837
        %v4870 = vunpack.c.l.b16 %v4838
        %v4871 = vunpack.c.l.b16 %v4839
        %v4872 = vunpack.c.l.b16 %v4840
        %v4873 = vunpack.c.l.b16 %v4841
        %v4874 = vunpack.c.l.b16 %v4842
        %v4875 = vunpack.c.l.b16 %v4843
        %v4876 = vunpack.c.l.b16 %v4844
        %v4877 = vunpack.c.l.b16 %v4845
        %v4878 = vunpack.c.l.b16 %v4846
        %v4879 = vunpack.c.l.b16 %v4847
        %v4880 = vpack.c.b16 %v4865, %v4864
        %v4881 = vpack.c.b16 %v4867, %v4866
        %v4882 = vpack.c.b16 %v4869, %v4868
        %v4883 = vpack.c.b16 %v4871, %v4870
        %v4884 = vpack.c.b16 %v4873, %v4872
        %v4885 = vpack.c.b16 %v4875, %v4874
        %v4886 = vpack.c.b16 %v4877, %v4876
        %v4887 = vpack.c.b16 %v4879, %v4878
        %4896 = vmatpush.bf16.msra.mxu0 %v4887
        %4897 = vmatpush.bf16.msra.mxu0 %v4886
        %4898 = vmatpush.bf16.msra.mxu0 %v4885
        %4899 = vmatpush.bf16.msra.mxu0 %v4884
        %4900 = vmatpush.bf16.msra.mxu0 %v4883
        %4901 = vmatpush.bf16.msra.mxu0 %v4882
        %4902 = vmatpush.bf16.msra.mxu0 %v4881
        %4903 = vmatpush.bf16.msra.mxu0 %v4880
        %4904 = vmatmul.bf16.gmra.mxu0 %v4831
        %v4905 = vpop.f32.mrf.mxu0
        %v4906 = vadd.f32 0.0, %v4905
        %v4907 = vpop.f32.mrf.mxu0
        %4908 = vdwg.mxu0
        %v4909 = vld [vmem:[#allocation2] sm:$0xff]
        %v4910 = vpack.c.bf16 %v4906, %v4906
        %v4911 = vpack.c.bf16 %v4909, %v4909
        %v4912 = vld [vmem:[%s2] sm:$0xff]
        %v4913 = vld [vmem:[%s2 + $0x8] sm:$0xff]
        %v4914 = vld [vmem:[%s2 + $0x10] sm:$0xff]
        %v4915 = vld [vmem:[%s2 + $0x18] sm:$0xff]
        %v4916 = vld [vmem:[%s2 + $0x20] sm:$0xff]
        %v4917 = vld [vmem:[%s2 + $0x28] sm:$0xff]
        %v4918 = vld [vmem:[%s2 + $0x30] sm:$0xff]
        %v4919 = vld [vmem:[%s2 + $0x38] sm:$0xff]
        %v4920 = vld [vmem:[%s2 + $0x40] sm:$0xff]
        %v4921 = vld [vmem:[%s2 + $0x48] sm:$0xff]
        %v4922 = vld [vmem:[%s2 + $0x50] sm:$0xff]
        %v4923 = vld [vmem:[%s2 + $0x58] sm:$0xff]
        %v4924 = vld [vmem:[%s2 + $0x60] sm:$0xff]
        %v4925 = vld [vmem:[%s2 + $0x68] sm:$0xff]
        %v4926 = vld [vmem:[%s2 + $0x70] sm:$0xff]
        %v4927 = vld [vmem:[%s2 + $0x78] sm:$0xff]
        %v4928 = vld [vmem:[%s2 + $0x80] sm:$0xff]
        %v4929 = vld [vmem:[%s2 + $0x88] sm:$0xff]
        %v4930 = vld [vmem:[%s2 + $0x90] sm:$0xff]
        %v4931 = vld [vmem:[%s2 + $0x98] sm:$0xff]
        %v4932 = vld [vmem:[%s2 + $0xa0] sm:$0xff]
        %v4933 = vld [vmem:[%s2 + $0xa8] sm:$0xff]
        %v4934 = vld [vmem:[%s2 + $0xb0] sm:$0xff]
        %v4935 = vld [vmem:[%s2 + $0xb8] sm:$0xff]
        %v4936 = vld [vmem:[%s2 + $0xc0] sm:$0xff]
        %v4937 = vld [vmem:[%s2 + $0xc8] sm:$0xff]
        %v4938 = vld [vmem:[%s2 + $0xd0] sm:$0xff]
        %v4939 = vld [vmem:[%s2 + $0xd8] sm:$0xff]
        %v4940 = vld [vmem:[%s2 + $0xe0] sm:$0xff]
        %v4941 = vld [vmem:[%s2 + $0xe8] sm:$0xff]
        %v4942 = vld [vmem:[%s2 + $0xf0] sm:$0xff]
        %v4943 = vld [vmem:[%s2 + $0xf8] sm:$0xff]
        %v4944 = vld [vmem:[%s2 + $0x100] sm:$0xff]
        %v4945 = vld [vmem:[%s2 + $0x108] sm:$0xff]
        %v4946 = vld [vmem:[%s2 + $0x110] sm:$0xff]
        %v4947 = vld [vmem:[%s2 + $0x118] sm:$0xff]
        %v4948 = vld [vmem:[%s2 + $0x120] sm:$0xff]
        %v4949 = vld [vmem:[%s2 + $0x128] sm:$0xff]
        %v4950 = vld [vmem:[%s2 + $0x130] sm:$0xff]
        %v4951 = vld [vmem:[%s2 + $0x138] sm:$0xff]
        %v4952 = vld [vmem:[%s2 + $0x140] sm:$0xff]
        %v4953 = vld [vmem:[%s2 + $0x148] sm:$0xff]
        %v4954 = vld [vmem:[%s2 + $0x150] sm:$0xff]
        %v4955 = vld [vmem:[%s2 + $0x158] sm:$0xff]
        %v4956 = vld [vmem:[%s2 + $0x160] sm:$0xff]
        %v4957 = vld [vmem:[%s2 + $0x168] sm:$0xff]
        %v4958 = vld [vmem:[%s2 + $0x170] sm:$0xff]
        %v4959 = vld [vmem:[%s2 + $0x178] sm:$0xff]
        %v4960 = vld [vmem:[%s2 + $0x180] sm:$0xff]
        %v4961 = vld [vmem:[%s2 + $0x188] sm:$0xff]
        %v4962 = vld [vmem:[%s2 + $0x190] sm:$0xff]
        %v4963 = vld [vmem:[%s2 + $0x198] sm:$0xff]
        %v4964 = vld [vmem:[%s2 + $0x1a0] sm:$0xff]
        %v4965 = vld [vmem:[%s2 + $0x1a8] sm:$0xff]
        %v4966 = vld [vmem:[%s2 + $0x1b0] sm:$0xff]
        %v4967 = vld [vmem:[%s2 + $0x1b8] sm:$0xff]
        %v4968 = vld [vmem:[%s2 + $0x1c0] sm:$0xff]
        %v4969 = vld [vmem:[%s2 + $0x1c8] sm:$0xff]
        %v4970 = vld [vmem:[%s2 + $0x1d0] sm:$0xff]
        %v4971 = vld [vmem:[%s2 + $0x1d8] sm:$0xff]
        %v4972 = vld [vmem:[%s2 + $0x1e0] sm:$0xff]
        %v4973 = vld [vmem:[%s2 + $0x1e8] sm:$0xff]
        %v4974 = vld [vmem:[%s2 + $0x1f0] sm:$0xff]
        %v4975 = vld [vmem:[%s2 + $0x1f8] sm:$0xff]
        %v4976 = vld [vmem:[%s3] sm:$0xf]
        %v4978 = vperm.slane %v4976, 0
        %v4979 = vperm.slane %v4976, 1
        %v4980 = vperm.slane %v4976, 2
        %v4981 = vperm.slane %v4976, 3
        %v5050 = vunpack.c.l.b16 %v4912
        %v5051 = vunpack.c.h.b16 %v4912
        %v5052 = vunpack.c.l.b16 %v4913
        %v5053 = vunpack.c.h.b16 %v4913
        %v5054 = vunpack.c.l.b16 %v4914
        %v5055 = vunpack.c.h.b16 %v4914
        %v5056 = vunpack.c.l.b16 %v4915
        %v5057 = vunpack.c.h.b16 %v4915
        %v5058 = vunpack.c.l.b16 %v4916
        %v5059 = vunpack.c.h.b16 %v4916
        %v5060 = vunpack.c.l.b16 %v4917
        %v5061 = vunpack.c.h.b16 %v4917
        %v5062 = vunpack.c.l.b16 %v4918
        %v5063 = vunpack.c.h.b16 %v4918
        %v5064 = vunpack.c.l.b16 %v4919
        %v5065 = vunpack.c.h.b16 %v4919
        %v5066 = vunpack.c.l.b16 %v4920
        %v5067 = vunpack.c.h.b16 %v4920
        %v5068 = vunpack.c.l.b16 %v4921
        %v5069 = vunpack.c.h.b16 %v4921
        %v5070 = vunpack.c.l.b16 %v4922
        %v5071 = vunpack.c.h.b16 %v4922
        %v5072 = vunpack.c.l.b16 %v4923
        %v5073 = vunpack.c.h.b16 %v4923
        %v5074 = vunpack.c.l.b16 %v4924
        %v5075 = vunpack.c.h.b16 %v4924
        %v5076 = vunpack.c.l.b16 %v4925
        %v5077 = vunpack.c.h.b16 %v4925
        %v5078 = vunpack.c.l.b16 %v4926
        %v5079 = vunpack.c.h.b16 %v4926
        %v5080 = vunpack.c.l.b16 %v4927
        %v5081 = vunpack.c.h.b16 %v4927
        %v5082 = vunpack.c.l.b16 %v4928
        %v5083 = vunpack.c.h.b16 %v4928
        %v5084 = vunpack.c.l.b16 %v4929
        %v5085 = vunpack.c.h.b16 %v4929
        %v5086 = vunpack.c.l.b16 %v4930
        %v5087 = vunpack.c.h.b16 %v4930
        %v5088 = vunpack.c.l.b16 %v4931
        %v5089 = vunpack.c.h.b16 %v4931
        %v5090 = vunpack.c.l.b16 %v4932
        %v5091 = vunpack.c.h.b16 %v4932
        %v5092 = vunpack.c.l.b16 %v4933
        %v5093 = vunpack.c.h.b16 %v4933
        %v5094 = vunpack.c.l.b16 %v4934
        %v5095 = vunpack.c.h.b16 %v4934
        %v5096 = vunpack.c.l.b16 %v4935
        %v5097 = vunpack.c.h.b16 %v4935
        %v5098 = vunpack.c.l.b16 %v4936
        %v5099 = vunpack.c.h.b16 %v4936
        %v5100 = vunpack.c.l.b16 %v4937
        %v5101 = vunpack.c.h.b16 %v4937
        %v5102 = vunpack.c.l.b16 %v4938
        %v5103 = vunpack.c.h.b16 %v4938
        %v5104 = vunpack.c.l.b16 %v4939
        %v5105 = vunpack.c.h.b16 %v4939
        %v5106 = vunpack.c.l.b16 %v4940
        %v5107 = vunpack.c.h.b16 %v4940
        %v5108 = vunpack.c.l.b16 %v4941
        %v5109 = vunpack.c.h.b16 %v4941
        %v5110 = vunpack.c.l.b16 %v4942
        %v5111 = vunpack.c.h.b16 %v4942
        %v5112 = vunpack.c.l.b16 %v4943
        %v5113 = vunpack.c.h.b16 %v4943
        %v5114 = vunpack.c.l.b16 %v4944
        %v5115 = vunpack.c.h.b16 %v4944
        %v5116 = vunpack.c.l.b16 %v4945
        %v5117 = vunpack.c.h.b16 %v4945
        %v5118 = vunpack.c.l.b16 %v4946
        %v5119 = vunpack.c.h.b16 %v4946
        %v5120 = vunpack.c.l.b16 %v4947
        %v5121 = vunpack.c.h.b16 %v4947
        %v5122 = vunpack.c.l.b16 %v4948
        %v5123 = vunpack.c.h.b16 %v4948
        %v5124 = vunpack.c.l.b16 %v4949
        %v5125 = vunpack.c.h.b16 %v4949
        %v5126 = vunpack.c.l.b16 %v4950
        %v5127 = vunpack.c.h.b16 %v4950
        %v5128 = vunpack.c.l.b16 %v4951
        %v5129 = vunpack.c.h.b16 %v4951
        %v5130 = vunpack.c.l.b16 %v4952
        %v5131 = vunpack.c.h.b16 %v4952
        %v5132 = vunpack.c.l.b16 %v4953
        %v5133 = vunpack.c.h.b16 %v4953
        %v5134 = vunpack.c.l.b16 %v4954
        %v5135 = vunpack.c.h.b16 %v4954
        %v5136 = vunpack.c.l.b16 %v4955
        %v5137 = vunpack.c.h.b16 %v4955
        %v5138 = vunpack.c.l.b16 %v4956
        %v5139 = vunpack.c.h.b16 %v4956
        %v5140 = vunpack.c.l.b16 %v4957
        %v5141 = vunpack.c.h.b16 %v4957
        %v5142 = vunpack.c.l.b16 %v4958
        %v5143 = vunpack.c.h.b16 %v4958
        %v5144 = vunpack.c.l.b16 %v4959
        %v5145 = vunpack.c.h.b16 %v4959
        %v5146 = vunpack.c.l.b16 %v4960
        %v5147 = vunpack.c.h.b16 %v4960
        %v5148 = vunpack.c.l.b16 %v4961
        %v5149 = vunpack.c.h.b16 %v4961
        %v5150 = vunpack.c.l.b16 %v4962
        %v5151 = vunpack.c.h.b16 %v4962
        %v5152 = vunpack.c.l.b16 %v4963
        %v5153 = vunpack.c.h.b16 %v4963
        %v5154 = vunpack.c.l.b16 %v4964
        %v5155 = vunpack.c.h.b16 %v4964
        %v5156 = vunpack.c.l.b16 %v4965
        %v5157 = vunpack.c.h.b16 %v4965
        %v5158 = vunpack.c.l.b16 %v4966
        %v5159 = vunpack.c.h.b16 %v4966
        %v5160 = vunpack.c.l.b16 %v4967
        %v5161 = vunpack.c.h.b16 %v4967
        %v5162 = vunpack.c.l.b16 %v4968
        %v5163 = vunpack.c.h.b16 %v4968
        %v5164 = vunpack.c.l.b16 %v4969
        %v5165 = vunpack.c.h.b16 %v4969
        %v5166 = vunpack.c.l.b16 %v4970
        %v5167 = vunpack.c.h.b16 %v4970
        %v5168 = vunpack.c.l.b16 %v4971
        %v5169 = vunpack.c.h.b16 %v4971
        %v5170 = vunpack.c.l.b16 %v4972
        %v5171 = vunpack.c.h.b16 %v4972
        %v5172 = vunpack.c.l.b16 %v4973
        %v5173 = vunpack.c.h.b16 %v4973
        %v5174 = vunpack.c.l.b16 %v4974
        %v5175 = vunpack.c.h.b16 %v4974
        %v5176 = vunpack.c.l.b16 %v4975
        %v5177 = vunpack.c.h.b16 %v4975
        %v5178 = vpack.c.b16 %v5054, %v5050
        %v5179 = vpack.c.b16 %v5055, %v5051
        %v5180 = vpack.c.b16 %v5056, %v5052
        %v5181 = vpack.c.b16 %v5057, %v5053
        %v5182 = vpack.c.b16 %v5062, %v5058
        %v5183 = vpack.c.b16 %v5063, %v5059
        %v5184 = vpack.c.b16 %v5064, %v5060
        %v5185 = vpack.c.b16 %v5065, %v5061
        %v5186 = vpack.c.b16 %v5070, %v5066
        %v5187 = vpack.c.b16 %v5071, %v5067
        %v5188 = vpack.c.b16 %v5072, %v5068
        %v5189 = vpack.c.b16 %v5073, %v5069
        %v5190 = vpack.c.b16 %v5078, %v5074
        %v5191 = vpack.c.b16 %v5079, %v5075
        %v5192 = vpack.c.b16 %v5080, %v5076
        %v5193 = vpack.c.b16 %v5081, %v5077
        %v5194 = vpack.c.b16 %v5086, %v5082
        %v5195 = vpack.c.b16 %v5087, %v5083
        %v5196 = vpack.c.b16 %v5088, %v5084
        %v5197 = vpack.c.b16 %v5089, %v5085
        %v5198 = vpack.c.b16 %v5094, %v5090
        %v5199 = vpack.c.b16 %v5095, %v5091
        %v5200 = vpack.c.b16 %v5096, %v5092
        %v5201 = vpack.c.b16 %v5097, %v5093
        %v5202 = vpack.c.b16 %v5102, %v5098
        %v5203 = vpack.c.b16 %v5103, %v5099
        %v5204 = vpack.c.b16 %v5104, %v5100
        %v5205 = vpack.c.b16 %v5105, %v5101
        %v5206 = vpack.c.b16 %v5110, %v5106
        %v5207 = vpack.c.b16 %v5111, %v5107
        %v5208 = vpack.c.b16 %v5112, %v5108
        %v5209 = vpack.c.b16 %v5113, %v5109
        %v5210 = vpack.c.b16 %v5118, %v5114
        %v5211 = vpack.c.b16 %v5119, %v5115
        %v5212 = vpack.c.b16 %v5120, %v5116
        %v5213 = vpack.c.b16 %v5121, %v5117
        %v5214 = vpack.c.b16 %v5126, %v5122
        %v5215 = vpack.c.b16 %v5127, %v5123
        %v5216 = vpack.c.b16 %v5128, %v5124
        %v5217 = vpack.c.b16 %v5129, %v5125
        %v5218 = vpack.c.b16 %v5134, %v5130
        %v5219 = vpack.c.b16 %v5135, %v5131
        %v5220 = vpack.c.b16 %v5136, %v5132
        %v5221 = vpack.c.b16 %v5137, %v5133
        %v5222 = vpack.c.b16 %v5142, %v5138
        %v5223 = vpack.c.b16 %v5143, %v5139
        %v5224 = vpack.c.b16 %v5144, %v5140
        %v5225 = vpack.c.b16 %v5145, %v5141
        %v5226 = vpack.c.b16 %v5150, %v5146
        %v5227 = vpack.c.b16 %v5151, %v5147
        %v5228 = vpack.c.b16 %v5152, %v5148
        %v5229 = vpack.c.b16 %v5153, %v5149
        %v5230 = vpack.c.b16 %v5158, %v5154
        %v5231 = vpack.c.b16 %v5159, %v5155
        %v5232 = vpack.c.b16 %v5160, %v5156
        %v5233 = vpack.c.b16 %v5161, %v5157
        %v5234 = vpack.c.b16 %v5166, %v5162
        %v5235 = vpack.c.b16 %v5167, %v5163
        %v5236 = vpack.c.b16 %v5168, %v5164
        %v5237 = vpack.c.b16 %v5169, %v5165
        %v5238 = vpack.c.b16 %v5174, %v5170
        %v5239 = vpack.c.b16 %v5175, %v5171
        %v5240 = vpack.c.b16 %v5176, %v5172
        %v5241 = vpack.c.b16 %v5177, %v5173
        %5306 = vmatpush.bf16.msra.mxu0 %v5206
        %5307 = vmatpush.bf16.msra.mxu0 %v5202
        %5308 = vmatpush.bf16.msra.mxu0 %v5198
        %5309 = vmatpush.bf16.msra.mxu0 %v5194
        %5310 = vmatpush.bf16.msra.mxu0 %v5190
        %5311 = vmatpush.bf16.msra.mxu0 %v5186
        %5312 = vmatpush.bf16.msra.mxu0 %v5182
        %5313 = vmatpush.bf16.msra.mxu0 %v5178
        %5314 = vmatmul.bf16.gmra.mxu0 %v4910
        %v5315 = vpop.f32.mrf.mxu0
        %v5316 = vadd.f32 %v4978, %v5315
        %v5317 = vpop.f32.mrf.mxu0
        %5318 = vdwg.mxu0
        %5319 = vmatpush.bf16.msra.mxu0 %v5238
        %5320 = vmatpush.bf16.msra.mxu0 %v5234
        %5321 = vmatpush.bf16.msra.mxu0 %v5230
        %5322 = vmatpush.bf16.msra.mxu0 %v5226
        %5323 = vmatpush.bf16.msra.mxu0 %v5222
        %5324 = vmatpush.bf16.msra.mxu0 %v5218
        %5325 = vmatpush.bf16.msra.mxu0 %v5214
        %5326 = vmatpush.bf16.msra.mxu0 %v5210
        %5327 = vmatmul.bf16.gmra.mxu0 %v4911
        %v5328 = vpop.f32.mrf.mxu0
        %v5329 = vadd.f32 %v5316, %v5328
        %v5330 = vpop.f32.mrf.mxu0
        %5331 = vdwg.mxu0
        %5332 = vmatpush.bf16.msra.mxu0 %v5207
        %5333 = vmatpush.bf16.msra.mxu0 %v5203
        %5334 = vmatpush.bf16.msra.mxu0 %v5199
        %5335 = vmatpush.bf16.msra.mxu0 %v5195
        %5336 = vmatpush.bf16.msra.mxu0 %v5191
        %5337 = vmatpush.bf16.msra.mxu0 %v5187
        %5338 = vmatpush.bf16.msra.mxu0 %v5183
        %5339 = vmatpush.bf16.msra.mxu0 %v5179
        %5340 = vmatmul.bf16.gmra.mxu0 %v4910
        %v5341 = vpop.f32.mrf.mxu0
        %v5342 = vadd.f32 %v4979, %v5341
        %v5343 = vpop.f32.mrf.mxu0
        %5344 = vdwg.mxu0
        %5345 = vmatpush.bf16.msra.mxu0 %v5239
        %5346 = vmatpush.bf16.msra.mxu0 %v5235
        %5347 = vmatpush.bf16.msra.mxu0 %v5231
        %5348 = vmatpush.bf16.msra.mxu0 %v5227
        %5349 = vmatpush.bf16.msra.mxu0 %v5223
        %5350 = vmatpush.bf16.msra.mxu0 %v5219
        %5351 = vmatpush.bf16.msra.mxu0 %v5215
        %5352 = vmatpush.bf16.msra.mxu0 %v5211
        %5353 = vmatmul.bf16.gmra.mxu0 %v4911
        %v5354 = vpop.f32.mrf.mxu0
        %v5355 = vadd.f32 %v5342, %v5354
        %v5356 = vpop.f32.mrf.mxu0
        %5357 = vdwg.mxu0
        %5358 = vmatpush.bf16.msra.mxu0 %v5208
        %5359 = vmatpush.bf16.msra.mxu0 %v5204
        %5360 = vmatpush.bf16.msra.mxu0 %v5200
        %5361 = vmatpush.bf16.msra.mxu0 %v5196
        %5362 = vmatpush.bf16.msra.mxu0 %v5192
        %5363 = vmatpush.bf16.msra.mxu0 %v5188
        %5364 = vmatpush.bf16.msra.mxu0 %v5184
        %5365 = vmatpush.bf16.msra.mxu0 %v5180
        %5366 = vmatmul.bf16.gmra.mxu0 %v4910
        %v5367 = vpop.f32.mrf.mxu0
        %v5368 = vadd.f32 %v4980, %v5367
        %v5369 = vpop.f32.mrf.mxu0
        %5370 = vdwg.mxu0
        %5371 = vmatpush.bf16.msra.mxu0 %v5240
        %5372 = vmatpush.bf16.msra.mxu0 %v5236
        %5373 = vmatpush.bf16.msra.mxu0 %v5232
        %5374 = vmatpush.bf16.msra.mxu0 %v5228
        %5375 = vmatpush.bf16.msra.mxu0 %v5224
        %5376 = vmatpush.bf16.msra.mxu0 %v5220
        %5377 = vmatpush.bf16.msra.mxu0 %v5216
        %5378 = vmatpush.bf16.msra.mxu0 %v5212
        %5379 = vmatmul.bf16.gmra.mxu0 %v4911
        %v5380 = vpop.f32.mrf.mxu0
        %v5381 = vadd.f32 %v5368, %v5380
        %v5382 = vpop.f32.mrf.mxu0
        %5383 = vdwg.mxu0
        %5384 = vmatpush.bf16.msra.mxu0 %v5209
        %5385 = vmatpush.bf16.msra.mxu0 %v5205
        %5386 = vmatpush.bf16.msra.mxu0 %v5201
        %5387 = vmatpush.bf16.msra.mxu0 %v5197
        %5388 = vmatpush.bf16.msra.mxu0 %v5193
        %5389 = vmatpush.bf16.msra.mxu0 %v5189
        %5390 = vmatpush.bf16.msra.mxu0 %v5185
        %5391 = vmatpush.bf16.msra.mxu0 %v5181
        %5392 = vmatmul.bf16.gmra.mxu0 %v4910
        %v5393 = vpop.f32.mrf.mxu0
        %v5394 = vadd.f32 %v4981, %v5393
        %v5395 = vpop.f32.mrf.mxu0
        %5396 = vdwg.mxu0
        %5397 = vmatpush.bf16.msra.mxu0 %v5241
        %5398 = vmatpush.bf16.msra.mxu0 %v5237
        %5399 = vmatpush.bf16.msra.mxu0 %v5233
        %5400 = vmatpush.bf16.msra.mxu0 %v5229
        %5401 = vmatpush.bf16.msra.mxu0 %v5225
        %5402 = vmatpush.bf16.msra.mxu0 %v5221
        %5403 = vmatpush.bf16.msra.mxu0 %v5217
        %5404 = vmatpush.bf16.msra.mxu0 %v5213
        %5405 = vmatmul.bf16.gmra.mxu0 %v4911
        %v5406 = vpop.f32.mrf.mxu0
        %v5407 = vadd.f32 %v5394, %v5406
        %v5408 = vpop.f32.mrf.mxu0
        %5409 = vdwg.mxu0
        %v5410 = vxor.u32 %v5329, 2147483648
        %v5411 = vmul.f32 %v5410, 1.442695
        %v5412 = vpow.pop %v5411
        %v5413 = vadd.f32 %v5412, 1.0
        %v5414 = vrcp.pop %v5413
        %v5415 = vmul.f32 %v5413, %v5414
        %v5416 = vsub.f32 1.0, %v5415
        %v5417 = vmul.f32 %v5414, %v5416
        %v5418 = vadd.f32 %v5414, %v5417
        %vm5419 = vweird.f32 %v5413
        %vm5420 = vweird.f32 %v5414
        %vm5421 = vmor %vm5419, %vm5420
        %v5422 = vsel %vm5421, %v5414, %v5418
        %v5423 = vand.u32 2147483647, %v5413
        %vm5424 = vcmp.eq.f32.partialorder %v5423, 8.507059e+37
        %v5425 = vand.u32 %v5413, 2147483648
        %v5426 = vor.u32 1.1754944e-38, %v5425
        %v5427 = vsel %vm5424, %v5426, %v5422
        %v5428 = vmul.f32 1.0, %v5427
        %v5429 = vxor.u32 %v5355, 2147483648
        %v5430 = vmul.f32 %v5429, 1.442695
        %v5431 = vpow.pop %v5430
        %v5432 = vadd.f32 %v5431, 1.0
        %v5433 = vrcp.pop %v5432
        %v5434 = vmul.f32 %v5432, %v5433
        %v5435 = vsub.f32 1.0, %v5434
        %v5436 = vmul.f32 %v5433, %v5435
        %v5437 = vadd.f32 %v5433, %v5436
        %vm5438 = vweird.f32 %v5432
        %vm5439 = vweird.f32 %v5433
        %vm5440 = vmor %vm5438, %vm5439
        %v5441 = vsel %vm5440, %v5433, %v5437
        %v5442 = vand.u32 2147483647, %v5432
        %vm5443 = vcmp.eq.f32.partialorder %v5442, 8.507059e+37
        %v5444 = vand.u32 %v5432, 2147483648
        %v5445 = vor.u32 1.1754944e-38, %v5444
        %v5446 = vsel %vm5443, %v5445, %v5441
        %v5447 = vmul.f32 1.0, %v5446
        %v5448 = vmul.f32 %v5428, %v5407
        %v5449 = vadd.f32 %v5381, %v5448
        %v5450 = vtanh.pop %v5449
        %v5451 = vsub.f32 1.0, %v5447
        %v5452 = vmul.f32 %v5451, %v5450
        %v5453 = vmul.f32 %v5447, %v4909
        %v5454 = vadd.f32 %v5452, %v5453
        %5455 = vst [vmem:[#allocation2] sm:$0xff] %v5454
        %vm5456 = vcmp.eq.s32.totalorder %v392, 0
        %v5457 = vsel %vm5456, 1, 0
        %v5458 = vcvt.s32.f32 %v5457
        %v5459 = vpack.c.bf16 %v5458, %v5458
        %5460 = vst [vmem:[#allocation3] sm:$0xf] %v5459
      $region60: #{seq2seq_forward.1} parent=55 // pred_fallthru
        _
      %v5461 = vld [vmem:[#allocation3] sm:$0xf]
      %v5462 = vld [vmem:[%s4] sm:$0xf]
      %v5463 = vld [vmem:[%s4 + $0x4] sm:$0xf]
      %v5464 = vld [vmem:[%s4 + $0x8] sm:$0xf]
      %v5465 = vld [vmem:[%s4 + $0xc] sm:$0xf]
      %v5466 = vld [vmem:[%s4 + $0x10] sm:$0xf]
      %v5467 = vld [vmem:[%s4 + $0x14] sm:$0xf]
      %v5468 = vld [vmem:[%s4 + $0x18] sm:$0xf]
      %v5469 = vld [vmem:[%s4 + $0x1c] sm:$0xf]
      %v5470 = vld [vmem:[%s4 + $0x20] sm:$0xf]
      %v5471 = vld [vmem:[%s4 + $0x24] sm:$0xf]
      %v5472 = vld [vmem:[%s4 + $0x28] sm:$0xf]
      %v5473 = vld [vmem:[%s4 + $0x2c] sm:$0xf]
      %v5474 = vld [vmem:[%s4 + $0x30] sm:$0xf]
      %v5475 = vld [vmem:[%s4 + $0x34] sm:$0xf]
      %v5476 = vld [vmem:[%s4 + $0x38] sm:$0xf]
      %v5477 = vld [vmem:[%s4 + $0x3c] sm:$0xf]
      %v5494 = vunpack.c.l.b16 %v5462
      %v5495 = vunpack.c.l.b16 %v5463
      %v5496 = vunpack.c.l.b16 %v5464
      %v5497 = vunpack.c.l.b16 %v5465
      %v5498 = vunpack.c.l.b16 %v5466
      %v5499 = vunpack.c.l.b16 %v5467
      %v5500 = vunpack.c.l.b16 %v5468
      %v5501 = vunpack.c.l.b16 %v5469
      %v5502 = vunpack.c.l.b16 %v5470
      %v5503 = vunpack.c.l.b16 %v5471
      %v5504 = vunpack.c.l.b16 %v5472
      %v5505 = vunpack.c.l.b16 %v5473
      %v5506 = vunpack.c.l.b16 %v5474
      %v5507 = vunpack.c.l.b16 %v5475
      %v5508 = vunpack.c.l.b16 %v5476
      %v5509 = vunpack.c.l.b16 %v5477
      %v5510 = vpack.c.b16 %v5495, %v5494
      %v5511 = vpack.c.b16 %v5497, %v5496
      %v5512 = vpack.c.b16 %v5499, %v5498
      %v5513 = vpack.c.b16 %v5501, %v5500
      %v5514 = vpack.c.b16 %v5503, %v5502
      %v5515 = vpack.c.b16 %v5505, %v5504
      %v5516 = vpack.c.b16 %v5507, %v5506
      %v5517 = vpack.c.b16 %v5509, %v5508
      %5526 = vmatpush.bf16.msra.mxu0 %v5517
      %5527 = vmatpush.bf16.msra.mxu0 %v5516
      %5528 = vmatpush.bf16.msra.mxu0 %v5515
      %5529 = vmatpush.bf16.msra.mxu0 %v5514
      %5530 = vmatpush.bf16.msra.mxu0 %v5513
      %5531 = vmatpush.bf16.msra.mxu0 %v5512
      %5532 = vmatpush.bf16.msra.mxu0 %v5511
      %5533 = vmatpush.bf16.msra.mxu0 %v5510
      %5534 = vmatmul.bf16.gmra.mxu0 %v5461
      %v5535 = vpop.f32.mrf.mxu0
      %v5536 = vadd.f32 0.0, %v5535
      %v5537 = vpop.f32.mrf.mxu0
      %5538 = vdwg.mxu0
      %v5539 = vmax.f32 %v5536, 0.0
      %v5540 = vld [vmem:[#allocation2] sm:$0xff]
      %v5541 = vpack.c.bf16 %v5539, %v5539
      %v5542 = vpack.c.bf16 %v5540, %v5540
      %v5543 = vld [vmem:[%s5] sm:$0xff]
      %v5544 = vld [vmem:[%s5 + $0x8] sm:$0xff]
      %v5545 = vld [vmem:[%s5 + $0x10] sm:$0xff]
      %v5546 = vld [vmem:[%s5 + $0x18] sm:$0xff]
      %v5547 = vld [vmem:[%s5 + $0x20] sm:$0xff]
      %v5548 = vld [vmem:[%s5 + $0x28] sm:$0xff]
      %v5549 = vld [vmem:[%s5 + $0x30] sm:$0xff]
      %v5550 = vld [vmem:[%s5 + $0x38] sm:$0xff]
      %v5551 = vld [vmem:[%s5 + $0x40] sm:$0xff]
      %v5552 = vld [vmem:[%s5 + $0x48] sm:$0xff]
      %v5553 = vld [vmem:[%s5 + $0x50] sm:$0xff]
      %v5554 = vld [vmem:[%s5 + $0x58] sm:$0xff]
      %v5555 = vld [vmem:[%s5 + $0x60] sm:$0xff]
      %v5556 = vld [vmem:[%s5 + $0x68] sm:$0xff]
      %v5557 = vld [vmem:[%s5 + $0x70] sm:$0xff]
      %v5558 = vld [vmem:[%s5 + $0x78] sm:$0xff]
      %v5559 = vld [vmem:[%s5 + $0x80] sm:$0xff]
      %v5560 = vld [vmem:[%s5 + $0x88] sm:$0xff]
      %v5561 = vld [vmem:[%s5 + $0x90] sm:$0xff]
      %v5562 = vld [vmem:[%s5 + $0x98] sm:$0xff]
      %v5563 = vld [vmem:[%s5 + $0xa0] sm:$0xff]
      %v5564 = vld [vmem:[%s5 + $0xa8] sm:$0xff]
      %v5565 = vld [vmem:[%s5 + $0xb0] sm:$0xff]
      %v5566 = vld [vmem:[%s5 + $0xb8] sm:$0xff]
      %v5567 = vld [vmem:[%s5 + $0xc0] sm:$0xff]
      %v5568 = vld [vmem:[%s5 + $0xc8] sm:$0xff]
      %v5569 = vld [vmem:[%s5 + $0xd0] sm:$0xff]
      %v5570 = vld [vmem:[%s5 + $0xd8] sm:$0xff]
      %v5571 = vld [vmem:[%s5 + $0xe0] sm:$0xff]
      %v5572 = vld [vmem:[%s5 + $0xe8] sm:$0xff]
      %v5573 = vld [vmem:[%s5 + $0xf0] sm:$0xff]
      %v5574 = vld [vmem:[%s5 + $0xf8] sm:$0xff]
      %v5575 = vld [vmem:[%s5 + $0x100] sm:$0xff]
      %v5576 = vld [vmem:[%s5 + $0x108] sm:$0xff]
      %v5577 = vld [vmem:[%s5 + $0x110] sm:$0xff]
      %v5578 = vld [vmem:[%s5 + $0x118] sm:$0xff]
      %v5579 = vld [vmem:[%s5 + $0x120] sm:$0xff]
      %v5580 = vld [vmem:[%s5 + $0x128] sm:$0xff]
      %v5581 = vld [vmem:[%s5 + $0x130] sm:$0xff]
      %v5582 = vld [vmem:[%s5 + $0x138] sm:$0xff]
      %v5583 = vld [vmem:[%s5 + $0x140] sm:$0xff]
      %v5584 = vld [vmem:[%s5 + $0x148] sm:$0xff]
      %v5585 = vld [vmem:[%s5 + $0x150] sm:$0xff]
      %v5586 = vld [vmem:[%s5 + $0x158] sm:$0xff]
      %v5587 = vld [vmem:[%s5 + $0x160] sm:$0xff]
      %v5588 = vld [vmem:[%s5 + $0x168] sm:$0xff]
      %v5589 = vld [vmem:[%s5 + $0x170] sm:$0xff]
      %v5590 = vld [vmem:[%s5 + $0x178] sm:$0xff]
      %v5591 = vld [vmem:[%s5 + $0x180] sm:$0xff]
      %v5592 = vld [vmem:[%s5 + $0x188] sm:$0xff]
      %v5593 = vld [vmem:[%s5 + $0x190] sm:$0xff]
      %v5594 = vld [vmem:[%s5 + $0x198] sm:$0xff]
      %v5595 = vld [vmem:[%s5 + $0x1a0] sm:$0xff]
      %v5596 = vld [vmem:[%s5 + $0x1a8] sm:$0xff]
      %v5597 = vld [vmem:[%s5 + $0x1b0] sm:$0xff]
      %v5598 = vld [vmem:[%s5 + $0x1b8] sm:$0xff]
      %v5599 = vld [vmem:[%s5 + $0x1c0] sm:$0xff]
      %v5600 = vld [vmem:[%s5 + $0x1c8] sm:$0xff]
      %v5601 = vld [vmem:[%s5 + $0x1d0] sm:$0xff]
      %v5602 = vld [vmem:[%s5 + $0x1d8] sm:$0xff]
      %v5603 = vld [vmem:[%s5 + $0x1e0] sm:$0xff]
      %v5604 = vld [vmem:[%s5 + $0x1e8] sm:$0xff]
      %v5605 = vld [vmem:[%s5 + $0x1f0] sm:$0xff]
      %v5606 = vld [vmem:[%s5 + $0x1f8] sm:$0xff]
      %v5607 = vld [vmem:[%s6] sm:$0xf]
      %v5609 = vperm.slane %v5607, 0
      %v5610 = vperm.slane %v5607, 1
      %v5611 = vperm.slane %v5607, 2
      %v5612 = vperm.slane %v5607, 3
      %v5681 = vunpack.c.l.b16 %v5543
      %v5682 = vunpack.c.h.b16 %v5543
      %v5683 = vunpack.c.l.b16 %v5544
      %v5684 = vunpack.c.h.b16 %v5544
      %v5685 = vunpack.c.l.b16 %v5545
      %v5686 = vunpack.c.h.b16 %v5545
      %v5687 = vunpack.c.l.b16 %v5546
      %v5688 = vunpack.c.h.b16 %v5546
      %v5689 = vunpack.c.l.b16 %v5547
      %v5690 = vunpack.c.h.b16 %v5547
      %v5691 = vunpack.c.l.b16 %v5548
      %v5692 = vunpack.c.h.b16 %v5548
      %v5693 = vunpack.c.l.b16 %v5549
      %v5694 = vunpack.c.h.b16 %v5549
      %v5695 = vunpack.c.l.b16 %v5550
      %v5696 = vunpack.c.h.b16 %v5550
      %v5697 = vunpack.c.l.b16 %v5551
      %v5698 = vunpack.c.h.b16 %v5551
      %v5699 = vunpack.c.l.b16 %v5552
      %v5700 = vunpack.c.h.b16 %v5552
      %v5701 = vunpack.c.l.b16 %v5553
      %v5702 = vunpack.c.h.b16 %v5553
      %v5703 = vunpack.c.l.b16 %v5554
      %v5704 = vunpack.c.h.b16 %v5554
      %v5705 = vunpack.c.l.b16 %v5555
      %v5706 = vunpack.c.h.b16 %v5555
      %v5707 = vunpack.c.l.b16 %v5556
      %v5708 = vunpack.c.h.b16 %v5556
      %v5709 = vunpack.c.l.b16 %v5557
      %v5710 = vunpack.c.h.b16 %v5557
      %v5711 = vunpack.c.l.b16 %v5558
      %v5712 = vunpack.c.h.b16 %v5558
      %v5713 = vunpack.c.l.b16 %v5559
      %v5714 = vunpack.c.h.b16 %v5559
      %v5715 = vunpack.c.l.b16 %v5560
      %v5716 = vunpack.c.h.b16 %v5560
      %v5717 = vunpack.c.l.b16 %v5561
      %v5718 = vunpack.c.h.b16 %v5561
      %v5719 = vunpack.c.l.b16 %v5562
      %v5720 = vunpack.c.h.b16 %v5562
      %v5721 = vunpack.c.l.b16 %v5563
      %v5722 = vunpack.c.h.b16 %v5563
      %v5723 = vunpack.c.l.b16 %v5564
      %v5724 = vunpack.c.h.b16 %v5564
      %v5725 = vunpack.c.l.b16 %v5565
      %v5726 = vunpack.c.h.b16 %v5565
      %v5727 = vunpack.c.l.b16 %v5566
      %v5728 = vunpack.c.h.b16 %v5566
      %v5729 = vunpack.c.l.b16 %v5567
      %v5730 = vunpack.c.h.b16 %v5567
      %v5731 = vunpack.c.l.b16 %v5568
      %v5732 = vunpack.c.h.b16 %v5568
      %v5733 = vunpack.c.l.b16 %v5569
      %v5734 = vunpack.c.h.b16 %v5569
      %v5735 = vunpack.c.l.b16 %v5570
      %v5736 = vunpack.c.h.b16 %v5570
      %v5737 = vunpack.c.l.b16 %v5571
      %v5738 = vunpack.c.h.b16 %v5571
      %v5739 = vunpack.c.l.b16 %v5572
      %v5740 = vunpack.c.h.b16 %v5572
      %v5741 = vunpack.c.l.b16 %v5573
      %v5742 = vunpack.c.h.b16 %v5573
      %v5743 = vunpack.c.l.b16 %v5574
      %v5744 = vunpack.c.h.b16 %v5574
      %v5745 = vunpack.c.l.b16 %v5575
      %v5746 = vunpack.c.h.b16 %v5575
      %v5747 = vunpack.c.l.b16 %v5576
      %v5748 = vunpack.c.h.b16 %v5576
      %v5749 = vunpack.c.l.b16 %v5577
      %v5750 = vunpack.c.h.b16 %v5577
      %v5751 = vunpack.c.l.b16 %v5578
      %v5752 = vunpack.c.h.b16 %v5578
      %v5753 = vunpack.c.l.b16 %v5579
      %v5754 = vunpack.c.h.b16 %v5579
      %v5755 = vunpack.c.l.b16 %v5580
      %v5756 = vunpack.c.h.b16 %v5580
      %v5757 = vunpack.c.l.b16 %v5581
      %v5758 = vunpack.c.h.b16 %v5581
      %v5759 = vunpack.c.l.b16 %v5582
      %v5760 = vunpack.c.h.b16 %v5582
      %v5761 = vunpack.c.l.b16 %v5583
      %v5762 = vunpack.c.h.b16 %v5583
      %v5763 = vunpack.c.l.b16 %v5584
      %v5764 = vunpack.c.h.b16 %v5584
      %v5765 = vunpack.c.l.b16 %v5585
      %v5766 = vunpack.c.h.b16 %v5585
      %v5767 = vunpack.c.l.b16 %v5586
      %v5768 = vunpack.c.h.b16 %v5586
      %v5769 = vunpack.c.l.b16 %v5587
      %v5770 = vunpack.c.h.b16 %v5587
      %v5771 = vunpack.c.l.b16 %v5588
      %v5772 = vunpack.c.h.b16 %v5588
      %v5773 = vunpack.c.l.b16 %v5589
      %v5774 = vunpack.c.h.b16 %v5589
      %v5775 = vunpack.c.l.b16 %v5590
      %v5776 = vunpack.c.h.b16 %v5590
      %v5777 = vunpack.c.l.b16 %v5591
      %v5778 = vunpack.c.h.b16 %v5591
      %v5779 = vunpack.c.l.b16 %v5592
      %v5780 = vunpack.c.h.b16 %v5592
      %v5781 = vunpack.c.l.b16 %v5593
      %v5782 = vunpack.c.h.b16 %v5593
      %v5783 = vunpack.c.l.b16 %v5594
      %v5784 = vunpack.c.h.b16 %v5594
      %v5785 = vunpack.c.l.b16 %v5595
      %v5786 = vunpack.c.h.b16 %v5595
      %v5787 = vunpack.c.l.b16 %v5596
      %v5788 = vunpack.c.h.b16 %v5596
      %v5789 = vunpack.c.l.b16 %v5597
      %v5790 = vunpack.c.h.b16 %v5597
      %v5791 = vunpack.c.l.b16 %v5598
      %v5792 = vunpack.c.h.b16 %v5598
      %v5793 = vunpack.c.l.b16 %v5599
      %v5794 = vunpack.c.h.b16 %v5599
      %v5795 = vunpack.c.l.b16 %v5600
      %v5796 = vunpack.c.h.b16 %v5600
      %v5797 = vunpack.c.l.b16 %v5601
      %v5798 = vunpack.c.h.b16 %v5601
      %v5799 = vunpack.c.l.b16 %v5602
      %v5800 = vunpack.c.h.b16 %v5602
      %v5801 = vunpack.c.l.b16 %v5603
      %v5802 = vunpack.c.h.b16 %v5603
      %v5803 = vunpack.c.l.b16 %v5604
      %v5804 = vunpack.c.h.b16 %v5604
      %v5805 = vunpack.c.l.b16 %v5605
      %v5806 = vunpack.c.h.b16 %v5605
      %v5807 = vunpack.c.l.b16 %v5606
      %v5808 = vunpack.c.h.b16 %v5606
      %v5809 = vpack.c.b16 %v5685, %v5681
      %v5810 = vpack.c.b16 %v5686, %v5682
      %v5811 = vpack.c.b16 %v5687, %v5683
      %v5812 = vpack.c.b16 %v5688, %v5684
      %v5813 = vpack.c.b16 %v5693, %v5689
      %v5814 = vpack.c.b16 %v5694, %v5690
      %v5815 = vpack.c.b16 %v5695, %v5691
      %v5816 = vpack.c.b16 %v5696, %v5692
      %v5817 = vpack.c.b16 %v5701, %v5697
      %v5818 = vpack.c.b16 %v5702, %v5698
      %v5819 = vpack.c.b16 %v5703, %v5699
      %v5820 = vpack.c.b16 %v5704, %v5700
      %v5821 = vpack.c.b16 %v5709, %v5705
      %v5822 = vpack.c.b16 %v5710, %v5706
      %v5823 = vpack.c.b16 %v5711, %v5707
      %v5824 = vpack.c.b16 %v5712, %v5708
      %v5825 = vpack.c.b16 %v5717, %v5713
      %v5826 = vpack.c.b16 %v5718, %v5714
      %v5827 = vpack.c.b16 %v5719, %v5715
      %v5828 = vpack.c.b16 %v5720, %v5716
      %v5829 = vpack.c.b16 %v5725, %v5721
      %v5830 = vpack.c.b16 %v5726, %v5722
      %v5831 = vpack.c.b16 %v5727, %v5723
      %v5832 = vpack.c.b16 %v5728, %v5724
      %v5833 = vpack.c.b16 %v5733, %v5729
      %v5834 = vpack.c.b16 %v5734, %v5730
      %v5835 = vpack.c.b16 %v5735, %v5731
      %v5836 = vpack.c.b16 %v5736, %v5732
      %v5837 = vpack.c.b16 %v5741, %v5737
      %v5838 = vpack.c.b16 %v5742, %v5738
      %v5839 = vpack.c.b16 %v5743, %v5739
      %v5840 = vpack.c.b16 %v5744, %v5740
      %v5841 = vpack.c.b16 %v5749, %v5745
      %v5842 = vpack.c.b16 %v5750, %v5746
      %v5843 = vpack.c.b16 %v5751, %v5747
      %v5844 = vpack.c.b16 %v5752, %v5748
      %v5845 = vpack.c.b16 %v5757, %v5753
      %v5846 = vpack.c.b16 %v5758, %v5754
      %v5847 = vpack.c.b16 %v5759, %v5755
      %v5848 = vpack.c.b16 %v5760, %v5756
      %v5849 = vpack.c.b16 %v5765, %v5761
      %v5850 = vpack.c.b16 %v5766, %v5762
      %v5851 = vpack.c.b16 %v5767, %v5763
      %v5852 = vpack.c.b16 %v5768, %v5764
      %v5853 = vpack.c.b16 %v5773, %v5769
      %v5854 = vpack.c.b16 %v5774, %v5770
      %v5855 = vpack.c.b16 %v5775, %v5771
      %v5856 = vpack.c.b16 %v5776, %v5772
      %v5857 = vpack.c.b16 %v5781, %v5777
      %v5858 = vpack.c.b16 %v5782, %v5778
      %v5859 = vpack.c.b16 %v5783, %v5779
      %v5860 = vpack.c.b16 %v5784, %v5780
      %v5861 = vpack.c.b16 %v5789, %v5785
      %v5862 = vpack.c.b16 %v5790, %v5786
      %v5863 = vpack.c.b16 %v5791, %v5787
      %v5864 = vpack.c.b16 %v5792, %v5788
      %v5865 = vpack.c.b16 %v5797, %v5793
      %v5866 = vpack.c.b16 %v5798, %v5794
      %v5867 = vpack.c.b16 %v5799, %v5795
      %v5868 = vpack.c.b16 %v5800, %v5796
      %v5869 = vpack.c.b16 %v5805, %v5801
      %v5870 = vpack.c.b16 %v5806, %v5802
      %v5871 = vpack.c.b16 %v5807, %v5803
      %v5872 = vpack.c.b16 %v5808, %v5804
      %5937 = vmatpush.bf16.msra.mxu0 %v5837
      %5938 = vmatpush.bf16.msra.mxu0 %v5833
      %5939 = vmatpush.bf16.msra.mxu0 %v5829
      %5940 = vmatpush.bf16.msra.mxu0 %v5825
      %5941 = vmatpush.bf16.msra.mxu0 %v5821
      %5942 = vmatpush.bf16.msra.mxu0 %v5817
      %5943 = vmatpush.bf16.msra.mxu0 %v5813
      %5944 = vmatpush.bf16.msra.mxu0 %v5809
      %5945 = vmatmul.bf16.gmra.mxu0 %v5541
      %v5946 = vpop.f32.mrf.mxu0
      %v5947 = vadd.f32 %v5609, %v5946
      %v5948 = vpop.f32.mrf.mxu0
      %5949 = vdwg.mxu0
      %5950 = vmatpush.bf16.msra.mxu0 %v5869
      %5951 = vmatpush.bf16.msra.mxu0 %v5865
      %5952 = vmatpush.bf16.msra.mxu0 %v5861
      %5953 = vmatpush.bf16.msra.mxu0 %v5857
      %5954 = vmatpush.bf16.msra.mxu0 %v5853
      %5955 = vmatpush.bf16.msra.mxu0 %v5849
      %5956 = vmatpush.bf16.msra.mxu0 %v5845
      %5957 = vmatpush.bf16.msra.mxu0 %v5841
      %5958 = vmatmul.bf16.gmra.mxu0 %v5542
      %v5959 = vpop.f32.mrf.mxu0
      %v5960 = vadd.f32 %v5947, %v5959
      %v5961 = vpop.f32.mrf.mxu0
      %5962 = vdwg.mxu0
      %5963 = vmatpush.bf16.msra.mxu0 %v5838
      %5964 = vmatpush.bf16.msra.mxu0 %v5834
      %5965 = vmatpush.bf16.msra.mxu0 %v5830
      %5966 = vmatpush.bf16.msra.mxu0 %v5826
      %5967 = vmatpush.bf16.msra.mxu0 %v5822
      %5968 = vmatpush.bf16.msra.mxu0 %v5818
      %5969 = vmatpush.bf16.msra.mxu0 %v5814
      %5970 = vmatpush.bf16.msra.mxu0 %v5810
      %5971 = vmatmul.bf16.gmra.mxu0 %v5541
      %v5972 = vpop.f32.mrf.mxu0
      %v5973 = vadd.f32 %v5610, %v5972
      %v5974 = vpop.f32.mrf.mxu0
      %5975 = vdwg.mxu0
      %5976 = vmatpush.bf16.msra.mxu0 %v5870
      %5977 = vmatpush.bf16.msra.mxu0 %v5866
      %5978 = vmatpush.bf16.msra.mxu0 %v5862
      %5979 = vmatpush.bf16.msra.mxu0 %v5858
      %5980 = vmatpush.bf16.msra.mxu0 %v5854
      %5981 = vmatpush.bf16.msra.mxu0 %v5850
      %5982 = vmatpush.bf16.msra.mxu0 %v5846
      %5983 = vmatpush.bf16.msra.mxu0 %v5842
      %5984 = vmatmul.bf16.gmra.mxu0 %v5542
      %v5985 = vpop.f32.mrf.mxu0
      %v5986 = vadd.f32 %v5973, %v5985
      %v5987 = vpop.f32.mrf.mxu0
      %5988 = vdwg.mxu0
      %5989 = vmatpush.bf16.msra.mxu0 %v5839
      %5990 = vmatpush.bf16.msra.mxu0 %v5835
      %5991 = vmatpush.bf16.msra.mxu0 %v5831
      %5992 = vmatpush.bf16.msra.mxu0 %v5827
      %5993 = vmatpush.bf16.msra.mxu0 %v5823
      %5994 = vmatpush.bf16.msra.mxu0 %v5819
      %5995 = vmatpush.bf16.msra.mxu0 %v5815
      %5996 = vmatpush.bf16.msra.mxu0 %v5811
      %5997 = vmatmul.bf16.gmra.mxu0 %v5541
      %v5998 = vpop.f32.mrf.mxu0
      %v5999 = vadd.f32 %v5611, %v5998
      %v6000 = vpop.f32.mrf.mxu0
      %6001 = vdwg.mxu0
      %6002 = vmatpush.bf16.msra.mxu0 %v5871
      %6003 = vmatpush.bf16.msra.mxu0 %v5867
      %6004 = vmatpush.bf16.msra.mxu0 %v5863
      %6005 = vmatpush.bf16.msra.mxu0 %v5859
      %6006 = vmatpush.bf16.msra.mxu0 %v5855
      %6007 = vmatpush.bf16.msra.mxu0 %v5851
      %6008 = vmatpush.bf16.msra.mxu0 %v5847
      %6009 = vmatpush.bf16.msra.mxu0 %v5843
      %6010 = vmatmul.bf16.gmra.mxu0 %v5542
      %v6011 = vpop.f32.mrf.mxu0
      %v6012 = vadd.f32 %v5999, %v6011
      %v6013 = vpop.f32.mrf.mxu0
      %6014 = vdwg.mxu0
      %6015 = vmatpush.bf16.msra.mxu0 %v5840
      %6016 = vmatpush.bf16.msra.mxu0 %v5836
      %6017 = vmatpush.bf16.msra.mxu0 %v5832
      %6018 = vmatpush.bf16.msra.mxu0 %v5828
      %6019 = vmatpush.bf16.msra.mxu0 %v5824
      %6020 = vmatpush.bf16.msra.mxu0 %v5820
      %6021 = vmatpush.bf16.msra.mxu0 %v5816
      %6022 = vmatpush.bf16.msra.mxu0 %v5812
      %6023 = vmatmul.bf16.gmra.mxu0 %v5541
      %v6024 = vpop.f32.mrf.mxu0
      %v6025 = vadd.f32 %v5612, %v6024
      %v6026 = vpop.f32.mrf.mxu0
      %6027 = vdwg.mxu0
      %6028 = vmatpush.bf16.msra.mxu0 %v5872
      %6029 = vmatpush.bf16.msra.mxu0 %v5868
      %6030 = vmatpush.bf16.msra.mxu0 %v5864
      %6031 = vmatpush.bf16.msra.mxu0 %v5860
      %6032 = vmatpush.bf16.msra.mxu0 %v5856
      %6033 = vmatpush.bf16.msra.mxu0 %v5852
      %6034 = vmatpush.bf16.msra.mxu0 %v5848
      %6035 = vmatpush.bf16.msra.mxu0 %v5844
      %6036 = vmatmul.bf16.gmra.mxu0 %v5542
      %v6037 = vpop.f32.mrf.mxu0
      %v6038 = vadd.f32 %v6025, %v6037
      %v6039 = vpop.f32.mrf.mxu0
      %6040 = vdwg.mxu0
      %v6041 = vxor.u32 %v5960, 2147483648
      %v6042 = vmul.f32 %v6041, 1.442695
      %v6043 = vpow.pop %v6042
      %v6044 = vadd.f32 %v6043, 1.0
      %v6045 = vrcp.pop %v6044
      %v6046 = vmul.f32 %v6044, %v6045
      %v6047 = vsub.f32 1.0, %v6046
      %v6048 = vmul.f32 %v6045, %v6047
      %v6049 = vadd.f32 %v6045, %v6048
      %vm6050 = vweird.f32 %v6044
      %vm6051 = vweird.f32 %v6045
      %vm6052 = vmor %vm6050, %vm6051
      %v6053 = vsel %vm6052, %v6045, %v6049
      %v6054 = vand.u32 2147483647, %v6044
      %vm6055 = vcmp.eq.f32.partialorder %v6054, 8.507059e+37
      %v6056 = vand.u32 %v6044, 2147483648
      %v6057 = vor.u32 1.1754944e-38, %v6056
      %v6058 = vsel %vm6055, %v6057, %v6053
      %v6059 = vmul.f32 1.0, %v6058
      %v6060 = vxor.u32 %v5986, 2147483648
      %v6061 = vmul.f32 %v6060, 1.442695
      %v6062 = vpow.pop %v6061
      %v6063 = vadd.f32 %v6062, 1.0
      %v6064 = vrcp.pop %v6063
      %v6065 = vmul.f32 %v6063, %v6064
      %v6066 = vsub.f32 1.0, %v6065
      %v6067 = vmul.f32 %v6064, %v6066
      %v6068 = vadd.f32 %v6064, %v6067
      %vm6069 = vweird.f32 %v6063
      %vm6070 = vweird.f32 %v6064
      %vm6071 = vmor %vm6069, %vm6070
      %v6072 = vsel %vm6071, %v6064, %v6068
      %v6073 = vand.u32 2147483647, %v6063
      %vm6074 = vcmp.eq.f32.partialorder %v6073, 8.507059e+37
      %v6075 = vand.u32 %v6063, 2147483648
      %v6076 = vor.u32 1.1754944e-38, %v6075
      %v6077 = vsel %vm6074, %v6076, %v6072
      %v6078 = vmul.f32 1.0, %v6077
      %v6079 = vmul.f32 %v6059, %v6038
      %v6080 = vadd.f32 %v6012, %v6079
      %v6081 = vtanh.pop %v6080
      %v6082 = vsub.f32 1.0, %v6078
      %v6083 = vmul.f32 %v6082, %v6081
      %v6084 = vmul.f32 %v6078, %v5540
      %v6085 = vadd.f32 %v6083, %v6084
      %6086 = vst [vmem:[#allocation2] sm:$0xff] %v6085
      %v6087 = vpack.c.bf16 %v6085, %v6085
      %v6088 = vld [vmem:[%s7] sm:$0xf]
      %v6089 = vld [vmem:[%s7 + $0x4] sm:$0xf]
      %v6090 = vld [vmem:[%s7 + $0x8] sm:$0xf]
      %v6091 = vld [vmem:[%s7 + $0xc] sm:$0xf]
      %v6092 = vld [vmem:[%s7 + $0x10] sm:$0xf]
      %v6093 = vld [vmem:[%s7 + $0x14] sm:$0xf]
      %v6094 = vld [vmem:[%s7 + $0x18] sm:$0xf]
      %v6095 = vld [vmem:[%s7 + $0x1c] sm:$0xf]
      %v6096 = vld [vmem:[%s7 + $0x20] sm:$0xf]
      %v6097 = vld [vmem:[%s7 + $0x24] sm:$0xf]
      %v6098 = vld [vmem:[%s7 + $0x28] sm:$0xf]
      %v6099 = vld [vmem:[%s7 + $0x2c] sm:$0xf]
      %v6100 = vld [vmem:[%s7 + $0x30] sm:$0xf]
      %v6101 = vld [vmem:[%s7 + $0x34] sm:$0xf]
      %v6102 = vld [vmem:[%s7 + $0x38] sm:$0xf]
      %v6103 = vld [vmem:[%s7 + $0x3c] sm:$0xf]
      %v6104 = vld [vmem:[%s8] sm:$0x1]
      %v6106 = vperm.slane %v6104, 0
      %v6124 = vunpack.c.l.b16 %v6088
      %v6125 = vunpack.c.l.b16 %v6089
      %v6126 = vunpack.c.l.b16 %v6090
      %v6127 = vunpack.c.l.b16 %v6091
      %v6128 = vunpack.c.l.b16 %v6092
      %v6129 = vunpack.c.l.b16 %v6093
      %v6130 = vunpack.c.l.b16 %v6094
      %v6131 = vunpack.c.l.b16 %v6095
      %v6132 = vunpack.c.l.b16 %v6096
      %v6133 = vunpack.c.l.b16 %v6097
      %v6134 = vunpack.c.l.b16 %v6098
      %v6135 = vunpack.c.l.b16 %v6099
      %v6136 = vunpack.c.l.b16 %v6100
      %v6137 = vunpack.c.l.b16 %v6101
      %v6138 = vunpack.c.l.b16 %v6102
      %v6139 = vunpack.c.l.b16 %v6103
      %v6140 = vpack.c.b16 %v6125, %v6124
      %v6141 = vpack.c.b16 %v6127, %v6126
      %v6142 = vpack.c.b16 %v6129, %v6128
      %v6143 = vpack.c.b16 %v6131, %v6130
      %v6144 = vpack.c.b16 %v6133, %v6132
      %v6145 = vpack.c.b16 %v6135, %v6134
      %v6146 = vpack.c.b16 %v6137, %v6136
      %v6147 = vpack.c.b16 %v6139, %v6138
      %6156 = vmatpush.bf16.msra.mxu0 %v6147
      %6157 = vmatpush.bf16.msra.mxu0 %v6146
      %6158 = vmatpush.bf16.msra.mxu0 %v6145
      %6159 = vmatpush.bf16.msra.mxu0 %v6144
      %6160 = vmatpush.bf16.msra.mxu0 %v6143
      %6161 = vmatpush.bf16.msra.mxu0 %v6142
      %6162 = vmatpush.bf16.msra.mxu0 %v6141
      %6163 = vmatpush.bf16.msra.mxu0 %v6140
      %6164 = vmatmul.bf16.gmra.mxu0 %v6087
      %v6165 = vpop.f32.mrf.mxu0
      %v6166 = vadd.f32 %v6106, %v6165
      %v6167 = vpop.f32.mrf.mxu0
      %6168 = vdwg.mxu0
      %6169 = vmax.xlane.f32.xlu0 %v6166
      %v6170 = vpop.xlane.xlu0 %6169
      %v6171 = vsub.f32 %v6166, %v6170
      %v6172 = vmul.f32 %v6171, 1.442695
      %v6173 = vpow.pop %v6172
      %6174 = vadd.xlane.f32.xlu0 %v6173
      %v6175 = vpop.xlane.xlu0 %6174
      %v6176 = vlog2.pop %v6175
      %v6177 = vmul.f32 %v6176, 0.6931472
      %v6178 = vadd.f32 %v6177, %v6170
      %v6179 = vsub.f32 %v6166, %v6178
      %6180 = vst [vmem:[%s381] sm:$0xff] %v6179
      %p6181 = scmp.eq.s32.totalorder %s27, 127
      // Predicated region
      $region61: #{seq2seq_forward.1} parent=55 // pred_check
        %p6182 = pneg %p6181
      $region62: #{seq2seq_forward.1} parent=55 // pred_check_branch
        %6184 = sbr.rel (%p6182) target = $region64
      $region63: #{seq2seq_forward.1} parent=55 // pred_region
        %6185 = vst [vmem:[%s385] sm:$0xff] %v6085
      $region64: #{seq2seq_forward.1} parent=55 // pred_fallthru
        _
      %v6186 = vlaneseq
      %v6187 = vand.u32 %v6186, 127
      %vm6188 = vcmp.ge.f32.partialorder %v6166, %v6170
      %v6189 = vsel %vm6188, %v6187, 128
      %v6190 = vand.u32 %v6189, 65535
      %v6191 = vshra.s32 %v6189, 16
      %v6192 = vcvt.s32.f32 %v6190
      %v6193 = vcvt.s32.f32 %v6191
      %6194 = vmin.xlane.f32.xlu0 %v6193
      %v6195 = vpop.xlane.xlu0 %6194
      %vm6196 = vcmp.eq.f32.partialorder %v6193, %v6195
      %v6197 = vsel %vm6196, %v6192, inf
      %6198 = vmin.xlane.f32.xlu0 %v6197
      %v6199 = vpop.xlane.xlu0 %6198
      %v6200 = vcvt.f32.s32 %v6199
      %v6201 = vcvt.f32.s32 %v6195
      %v6202 = vshll.u32 %v6201, 16
      %v6203 = vadd.s32 %v6202, %v6200
      %vm6204 = vcmp.eq.s32.totalorder %v6187, %v6203
      %v6205 = vsel %vm6204, 1, 0
      %v6206 = vcvt.s32.f32 %v6205
      %v6207 = vpack.c.bf16 %v6206, %v6206
      %6208 = vst [vmem:[#allocation3] sm:$0xf] %v6207
      %p6209 = scmp.lt.s32.totalorder %s27, 127
      %s6210 = scalar_select %p6209, %s27, 127
      %p6211 = scmp.lt.s32.totalorder %s26, 0
      %s6212 = scalar_select %p6211, %s26, 0
      %s6213 = sadd.s32 %s6212, %s6210
      %s6214 = smul.addr %s6213, 8
      %s6215 = scalar_lea.vmem %s9, %s6214
      %p6216 = scmp.lt.s32.totalorder %s26, 0
      %s6217 = scalar_select %p6216, %s26, 0
      %s6218 = smul.addr %s6217, 8
      %s6219 = scalar_lea.vmem %s10, %s6218
      // Predicated region
      $region65: #{seq2seq_forward.1} parent=55 // pred_check
        %p6220 = pneg %p248
      $region66: #{seq2seq_forward.1} parent=55 // pred_check_branch
        %6222 = sbr.rel (%p6220) target = $region68
      $region67: #{seq2seq_forward.1} parent=55 // pred_region
        _
      $region68: #{seq2seq_forward.1} parent=55 // pred_fallthru
        _
      // Predicated region
      $region69: #{seq2seq_forward.1} parent=55 // pred_check
        %p6223 = pneg %p274
      $region70: #{seq2seq_forward.1} parent=55 // pred_check_branch
        %6225 = sbr.rel (%p6223) target = $region72
      $region71: #{seq2seq_forward.1} parent=55 // pred_region
        _
      $region72: #{seq2seq_forward.1} parent=55 // pred_fallthru
        _
      // Predicated region
      $region73: #{seq2seq_forward.1} parent=55 // pred_check
        %p6226 = pneg %p274
      $region74: #{seq2seq_forward.1} parent=55 // pred_check_branch
        %6228 = sbr.rel (%p6226) target = $region76
      $region75: #{seq2seq_forward.1} parent=55 // pred_region
        %p6229 = scmp.lt.s32.totalorder %s26, 0
        %s6230 = scalar_select %p6229, %s26, 0
        %s6231 = smul.addr %s6230, 8
        %s6232 = scalar_lea.vmem %s10, %s6231
      $region76: #{seq2seq_forward.1} parent=55 // pred_fallthru
        _
    $region56: #{seq2seq_forward.1} parent=5 // pred_fallthru
      _
    %p6233 = scmp.le.s32.totalorder 2, %s17
    // Predicated region
    $region77: #{seq2seq_forward.1} parent=5 // pred_check
      %p6234 = pneg %p6233
    $region78: #{seq2seq_forward.1} parent=5 // pred_check_branch
      %6236 = sbr.rel (%p6234) target = $region80
    $region79: #{seq2seq_forward.1} parent=5 // pred_region
      %s6237 = ssub.s32 %s17, 2
      // Predicated region
      $region81: #{seq2seq_forward.1} parent=79 // pred_check
        %p6238 = pneg %p254
      $region82: #{seq2seq_forward.1} parent=79 // pred_check_branch
        %6240 = sbr.rel (%p6238) target = $region84
      $region83: #{seq2seq_forward.1} parent=79 // pred_region
        %p6241 = scmp.lt.s32.totalorder %s29, 127
        %s6242 = scalar_select %p6241, %s29, 127
        %p6243 = scmp.lt.s32.totalorder %s28, 0
        %s6244 = scalar_select %p6243, %s28, 0
        %s6245 = sadd.s32 %s6244, %s6242
        %s6246 = smul.addr %s6245, 8
        %s6247 = scalar_lea.vmem %s9, %s6246
      $region84: #{seq2seq_forward.1} parent=79 // pred_fallthru
        _
    $region80: #{seq2seq_forward.1} parent=5 // pred_fallthru
      _
  $region6: #{seq2seq_forward.1} parent=0 // loop_footer
    %s21 = sadd.s32 1, %s17
  $region7: #{seq2seq_forward.1} parent=0 // loop_footer_branch
    %16 = sbr.rel target = $region3
  $region8: #{seq2seq_forward.1} parent=0 // loop_exit
    _

</llo_original>
